<compile_context>
chip_gen: v7x
topology: tpu7x:2x2x1
jax: 0.10.0
libtpu: 0.0.40
codegen_flags: <defaults>
</compile_context>

<pallas_src>
import numpy as np
import jax
import jax.numpy as jnp
from jax.experimental import pallas as pl
from jax.experimental.pallas import tpu as pltpu


def _loglik_kernel(x_ref, emit_ref, d_ref, e_ref, a_ref, b_ref, c_ref,
                   params_ref, out_ref):
    """One row-tile of the AR(1)-HMM log-likelihood.

    x_ref     : (TN, P)   hidden-state row tile (lanes >= p padded with -100)
    emit_ref  : (1, P)    1.0 where y == 1 else 0.0 (0 on padded lanes)
    d_ref     : (1, P)    1.0 at lane 0 else 0.0        (init one-hot)
    e_ref     : (1, P)    mu  at lane 0 else 0.0
    a_ref     : (1, P-1)  1/sqrt(1-rho^2) on valid transition lanes, else 0
    b_ref     : (1, P-1)  -rho/sqrt(1-rho^2) on valid transition lanes, else 0
    c_ref     : (1, P-1)  mu on valid transition lanes, else 0
    params_ref: SMEM (2,) = [1/(2*sigma^2), p*(-log(sigma) - 0.5*log(2*pi))]
    out_ref   : (1, TN)   lane-dense per-row log-likelihood
    """
    x = x_ref[...]                               # (TN, P)
    inv_two_var = params_ref[0]                  # 1 / (2*sigma^2)
    row_const = params_ref[1]                    # p * (-log(sigma) - 0.5*log(2*pi))

    # Bernoulli emission:  y*x - softplus(x)  (stable; padded lanes contribute exactly 0
    # because x == -100 there -> softplus == 0 and emit == 0).
    softplus = jnp.maximum(x, 0.0) + jnp.log(1.0 + jnp.exp(-jnp.abs(x)))

    # Init-state quadratic folded into the same full-width pass: (d*x - e) == (x0 - mu)
    # at lane 0 and 0 elsewhere.
    r0 = d_ref[...] * x - e_ref[...]

    contrib = emit_ref[...] * x - softplus - inv_two_var * (r0 * r0)   # (TN, P)

    # AR(1) transition residuals: a*x_{j+1} + b*x_j - c == (x_{j+1}-rho_j x_j)/conj_j - mu
    # on valid lanes; a = b = c = 0 on padded lanes so they contribute exactly 0.
    u = a_ref[...] * x[:, 1:] + b_ref[...] * x[:, :-1] - c_ref[...]    # (TN, P-1)

    row_ll = (jnp.sum(contrib, axis=1)
              - inv_two_var * jnp.sum(u * u, axis=1)
              + row_const)                                             # (TN,)

    out_ref[0, :] = row_ll                                             # lane-dense store


def _round_up(a, b):
    return (a + b - 1) // b * b


def _choose_row_tiling(n, P, buf_budget_bytes=5 << 20):
    """Pick (tn, n_pad, grid): double-buffered X tile stays inside the VMEM budget,
    per-tile DMAs are reasonably large, and there are >= 2 tiles when n allows so both
    v7x TensorCores get work."""
    n8 = _round_up(max(n, 1), 8)
    if n8 <= 256 and n8 * P * 4 <= buf_budget_bytes:
        return n8, n8, 1                                   # single full-row tile
    n128 = _round_up(n, 128)
    tn_cap = max(128, min(4096, (buf_budget_bytes // (P * 4)) // 128 * 128))
    min_grid = 4 if n128 >= 512 else 2
    grid = max(min_grid, pl.cdiv(n128, tn_cap))
    tn = _round_up(pl.cdiv(n128, grid), 128)               # multiple of 128 (lane-dense out)
    grid = pl.cdiv(n128, tn)
    return tn, grid * tn, grid


def log_likelihood(X, y, transition_types, mu, sigma, rho_logit):
    """JAX/Pallas equivalent of TorchLogLikelihood.forward(X)."""
    X = jnp.asarray(X, jnp.float32)
    n, p = X.shape
    f32 = jnp.float32

    mu = jnp.asarray(mu, f32)
    sigma = jnp.asarray(sigma, f32)

    # ---- lane padding: p -> P (multiple of 128) ----
    P = max(128, _round_up(p, 128))

    emit_row = jnp.zeros((P,), f32).at[:p].set((jnp.asarray(y) == 1).astype(f32))
    d_row = jnp.zeros((P,), f32).at[0].set(1.0)            # init one-hot
    e_row = jnp.zeros((P,), f32).at[0].set(mu)

    rhos = jax.nn.sigmoid(jnp.asarray(rho_logit, f32))
    ordered = rhos[jnp.asarray(transition_types, jnp.int32)]          # (p-1,)
    inv_conj = 1.0 / jnp.sqrt(1.0 - ordered * ordered)
    a_row = jnp.zeros((P - 1,), f32).at[: p - 1].set(inv_conj)
    b_row = jnp.zeros((P - 1,), f32).at[: p - 1].set(-ordered * inv_conj)
    c_row = jnp.zeros((P - 1,), f32).at[: p - 1].set(mu)

    inv_two_var = 0.5 / (sigma * sigma)
    row_const = jnp.float32(p) * (-jnp.log(sigma) - jnp.float32(0.5 * np.log(2.0 * np.pi)))
    params = jnp.stack([inv_two_var, row_const]).astype(f32)

    # ---- row tiling from a VMEM byte budget ----
    tn, n_pad, grid = _choose_row_tiling(n, P)
    if n_pad != n or P != p:
        # Pad value -100: softplus == 0 exactly, all padded contributions finite/zeroed.
        X = jnp.pad(X, ((0, n_pad - n), (0, P - p)), constant_values=-100.0)

    # VMEM estimate: 2x X tile (double buffer) + sublane-padded coefficient rows + out.
    est = 2 * tn * P * 4 + 2 * 8 * (3 * P + 3 * (P - 1)) * 4 + 2 * tn * 4 + (1 << 20)
    cp_kwargs = dict(dimension_semantics=("parallel",))
    if est > 12 * (1 << 20):
        cp_kwargs["vmem_limit_bytes"] = int(min(est + (8 << 20), 56 << 20))

    out = pl.pallas_call(
        _loglik_kernel,
        out_shape=jax.ShapeDtypeStruct((1, n_pad), jnp.float32),
        grid=(grid,),
        in_specs=[
            pl.BlockSpec((tn, P), lambda i: (i, 0)),            # X row tile (pipelined)
            pl.BlockSpec((1, P), lambda i: (0, 0)),             # emission mask row
            pl.BlockSpec((1, P), lambda i: (0, 0)),             # init one-hot row
            pl.BlockSpec((1, P), lambda i: (0, 0)),             # init mu row
            pl.BlockSpec((1, P - 1), lambda i: (0, 0)),         # a = 1/sqrt(1-rho^2)
            pl.BlockSpec((1, P - 1), lambda i: (0, 0)),         # b = -rho/sqrt(1-rho^2)
            pl.BlockSpec((1, P - 1), lambda i: (0, 0)),         # c = mu on valid lanes
            pl.BlockSpec(memory_space=pltpu.MemorySpace.SMEM),  # scalar params
        ],
        out_specs=pl.BlockSpec((1, tn), lambda i: (0, i)),      # lane-dense output
        compiler_params=pltpu.CompilerParams(**cp_kwargs),
    )(X, emit_row.reshape(1, P), d_row.reshape(1, P), e_row.reshape(1, P),
      a_row.reshape(1, P - 1), b_row.reshape(1, P - 1), c_row.reshape(1, P - 1),
      params)

    return out[0, :n]


def _reference(X, y, tt, mu, sigma, rho_logit):
    """Pure-numpy (float64) replica of the torch forward for verification."""
    X = np.asarray(X, np.float64)
    sig = 1.0 / (1.0 + np.exp(-X))
    m = np.asarray(y) == 1
    l_em = np.log(sig[:, m]).sum(1) + np.log(1.0 - sig[:, ~m]).sum(1)

    def logprob(v):
        return -((v - mu) ** 2) / (2.0 * sigma ** 2) - np.log(sigma) - 0.5 * np.log(2.0 * np.pi)

    l_init = logprob(X[:, 0])
    rhos = 1.0 / (1.0 + np.exp(-np.asarray(rho_logit, np.float64)))
    orho = rhos[np.asarray(tt)]
    conj = np.sqrt(1.0 - orho ** 2)
    diffs = X[:, 1:] - orho * X[:, :-1]
    l_tr = logprob(diffs / conj).sum(1)
    return l_em + l_init + l_tr


if __name__ == "__main__":
    # Case 1: multi-tile path with row and lane padding (n=300 rows, chain length p=19).
    # Case 2: tiny single-tile path with the module's default parameter init.
    cases = [
        # (n, p, k, mu, sigma)
        (300, 19, 3, 0.0, 0.2),
        (8, 16, 2, 0.3, 0.5),
    ]
    key = jax.random.PRNGKey(0)
    for n, p, k, mu, sigma in cases:
        key, sub = jax.random.split(key)
        X = jax.random.normal(sub, (n, p), dtype=jnp.float32)
        y = (np.arange(p) % 2).astype(np.int32)                    # binary emissions
        transition_types = (np.arange(p - 1) % k).astype(np.int32)
        rho_logit = np.zeros(k, np.float32) - 1.0                  # torch init: zeros - 1

        out = log_likelihood(X, y, transition_types, mu, sigma, rho_logit)
        out = jax.block_until_ready(out)

        ref = _reference(np.asarray(X), y, transition_types, mu, sigma, rho_logit)
        np.testing.assert_allclose(np.asarray(out), ref, rtol=2e-4, atol=1e-3)

    print("KERNEL_OK")
</pallas_src>

<mosaic_0001>
module attributes {stable_mosaic.version = 11 : i64} {
  func.func @_loglik_kernel(%arg0: i32, %arg1: memref<256x128xf32, #tpu.memory_space<vmem>>, %arg2: memref<1x128xf32, #tpu.memory_space<vmem>>, %arg3: memref<1x128xf32, #tpu.memory_space<vmem>>, %arg4: memref<1x128xf32, #tpu.memory_space<vmem>>, %arg5: memref<1x127xf32, #tpu.memory_space<vmem>>, %arg6: memref<1x127xf32, #tpu.memory_space<vmem>>, %arg7: memref<1x127xf32, #tpu.memory_space<vmem>>, %arg8: memref<2xf32, #tpu.memory_space<smem>>, %arg9: memref<1x256xf32, #tpu.memory_space<vmem>>) attributes {dimension_semantics = [#tpu.dimension_semantics<parallel>], iteration_bounds = array<i64: 2>, scalar_prefetch = 0 : i64, scratch_operands = 0 : i64, tpu.core_type = #tpu.core_type<tc>, window_params = [{transform_indices = @transform_0, window_bounds = array<i64: 256, 128>}, {pipeline_mode = #tpu.pipeline_mode<synchronous>, transform_indices = @transform_1, window_bounds = array<i64: 1, 128>}, {pipeline_mode = #tpu.pipeline_mode<synchronous>, transform_indices = @transform_2, window_bounds = array<i64: 1, 128>}, {pipeline_mode = #tpu.pipeline_mode<synchronous>, transform_indices = @transform_3, window_bounds = array<i64: 1, 128>}, {pipeline_mode = #tpu.pipeline_mode<synchronous>, transform_indices = @transform_4, window_bounds = array<i64: 1, 127>}, {pipeline_mode = #tpu.pipeline_mode<synchronous>, transform_indices = @transform_5, window_bounds = array<i64: 1, 127>}, {pipeline_mode = #tpu.pipeline_mode<synchronous>, transform_indices = @transform_6, window_bounds = array<i64: 1, 127>}, {transform_indices = @transform_7, window_bounds = array<i64: 2>}, {transform_indices = @transform_8, window_bounds = array<i64: 1, 256>}]} {
    %c0 = arith.constant 0 : index
    %c0_0 = arith.constant 0 : index
    %0 = vector.load %arg1[%c0, %c0_0] : memref<256x128xf32, #tpu.memory_space<vmem>>, vector<256x128xf32>
    %c0_1 = arith.constant 0 : index
    %1 = memref.load %arg8[%c0_1] : memref<2xf32, #tpu.memory_space<smem>>
    %c1 = arith.constant 1 : index
    %2 = memref.load %arg8[%c1] : memref<2xf32, #tpu.memory_space<smem>>
    %cst = arith.constant 0.000000e+00 : f32
    %3 = vector.broadcast %cst : f32 to vector<256x128xf32>
    %4 = arith.maximumf %0, %3 : vector<256x128xf32>
    %5 = math.absf %0 : vector<256x128xf32>
    %cst_2 = arith.constant 0.000000e+00 : f32
    %6 = vector.broadcast %cst_2 : f32 to vector<256x128xf32>
    %7 = arith.subf %6, %5 : vector<256x128xf32>
    %8 = math.exp %7 : vector<256x128xf32>
    %cst_3 = arith.constant 1.000000e+00 : f32
    %9 = vector.broadcast %cst_3 : f32 to vector<256x128xf32>
    %10 = arith.addf %9, %8 : vector<256x128xf32>
    %11 = math.log %10 : vector<256x128xf32>
    %12 = arith.addf %4, %11 : vector<256x128xf32>
    %c0_4 = arith.constant 0 : index
    %c0_5 = arith.constant 0 : index
    %13 = vector.load %arg3[%c0_4, %c0_5] : memref<1x128xf32, #tpu.memory_space<vmem>>, vector<1x128xf32>
    %14 = vector.broadcast %13 : vector<1x128xf32> to vector<256x128xf32>
    %15 = arith.mulf %14, %0 : vector<256x128xf32>
    %c0_6 = arith.constant 0 : index
    %c0_7 = arith.constant 0 : index
    %16 = vector.load %arg4[%c0_6, %c0_7] : memref<1x128xf32, #tpu.memory_space<vmem>>, vector<1x128xf32>
    %17 = vector.broadcast %16 : vector<1x128xf32> to vector<256x128xf32>
    %18 = arith.subf %15, %17 : vector<256x128xf32>
    %c0_8 = arith.constant 0 : index
    %c0_9 = arith.constant 0 : index
    %19 = vector.load %arg2[%c0_8, %c0_9] : memref<1x128xf32, #tpu.memory_space<vmem>>, vector<1x128xf32>
    %20 = vector.broadcast %19 : vector<1x128xf32> to vector<256x128xf32>
    %21 = arith.mulf %20, %0 : vector<256x128xf32>
    %22 = arith.subf %21, %12 : vector<256x128xf32>
    %23 = arith.mulf %18, %18 : vector<256x128xf32>
    %24 = vector.broadcast %1 : f32 to vector<256x128xf32>
    %25 = arith.mulf %24, %23 : vector<256x128xf32>
    %26 = arith.subf %22, %25 : vector<256x128xf32>
    %c0_10 = arith.constant 0 : index
    %c0_11 = arith.constant 0 : index
    %27 = vector.load %arg5[%c0_10, %c0_11] : memref<1x127xf32, #tpu.memory_space<vmem>>, vector<1x127xf32>
    %28 = vector.extract_strided_slice %0 {offsets = [0, 1], sizes = [256, 127], strides = [1, 1]} : vector<256x128xf32> to vector<256x127xf32>
    %29 = vector.broadcast %27 : vector<1x127xf32> to vector<256x127xf32>
    %30 = arith.mulf %29, %28 : vector<256x127xf32>
    %c0_12 = arith.constant 0 : index
    %c0_13 = arith.constant 0 : index
    %31 = vector.load %arg6[%c0_12, %c0_13] : memref<1x127xf32, #tpu.memory_space<vmem>>, vector<1x127xf32>
    %32 = vector.extract_strided_slice %0 {offsets = [0, 0], sizes = [256, 127], strides = [1, 1]} : vector<256x128xf32> to vector<256x127xf32>
    %33 = vector.broadcast %31 : vector<1x127xf32> to vector<256x127xf32>
    %34 = arith.mulf %33, %32 : vector<256x127xf32>
    %35 = arith.addf %30, %34 : vector<256x127xf32>
    %c0_14 = arith.constant 0 : index
    %c0_15 = arith.constant 0 : index
    %36 = vector.load %arg7[%c0_14, %c0_15] : memref<1x127xf32, #tpu.memory_space<vmem>>, vector<1x127xf32>
    %37 = vector.broadcast %36 : vector<1x127xf32> to vector<256x127xf32>
    %38 = arith.subf %35, %37 : vector<256x127xf32>
    %cst_16 = arith.constant dense<0.000000e+00> : vector<256xf32>
    %39 = vector.multi_reduction <add>, %26, %cst_16 [1] : vector<256x128xf32> to vector<256xf32>
    %40 = arith.mulf %38, %38 : vector<256x127xf32>
    %cst_17 = arith.constant dense<0.000000e+00> : vector<256xf32>
    %41 = vector.multi_reduction <add>, %40, %cst_17 [1] : vector<256x127xf32> to vector<256xf32>
    %42 = vector.broadcast %1 : f32 to vector<256xf32>
    %43 = arith.mulf %42, %41 : vector<256xf32>
    %44 = arith.subf %39, %43 : vector<256xf32>
    %45 = vector.broadcast %2 : f32 to vector<256xf32>
    %46 = arith.addf %44, %45 : vector<256xf32>
    %c0_18 = arith.constant 0 : index
    %c0_19 = arith.constant 0 : index
    %47 = vector.load %arg9[%c0_18, %c0_19] : memref<1x256xf32, #tpu.memory_space<vmem>>, vector<1x256xf32>
    %48 = vector.shape_cast %47 : vector<1x256xf32> to vector<256xf32>
    %49 = vector.shape_cast %46 : vector<256xf32> to vector<1x256xf32>
    tpu.vector_store %arg9[%c0_18, %c0_19], %49 {strides = array<i32>} : memref<1x256xf32, #tpu.memory_space<vmem>>, vector<1x256xf32>,
    return
  }
  func.func @transform_0(%arg0: i32) -> (i32, i32) {
    %c0_i32 = arith.constant 0 : i32
    %c0_i32_0 = arith.constant 0 : i32
    return %arg0, %c0_i32 : i32, i32
  }
  func.func @transform_1(%arg0: i32) -> (i32, i32) {
    %c0_i32 = arith.constant 0 : i32
    %c0_i32_0 = arith.constant 0 : i32
    %c0_i32_1 = arith.constant 0 : i32
    return %c0_i32, %c0_i32_0 : i32, i32
  }
  func.func @transform_2(%arg0: i32) -> (i32, i32) {
    %c0_i32 = arith.constant 0 : i32
    %c0_i32_0 = arith.constant 0 : i32
    %c0_i32_1 = arith.constant 0 : i32
    return %c0_i32, %c0_i32_0 : i32, i32
  }
  func.func @transform_3(%arg0: i32) -> (i32, i32) {
    %c0_i32 = arith.constant 0 : i32
    %c0_i32_0 = arith.constant 0 : i32
    %c0_i32_1 = arith.constant 0 : i32
    return %c0_i32, %c0_i32_0 : i32, i32
  }
  func.func @transform_4(%arg0: i32) -> (i32, i32) {
    %c0_i32 = arith.constant 0 : i32
    %c0_i32_0 = arith.constant 0 : i32
    %c0_i32_1 = arith.constant 0 : i32
    return %c0_i32, %c0_i32_0 : i32, i32
  }
  func.func @transform_5(%arg0: i32) -> (i32, i32) {
    %c0_i32 = arith.constant 0 : i32
    %c0_i32_0 = arith.constant 0 : i32
    %c0_i32_1 = arith.constant 0 : i32
    return %c0_i32, %c0_i32_0 : i32, i32
  }
  func.func @transform_6(%arg0: i32) -> (i32, i32) {
    %c0_i32 = arith.constant 0 : i32
    %c0_i32_0 = arith.constant 0 : i32
    %c0_i32_1 = arith.constant 0 : i32
    return %c0_i32, %c0_i32_0 : i32, i32
  }
  func.func @transform_7(%arg0: i32) -> i32 {
    %c0_i32 = arith.constant 0 : i32
    %c0_i32_0 = arith.constant 0 : i32
    return %c0_i32 : i32
  }
  func.func @transform_8(%arg0: i32) -> (i32, i32) {
    %c0_i32 = arith.constant 0 : i32
    %c0_i32_0 = arith.constant 0 : i32
    return %c0_i32, %arg0 : i32, i32
  }
}

</mosaic_0001>

<llo_original>
// kernel: tpu_custom_call.1
$region0: #{tpu_custom_call.1}
  #allocation0 [shape = 'u32[]', space=smem, size = 0x4, offset = 0x4, fixed_abs, tag = 'smem constant byte address 0x4 - core index']
  #allocation1 [shape = 'u32[144,128]{1,0:T(1,128)}', space=vmem, size = 0x12000, scoped, tag = 'internal scratch']
  %s0 = inlined_call_operand.hbm [shape: f32[512,128], index: 0, kind: input, shape index: {}]
  %s1 = inlined_call_operand.vmem [shape: f32[1,128], index: 1, kind: input, shape index: {}]
  %s2 = inlined_call_operand.vmem [shape: f32[1,128], index: 2, kind: input, shape index: {}]
  %s3 = inlined_call_operand.vmem [shape: f32[1,128], index: 3, kind: input, shape index: {}]
  %s4 = inlined_call_operand.vmem [shape: f32[1,127], index: 4, kind: input, shape index: {}]
  %s5 = inlined_call_operand.vmem [shape: f32[1,127], index: 5, kind: input, shape index: {}]
  %s6 = inlined_call_operand.vmem [shape: f32[1,127], index: 6, kind: input, shape index: {}]
  %s7 = inlined_call_operand.vmem [shape: f32[2], index: 7, kind: input, shape index: {}]
  %s8 = inlined_call_operand.hbm [shape: f32[1,512], index: 8, kind: output, shape index: {}]
  %s9 = sld [smem:[#allocation0]]
  $region73: #{tpu_custom_call.1} parent=0
    _
  %s11 = ssub.s32 1, %s9
  %s12 = scalar_select 0, %s11, %s9
  $region1: #{tpu_custom_call.1} parent=0
    #allocation2 [shape = 'u8[262144]{0}', space=vmem, size = 0x40000, scoped, tag = 'input window, operand 0']
    #allocation3 [shape = 's32[2]{0}', space=sflag, size = 0x8, scoped, tag = 'scoped memory for tpu_custom_call.1']
    #allocation4 [shape = 's32[2]{0}', space=sflag, size = 0x8, scoped, tag = 'scoped memory for tpu_custom_call.1']
    #allocation5 [shape = 's32[2]{0}', space=sflag, size = 0x8, scoped, tag = 'scoped memory for tpu_custom_call.1']
    #allocation6 [shape = 'u8[512]{0}', space=smem, size = 0x200, scoped, tag = 'input window, operand 7, single buffered']
    #allocation7 [shape = 'u8[2048]{0}', space=vmem, size = 0x800, scoped, tag = 'output window, operand 0']
    %13 = vsyncpa [#allocation3], 0
    %s14 = scalar_lea.sflag [#allocation3], 1
    %15 = vsyncpa %s14, 0
    %16 = vsyncpa [#allocation5], 0
    %17 = vsyncpa [#allocation4], 0
    %s18 = scalar_lea.sflag [#allocation4], 1
    %19 = vsyncpa %s18, 0
    loop: start=0, step=1, limit=4
    $region2: #{tpu_custom_call.1} parent=1 // loop_pre_header
      _
    $region3: #{tpu_custom_call.1} parent=1 // loop_header
      %s21 = sphi 0, %s25
      %p22 = scmp.ge.s32.totalorder %s21, 4
      %s31 = sphi 0, %s33
      %s34 = sphi 0, %s31
      %s35 = sphi 0, %s34
      %s51 = sphi 0, %s35
      %s55 = sphi 0, %s55
      %s57 = sphi 0, %s55
      %s58 = sphi 0, %s57
      %s72 = sphi 0, %s58
      %s76 = sphi 0, %s76
      %s78 = sphi 0, %s76
      %s79 = sphi 0, %s78
      %s93 = sphi 0, %s79
      %s97 = sphi 0, %s97
      %s99 = sphi 0, %s97
      %s100 = sphi 0, %s99
      %s114 = sphi 0, %s100
      %s118 = sphi 0, %s118
      %s120 = sphi 0, %s118
      %s121 = sphi 0, %s120
      %s135 = sphi 0, %s121
      %s139 = sphi 0, %s139
      %s141 = sphi 0, %s139
      %s142 = sphi 0, %s141
      %s156 = sphi 0, %s142
      %s160 = sphi 0, %s160
      %s162 = sphi 0, %s160
      %s163 = sphi 0, %s162
      %s177 = sphi 0, %s163
      %s181 = sphi 0, %s181
      %s183 = sphi 0, %s181
      %s184 = sphi 0, %s183
      %s198 = sphi 0, %s184
      %s204 = sphi 0, %s206
      %s207 = sphi 0, %s204
      %s208 = sphi 0, %s207
      %s224 = sphi 0, %s208
    $region4: #{tpu_custom_call.1} parent=1 // loop_header_branch
      %24 = sbr.rel (%p22) target = $region8
    $region5: #{tpu_custom_call.1} parent=1 // loop_body
      %s26 = ssub.s32 %s21, 1
      %s27 = ssub.s32 %s21, 2
      %s28 = sadd.s32 %s21, 1
      %s29 = ssub.s32 %s21, %s28
      %p30 = scmp.eq.s32.totalorder %s29, 0
      %s32 = sadd.s32 %s31, 1
      %s33 = scalar_select %p30, %s31, %s32
      %p36 = pneg %p30
      %p37 = scmp.eq.s32.totalorder %s21, 1
      %p38 = por %p36, %p37
      %p39 = scmp.ne.s32.totalorder %s31, %s34
      %p40 = scmp.eq.s32.totalorder %s21, 0
      %p41 = por %p39, %p40
      %p42 = scmp.ne.s32.totalorder %s31, %s34
      %p43 = scmp.eq.s32.totalorder %s26, 1
      %p44 = por %p42, %p43
      %p45 = scmp.ne.s32.totalorder %s34, %s35
      %p46 = scmp.eq.s32.totalorder %s26, 0
      %p47 = por %p45, %p46
      %p48 = scmp.ne.s32.totalorder %s34, %s35
      %p49 = scmp.eq.s32.totalorder %s27, 1
      %p50 = por %p48, %p49
      %p52 = scmp.ne.s32.totalorder %s35, %s51
      %p53 = scmp.eq.s32.totalorder %s27, 0
      %p54 = por %p52, %p53
      %s56 = sadd.s32 %s55, 1
      %p59 = scmp.eq.s32.totalorder %s21, 1
      %p60 = scmp.ne.s32.totalorder %s55, %s57
      %p61 = scmp.eq.s32.totalorder %s21, 0
      %p62 = por %p60, %p61
      %p63 = scmp.ne.s32.totalorder %s55, %s57
      %p64 = scmp.eq.s32.totalorder %s26, 1
      %p65 = por %p63, %p64
      %p66 = scmp.ne.s32.totalorder %s57, %s58
      %p67 = scmp.eq.s32.totalorder %s26, 0
      %p68 = por %p66, %p67
      %p69 = scmp.ne.s32.totalorder %s57, %s58
      %p70 = scmp.eq.s32.totalorder %s27, 1
      %p71 = por %p69, %p70
      %p73 = scmp.ne.s32.totalorder %s58, %s72
      %p74 = scmp.eq.s32.totalorder %s27, 0
      %p75 = por %p73, %p74
      %s77 = sadd.s32 %s76, 1
      %p80 = scmp.eq.s32.totalorder %s21, 1
      %p81 = scmp.ne.s32.totalorder %s76, %s78
      %p82 = scmp.eq.s32.totalorder %s21, 0
      %p83 = por %p81, %p82
      %p84 = scmp.ne.s32.totalorder %s76, %s78
      %p85 = scmp.eq.s32.totalorder %s26, 1
      %p86 = por %p84, %p85
      %p87 = scmp.ne.s32.totalorder %s78, %s79
      %p88 = scmp.eq.s32.totalorder %s26, 0
      %p89 = por %p87, %p88
      %p90 = scmp.ne.s32.totalorder %s78, %s79
      %p91 = scmp.eq.s32.totalorder %s27, 1
      %p92 = por %p90, %p91
      %p94 = scmp.ne.s32.totalorder %s79, %s93
      %p95 = scmp.eq.s32.totalorder %s27, 0
      %p96 = por %p94, %p95
      %s98 = sadd.s32 %s97, 1
      %p101 = scmp.eq.s32.totalorder %s21, 1
      %p102 = scmp.ne.s32.totalorder %s97, %s99
      %p103 = scmp.eq.s32.totalorder %s21, 0
      %p104 = por %p102, %p103
      %p105 = scmp.ne.s32.totalorder %s97, %s99
      %p106 = scmp.eq.s32.totalorder %s26, 1
      %p107 = por %p105, %p106
      %p108 = scmp.ne.s32.totalorder %s99, %s100
      %p109 = scmp.eq.s32.totalorder %s26, 0
      %p110 = por %p108, %p109
      %p111 = scmp.ne.s32.totalorder %s99, %s100
      %p112 = scmp.eq.s32.totalorder %s27, 1
      %p113 = por %p111, %p112
      %p115 = scmp.ne.s32.totalorder %s100, %s114
      %p116 = scmp.eq.s32.totalorder %s27, 0
      %p117 = por %p115, %p116
      %s119 = sadd.s32 %s118, 1
      %p122 = scmp.eq.s32.totalorder %s21, 1
      %p123 = scmp.ne.s32.totalorder %s118, %s120
      %p124 = scmp.eq.s32.totalorder %s21, 0
      %p125 = por %p123, %p124
      %p126 = scmp.ne.s32.totalorder %s118, %s120
      %p127 = scmp.eq.s32.totalorder %s26, 1
      %p128 = por %p126, %p127
      %p129 = scmp.ne.s32.totalorder %s120, %s121
      %p130 = scmp.eq.s32.totalorder %s26, 0
      %p131 = por %p129, %p130
      %p132 = scmp.ne.s32.totalorder %s120, %s121
      %p133 = scmp.eq.s32.totalorder %s27, 1
      %p134 = por %p132, %p133
      %p136 = scmp.ne.s32.totalorder %s121, %s135
      %p137 = scmp.eq.s32.totalorder %s27, 0
      %p138 = por %p136, %p137
      %s140 = sadd.s32 %s139, 1
      %p143 = scmp.eq.s32.totalorder %s21, 1
      %p144 = scmp.ne.s32.totalorder %s139, %s141
      %p145 = scmp.eq.s32.totalorder %s21, 0
      %p146 = por %p144, %p145
      %p147 = scmp.ne.s32.totalorder %s139, %s141
      %p148 = scmp.eq.s32.totalorder %s26, 1
      %p149 = por %p147, %p148
      %p150 = scmp.ne.s32.totalorder %s141, %s142
      %p151 = scmp.eq.s32.totalorder %s26, 0
      %p152 = por %p150, %p151
      %p153 = scmp.ne.s32.totalorder %s141, %s142
      %p154 = scmp.eq.s32.totalorder %s27, 1
      %p155 = por %p153, %p154
      %p157 = scmp.ne.s32.totalorder %s142, %s156
      %p158 = scmp.eq.s32.totalorder %s27, 0
      %p159 = por %p157, %p158
      %s161 = sadd.s32 %s160, 1
      %p164 = scmp.eq.s32.totalorder %s21, 1
      %p165 = scmp.ne.s32.totalorder %s160, %s162
      %p166 = scmp.eq.s32.totalorder %s21, 0
      %p167 = por %p165, %p166
      %p168 = scmp.ne.s32.totalorder %s160, %s162
      %p169 = scmp.eq.s32.totalorder %s26, 1
      %p170 = por %p168, %p169
      %p171 = scmp.ne.s32.totalorder %s162, %s163
      %p172 = scmp.eq.s32.totalorder %s26, 0
      %p173 = por %p171, %p172
      %p174 = scmp.ne.s32.totalorder %s162, %s163
      %p175 = scmp.eq.s32.totalorder %s27, 1
      %p176 = por %p174, %p175
      %p178 = scmp.ne.s32.totalorder %s163, %s177
      %p179 = scmp.eq.s32.totalorder %s27, 0
      %p180 = por %p178, %p179
      %s182 = sadd.s32 %s181, 1
      %p185 = scmp.eq.s32.totalorder %s21, 1
      %p186 = scmp.ne.s32.totalorder %s181, %s183
      %p187 = scmp.eq.s32.totalorder %s21, 0
      %p188 = por %p186, %p187
      %p189 = scmp.ne.s32.totalorder %s181, %s183
      %p190 = scmp.eq.s32.totalorder %s26, 1
      %p191 = por %p189, %p190
      %p192 = scmp.ne.s32.totalorder %s183, %s184
      %p193 = scmp.eq.s32.totalorder %s26, 0
      %p194 = por %p192, %p193
      %p195 = scmp.ne.s32.totalorder %s183, %s184
      %p196 = scmp.eq.s32.totalorder %s27, 1
      %p197 = por %p195, %p196
      %p199 = scmp.ne.s32.totalorder %s184, %s198
      %p200 = scmp.eq.s32.totalorder %s27, 0
      %p201 = por %p199, %p200
      %s202 = ssub.s32 %s21, %s28
      %p203 = scmp.eq.s32.totalorder %s202, 0
      %s205 = sadd.s32 %s204, 1
      %s206 = scalar_select %p203, %s204, %s205
      %p209 = pneg %p203
      %p210 = scmp.eq.s32.totalorder %s21, 1
      %p211 = por %p209, %p210
      %p212 = scmp.ne.s32.totalorder %s204, %s207
      %p213 = scmp.eq.s32.totalorder %s21, 0
      %p214 = por %p212, %p213
      %p215 = scmp.ne.s32.totalorder %s204, %s207
      %p216 = scmp.eq.s32.totalorder %s26, 1
      %p217 = por %p215, %p216
      %p218 = scmp.ne.s32.totalorder %s207, %s208
      %p219 = scmp.eq.s32.totalorder %s26, 0
      %p220 = por %p218, %p219
      %p221 = scmp.ne.s32.totalorder %s207, %s208
      %p222 = scmp.eq.s32.totalorder %s27, 1
      %p223 = por %p221, %p222
      %p225 = scmp.ne.s32.totalorder %s208, %s224
      %p226 = scmp.eq.s32.totalorder %s27, 0
      %p227 = por %p225, %p226
      %p228 = scmp.le.s32.totalorder 1, %s21
      %p229 = scmp.lt.s32.totalorder %s21, 3
      %p230 = pnand %p228, %p229
      %p231 = pneg %p230
      // Predicated region
      $region9: #{tpu_custom_call.1} parent=5 // pred_check
        _
      $region10: #{tpu_custom_call.1} parent=5 // pred_check_branch
        %233 = sbr.rel (%p230) target = $region12
      $region11: #{tpu_custom_call.1} parent=5 // pred_region
        %s234 = ssub.s32 %s21, 1
        // Predicated region
        $region13: #{tpu_custom_call.1} parent=11 // pred_check
          %p235 = pneg %p68
        $region14: #{tpu_custom_call.1} parent=11 // pred_check_branch
          %237 = sbr.rel (%p235) target = $region16
        $region15: #{tpu_custom_call.1} parent=11 // pred_region
          _
        $region16: #{tpu_custom_call.1} parent=11 // pred_fallthru
          _
        // Predicated region
        $region17: #{tpu_custom_call.1} parent=11 // pred_check
          %p238 = pneg %p89
        $region18: #{tpu_custom_call.1} parent=11 // pred_check_branch
          %240 = sbr.rel (%p238) target = $region20
        $region19: #{tpu_custom_call.1} parent=11 // pred_region
          _
        $region20: #{tpu_custom_call.1} parent=11 // pred_fallthru
          _
        // Predicated region
        $region21: #{tpu_custom_call.1} parent=11 // pred_check
          %p241 = pneg %p110
        $region22: #{tpu_custom_call.1} parent=11 // pred_check_branch
          %243 = sbr.rel (%p241) target = $region24
        $region23: #{tpu_custom_call.1} parent=11 // pred_region
          _
        $region24: #{tpu_custom_call.1} parent=11 // pred_fallthru
          _
        // Predicated region
        $region25: #{tpu_custom_call.1} parent=11 // pred_check
          %p244 = pneg %p131
        $region26: #{tpu_custom_call.1} parent=11 // pred_check_branch
          %246 = sbr.rel (%p244) target = $region28
        $region27: #{tpu_custom_call.1} parent=11 // pred_region
          _
        $region28: #{tpu_custom_call.1} parent=11 // pred_fallthru
          _
        // Predicated region
        $region29: #{tpu_custom_call.1} parent=11 // pred_check
          %p247 = pneg %p152
        $region30: #{tpu_custom_call.1} parent=11 // pred_check_branch
          %249 = sbr.rel (%p247) target = $region32
        $region31: #{tpu_custom_call.1} parent=11 // pred_region
          _
        $region32: #{tpu_custom_call.1} parent=11 // pred_fallthru
          _
        // Predicated region
        $region33: #{tpu_custom_call.1} parent=11 // pred_check
          %p250 = pneg %p173
        $region34: #{tpu_custom_call.1} parent=11 // pred_check_branch
          %252 = sbr.rel (%p250) target = $region36
        $region35: #{tpu_custom_call.1} parent=11 // pred_region
          _
        $region36: #{tpu_custom_call.1} parent=11 // pred_fallthru
          _
        // Predicated region
        $region37: #{tpu_custom_call.1} parent=11 // pred_check
          %p253 = pneg %p194
        $region38: #{tpu_custom_call.1} parent=11 // pred_check_branch
          %255 = sbr.rel (%p253) target = $region40
        $region39: #{tpu_custom_call.1} parent=11 // pred_region
          %s257 = ssub.s32 16, 16
          %258 = vsyncadd [#allocation5], %s257
          %s260 = sshll.u32 %s7, 4
          %s261 = int_to_ptr.vmem [resolvable:$true] %s260
          %263 = dma.vmem_to_smem %s261, 16, [#allocation6], [#allocation5]
        $region40: #{tpu_custom_call.1} parent=11 // pred_fallthru
          _
      $region12: #{tpu_custom_call.1} parent=5 // pred_fallthru
        _
      %p264 = scmp.lt.s32.totalorder %s21, 2
      // Predicated region
      $region41: #{tpu_custom_call.1} parent=5 // pred_check
        %p265 = pneg %p264
      $region42: #{tpu_custom_call.1} parent=5 // pred_check_branch
        %267 = sbr.rel (%p265) target = $region44
      $region43: #{tpu_custom_call.1} parent=5 // pred_region
        // Predicated region
        $region45: #{tpu_custom_call.1} parent=43 // pred_check
          %p268 = pneg %p41
        $region46: #{tpu_custom_call.1} parent=43 // pred_check_branch
          %270 = sbr.rel (%p268) target = $region48
        $region47: #{tpu_custom_call.1} parent=43 // pred_region
          %s271 = sand.u32 %s31, 1
          %s272 = scalar_lea.sflag [#allocation3], %s271
          %s273 = sand.u32 %s31, 1
          %s274 = smul.addr %s273, 256
          %s275 = scalar_lea.vmem [#allocation2], %s274
          %s276 = smul.u32 32, %s21
          %s278 = ssub.s32 4096, 4096
          %279 = vsyncadd %s272, %s278
          %s280 = smul.addr %s276, 128
          %s281 = scalar_lea.hbm %s0, %s280
          %s282 = sshll.u32 %s275, 4
          %s283 = int_to_ptr.vmem [resolvable:$true] %s282
          %288 = dma.hbm_to_vmem [thread:$0]  %s281, 4096, %s283, %s272, 128, 128, 8
        $region48: #{tpu_custom_call.1} parent=43 // pred_fallthru
          _
      $region44: #{tpu_custom_call.1} parent=5 // pred_fallthru
        _
      %p289 = scmp.le.s32.totalorder 1, %s21
      %p290 = scmp.lt.s32.totalorder %s21, 3
      %p291 = pnand %p289, %p290
      %p292 = pneg %p291
      // Predicated region
      $region49: #{tpu_custom_call.1} parent=5 // pred_check
        _
      $region50: #{tpu_custom_call.1} parent=5 // pred_check_branch
        %294 = sbr.rel (%p291) target = $region52
      $region51: #{tpu_custom_call.1} parent=5 // pred_region
        %s295 = ssub.s32 %s21, 1
        %s296 = sand.u32 %s34, 1
        %s297 = scalar_lea.sflag [#allocation3], %s296
        %s298 = sand.u32 %s34, 1
        %s299 = smul.addr %s298, 256
        %s300 = scalar_lea.vmem [#allocation2], %s299
        // Predicated region
        $region53: #{tpu_custom_call.1} parent=51 // pred_check
          %p301 = pneg %p47
        $region54: #{tpu_custom_call.1} parent=51 // pred_check_branch
          %303 = sbr.rel (%p301) target = $region56
        $region55: #{tpu_custom_call.1} parent=51 // pred_region
          %304 = dma.done %s297, 4096
        $region56: #{tpu_custom_call.1} parent=51 // pred_fallthru
          _
        // Predicated region
        $region57: #{tpu_custom_call.1} parent=51 // pred_check
          %p305 = pneg %p194
        $region58: #{tpu_custom_call.1} parent=51 // pred_check_branch
          %307 = sbr.rel (%p305) target = $region60
        $region59: #{tpu_custom_call.1} parent=51 // pred_region
          %308 = dma.done [#allocation5], 16
        $region60: #{tpu_custom_call.1} parent=51 // pred_fallthru
          _
        %309 = sfence
        %s310 = sand.u32 %s34, 1
        %s311 = scalar_lea.sflag [#allocation3], %s310
        %s312 = sand.u32 %s34, 1
        %s313 = smul.addr %s312, 256
        %s314 = scalar_lea.vmem [#allocation2], %s313
        %p315 = pneg %p47
        %p316 = pneg %p44
        %p317 = pneg %p68
        %p318 = pneg %p65
        %p319 = pneg %p89
        %p320 = pneg %p86
        %p321 = pneg %p110
        %p322 = pneg %p107
        %p323 = pneg %p131
        %p324 = pneg %p128
        %p325 = pneg %p152
        %p326 = pneg %p149
        %p327 = pneg %p173
        %p328 = pneg %p170
        %p329 = pneg %p194
        %p330 = pneg %p191
        %p331 = pneg %p220
        %p332 = pneg %p217
        %s333 = sand.u32 %s207, 1
        %s334 = scalar_lea.sflag [#allocation4], %s333
        %s335 = sand.u32 %s207, 1
        %s336 = smul.addr %s335, 2
        %s337 = scalar_lea.vmem [#allocation7], %s336
        %s338 = smul.u32 32, %s26
        %s339 = smul.u32 2, %s26
        %v340 = vld [vmem:[%s300] sm:$0xff]
        %v341 = vld [vmem:[%s300 + $0x8] sm:$0xff]
        %v342 = vld [vmem:[%s300 + $0x10] sm:$0xff]
        %v343 = vld [vmem:[%s300 + $0x18] sm:$0xff]
        %v344 = vld [vmem:[%s300 + $0x20] sm:$0xff]
        %v345 = vld [vmem:[%s300 + $0x28] sm:$0xff]
        %v346 = vld [vmem:[%s300 + $0x30] sm:$0xff]
        %v347 = vld [vmem:[%s300 + $0x38] sm:$0xff]
        %v348 = vld [vmem:[%s300 + $0x40] sm:$0xff]
        %v349 = vld [vmem:[%s300 + $0x48] sm:$0xff]
        %v350 = vld [vmem:[%s300 + $0x50] sm:$0xff]
        %v351 = vld [vmem:[%s300 + $0x58] sm:$0xff]
        %v352 = vld [vmem:[%s300 + $0x60] sm:$0xff]
        %v353 = vld [vmem:[%s300 + $0x68] sm:$0xff]
        %v354 = vld [vmem:[%s300 + $0x70] sm:$0xff]
        %v355 = vld [vmem:[%s300 + $0x78] sm:$0xff]
        %v356 = vld [vmem:[%s300 + $0x80] sm:$0xff]
        %v357 = vld [vmem:[%s300 + $0x88] sm:$0xff]
        %v358 = vld [vmem:[%s300 + $0x90] sm:$0xff]
        %v359 = vld [vmem:[%s300 + $0x98] sm:$0xff]
        %v360 = vld [vmem:[%s300 + $0xa0] sm:$0xff]
        %v361 = vld [vmem:[%s300 + $0xa8] sm:$0xff]
        %v362 = vld [vmem:[%s300 + $0xb0] sm:$0xff]
        %v363 = vld [vmem:[%s300 + $0xb8] sm:$0xff]
        %v364 = vld [vmem:[%s300 + $0xc0] sm:$0xff]
        %v365 = vld [vmem:[%s300 + $0xc8] sm:$0xff]
        %v366 = vld [vmem:[%s300 + $0xd0] sm:$0xff]
        %v367 = vld [vmem:[%s300 + $0xd8] sm:$0xff]
        %v368 = vld [vmem:[%s300 + $0xe0] sm:$0xff]
        %v369 = vld [vmem:[%s300 + $0xe8] sm:$0xff]
        %v370 = vld [vmem:[%s300 + $0xf0] sm:$0xff]
        %v371 = vld [vmem:[%s300 + $0xf8] sm:$0xff]
        %s372 = sld [smem:[#allocation6]]
        %s373 = sld [smem:[#allocation6 + $0x1]]
        %v374 = vmax.f32 %v340, 0.0
        %v375 = vmax.f32 %v341, 0.0
        %v376 = vmax.f32 %v342, 0.0
        %v377 = vmax.f32 %v343, 0.0
        %v378 = vmax.f32 %v344, 0.0
        %v379 = vmax.f32 %v345, 0.0
        %v380 = vmax.f32 %v346, 0.0
        %v381 = vmax.f32 %v347, 0.0
        %v382 = vmax.f32 %v348, 0.0
        %v383 = vmax.f32 %v349, 0.0
        %v384 = vmax.f32 %v350, 0.0
        %v385 = vmax.f32 %v351, 0.0
        %v386 = vmax.f32 %v352, 0.0
        %v387 = vmax.f32 %v353, 0.0
        %v388 = vmax.f32 %v354, 0.0
        %v389 = vmax.f32 %v355, 0.0
        %v390 = vmax.f32 %v356, 0.0
        %v391 = vmax.f32 %v357, 0.0
        %v392 = vmax.f32 %v358, 0.0
        %v393 = vmax.f32 %v359, 0.0
        %v394 = vmax.f32 %v360, 0.0
        %v395 = vmax.f32 %v361, 0.0
        %v396 = vmax.f32 %v362, 0.0
        %v397 = vmax.f32 %v363, 0.0
        %v398 = vmax.f32 %v364, 0.0
        %v399 = vmax.f32 %v365, 0.0
        %v400 = vmax.f32 %v366, 0.0
        %v401 = vmax.f32 %v367, 0.0
        %v402 = vmax.f32 %v368, 0.0
        %v403 = vmax.f32 %v369, 0.0
        %v404 = vmax.f32 %v370, 0.0
        %v405 = vmax.f32 %v371, 0.0
        %v406 = vand.u32 2147483647, %v340
        %v407 = vand.u32 2147483647, %v341
        %v408 = vand.u32 2147483647, %v342
        %v409 = vand.u32 2147483647, %v343
        %v410 = vand.u32 2147483647, %v344
        %v411 = vand.u32 2147483647, %v345
        %v412 = vand.u32 2147483647, %v346
        %v413 = vand.u32 2147483647, %v347
        %v414 = vand.u32 2147483647, %v348
        %v415 = vand.u32 2147483647, %v349
        %v416 = vand.u32 2147483647, %v350
        %v417 = vand.u32 2147483647, %v351
        %v418 = vand.u32 2147483647, %v352
        %v419 = vand.u32 2147483647, %v353
        %v420 = vand.u32 2147483647, %v354
        %v421 = vand.u32 2147483647, %v355
        %v422 = vand.u32 2147483647, %v356
        %v423 = vand.u32 2147483647, %v357
        %v424 = vand.u32 2147483647, %v358
        %v425 = vand.u32 2147483647, %v359
        %v426 = vand.u32 2147483647, %v360
        %v427 = vand.u32 2147483647, %v361
        %v428 = vand.u32 2147483647, %v362
        %v429 = vand.u32 2147483647, %v363
        %v430 = vand.u32 2147483647, %v364
        %v431 = vand.u32 2147483647, %v365
        %v432 = vand.u32 2147483647, %v366
        %v433 = vand.u32 2147483647, %v367
        %v434 = vand.u32 2147483647, %v368
        %v435 = vand.u32 2147483647, %v369
        %v436 = vand.u32 2147483647, %v370
        %v437 = vand.u32 2147483647, %v371
        %v438 = vsub.f32 0.0, %v406
        %v439 = vsub.f32 0.0, %v407
        %v440 = vsub.f32 0.0, %v408
        %v441 = vsub.f32 0.0, %v409
        %v442 = vsub.f32 0.0, %v410
        %v443 = vsub.f32 0.0, %v411
        %v444 = vsub.f32 0.0, %v412
        %v445 = vsub.f32 0.0, %v413
        %v446 = vsub.f32 0.0, %v414
        %v447 = vsub.f32 0.0, %v415
        %v448 = vsub.f32 0.0, %v416
        %v449 = vsub.f32 0.0, %v417
        %v450 = vsub.f32 0.0, %v418
        %v451 = vsub.f32 0.0, %v419
        %v452 = vsub.f32 0.0, %v420
        %v453 = vsub.f32 0.0, %v421
        %v454 = vsub.f32 0.0, %v422
        %v455 = vsub.f32 0.0, %v423
        %v456 = vsub.f32 0.0, %v424
        %v457 = vsub.f32 0.0, %v425
        %v458 = vsub.f32 0.0, %v426
        %v459 = vsub.f32 0.0, %v427
        %v460 = vsub.f32 0.0, %v428
        %v461 = vsub.f32 0.0, %v429
        %v462 = vsub.f32 0.0, %v430
        %v463 = vsub.f32 0.0, %v431
        %v464 = vsub.f32 0.0, %v432
        %v465 = vsub.f32 0.0, %v433
        %v466 = vsub.f32 0.0, %v434
        %v467 = vsub.f32 0.0, %v435
        %v468 = vsub.f32 0.0, %v436
        %v469 = vsub.f32 0.0, %v437
        %v470 = vmul.f32 %v438, 1.442695
        %v471 = vpow.pop %v470
        %v472 = vmul.f32 %v439, 1.442695
        %v473 = vpow.pop %v472
        %v474 = vmul.f32 %v440, 1.442695
        %v475 = vpow.pop %v474
        %v476 = vmul.f32 %v441, 1.442695
        %v477 = vpow.pop %v476
        %v478 = vmul.f32 %v442, 1.442695
        %v479 = vpow.pop %v478
        %v480 = vmul.f32 %v443, 1.442695
        %v481 = vpow.pop %v480
        %v482 = vmul.f32 %v444, 1.442695
        %v483 = vpow.pop %v482
        %v484 = vmul.f32 %v445, 1.442695
        %v485 = vpow.pop %v484
        %v486 = vmul.f32 %v446, 1.442695
        %v487 = vpow.pop %v486
        %v488 = vmul.f32 %v447, 1.442695
        %v489 = vpow.pop %v488
        %v490 = vmul.f32 %v448, 1.442695
        %v491 = vpow.pop %v490
        %v492 = vmul.f32 %v449, 1.442695
        %v493 = vpow.pop %v492
        %v494 = vmul.f32 %v450, 1.442695
        %v495 = vpow.pop %v494
        %v496 = vmul.f32 %v451, 1.442695
        %v497 = vpow.pop %v496
        %v498 = vmul.f32 %v452, 1.442695
        %v499 = vpow.pop %v498
        %v500 = vmul.f32 %v453, 1.442695
        %v501 = vpow.pop %v500
        %v502 = vmul.f32 %v454, 1.442695
        %v503 = vpow.pop %v502
        %v504 = vmul.f32 %v455, 1.442695
        %v505 = vpow.pop %v504
        %v506 = vmul.f32 %v456, 1.442695
        %v507 = vpow.pop %v506
        %v508 = vmul.f32 %v457, 1.442695
        %v509 = vpow.pop %v508
        %v510 = vmul.f32 %v458, 1.442695
        %v511 = vpow.pop %v510
        %v512 = vmul.f32 %v459, 1.442695
        %v513 = vpow.pop %v512
        %v514 = vmul.f32 %v460, 1.442695
        %v515 = vpow.pop %v514
        %v516 = vmul.f32 %v461, 1.442695
        %v517 = vpow.pop %v516
        %v518 = vmul.f32 %v462, 1.442695
        %v519 = vpow.pop %v518
        %v520 = vmul.f32 %v463, 1.442695
        %v521 = vpow.pop %v520
        %v522 = vmul.f32 %v464, 1.442695
        %v523 = vpow.pop %v522
        %v524 = vmul.f32 %v465, 1.442695
        %v525 = vpow.pop %v524
        %v526 = vmul.f32 %v466, 1.442695
        %v527 = vpow.pop %v526
        %v528 = vmul.f32 %v467, 1.442695
        %v529 = vpow.pop %v528
        %v530 = vmul.f32 %v468, 1.442695
        %v531 = vpow.pop %v530
        %v532 = vmul.f32 %v469, 1.442695
        %v533 = vpow.pop %v532
        %v534 = vadd.f32 %v471, 1.0
        %v535 = vadd.f32 %v473, 1.0
        %v536 = vadd.f32 %v475, 1.0
        %v537 = vadd.f32 %v477, 1.0
        %v538 = vadd.f32 %v479, 1.0
        %v539 = vadd.f32 %v481, 1.0
        %v540 = vadd.f32 %v483, 1.0
        %v541 = vadd.f32 %v485, 1.0
        %v542 = vadd.f32 %v487, 1.0
        %v543 = vadd.f32 %v489, 1.0
        %v544 = vadd.f32 %v491, 1.0
        %v545 = vadd.f32 %v493, 1.0
        %v546 = vadd.f32 %v495, 1.0
        %v547 = vadd.f32 %v497, 1.0
        %v548 = vadd.f32 %v499, 1.0
        %v549 = vadd.f32 %v501, 1.0
        %v550 = vadd.f32 %v503, 1.0
        %v551 = vadd.f32 %v505, 1.0
        %v552 = vadd.f32 %v507, 1.0
        %v553 = vadd.f32 %v509, 1.0
        %v554 = vadd.f32 %v511, 1.0
        %v555 = vadd.f32 %v513, 1.0
        %v556 = vadd.f32 %v515, 1.0
        %v557 = vadd.f32 %v517, 1.0
        %v558 = vadd.f32 %v519, 1.0
        %v559 = vadd.f32 %v521, 1.0
        %v560 = vadd.f32 %v523, 1.0
        %v561 = vadd.f32 %v525, 1.0
        %v562 = vadd.f32 %v527, 1.0
        %v563 = vadd.f32 %v529, 1.0
        %v564 = vadd.f32 %v531, 1.0
        %v565 = vadd.f32 %v533, 1.0
        %v566 = vlog2.pop %v534
        %v567 = vmul.f32 %v566, 0.6931472
        %v568 = vlog2.pop %v535
        %v569 = vmul.f32 %v568, 0.6931472
        %v570 = vlog2.pop %v536
        %v571 = vmul.f32 %v570, 0.6931472
        %v572 = vlog2.pop %v537
        %v573 = vmul.f32 %v572, 0.6931472
        %v574 = vlog2.pop %v538
        %v575 = vmul.f32 %v574, 0.6931472
        %v576 = vlog2.pop %v539
        %v577 = vmul.f32 %v576, 0.6931472
        %v578 = vlog2.pop %v540
        %v579 = vmul.f32 %v578, 0.6931472
        %v580 = vlog2.pop %v541
        %v581 = vmul.f32 %v580, 0.6931472
        %v582 = vlog2.pop %v542
        %v583 = vmul.f32 %v582, 0.6931472
        %v584 = vlog2.pop %v543
        %v585 = vmul.f32 %v584, 0.6931472
        %v586 = vlog2.pop %v544
        %v587 = vmul.f32 %v586, 0.6931472
        %v588 = vlog2.pop %v545
        %v589 = vmul.f32 %v588, 0.6931472
        %v590 = vlog2.pop %v546
        %v591 = vmul.f32 %v590, 0.6931472
        %v592 = vlog2.pop %v547
        %v593 = vmul.f32 %v592, 0.6931472
        %v594 = vlog2.pop %v548
        %v595 = vmul.f32 %v594, 0.6931472
        %v596 = vlog2.pop %v549
        %v597 = vmul.f32 %v596, 0.6931472
        %v598 = vlog2.pop %v550
        %v599 = vmul.f32 %v598, 0.6931472
        %v600 = vlog2.pop %v551
        %v601 = vmul.f32 %v600, 0.6931472
        %v602 = vlog2.pop %v552
        %v603 = vmul.f32 %v602, 0.6931472
        %v604 = vlog2.pop %v553
        %v605 = vmul.f32 %v604, 0.6931472
        %v606 = vlog2.pop %v554
        %v607 = vmul.f32 %v606, 0.6931472
        %v608 = vlog2.pop %v555
        %v609 = vmul.f32 %v608, 0.6931472
        %v610 = vlog2.pop %v556
        %v611 = vmul.f32 %v610, 0.6931472
        %v612 = vlog2.pop %v557
        %v613 = vmul.f32 %v612, 0.6931472
        %v614 = vlog2.pop %v558
        %v615 = vmul.f32 %v614, 0.6931472
        %v616 = vlog2.pop %v559
        %v617 = vmul.f32 %v616, 0.6931472
        %v618 = vlog2.pop %v560
        %v619 = vmul.f32 %v618, 0.6931472
        %v620 = vlog2.pop %v561
        %v621 = vmul.f32 %v620, 0.6931472
        %v622 = vlog2.pop %v562
        %v623 = vmul.f32 %v622, 0.6931472
        %v624 = vlog2.pop %v563
        %v625 = vmul.f32 %v624, 0.6931472
        %v626 = vlog2.pop %v564
        %v627 = vmul.f32 %v626, 0.6931472
        %v628 = vlog2.pop %v565
        %v629 = vmul.f32 %v628, 0.6931472
        %v630 = vadd.f32 %v374, %v567
        %v631 = vadd.f32 %v375, %v569
        %v632 = vadd.f32 %v376, %v571
        %v633 = vadd.f32 %v377, %v573
        %v634 = vadd.f32 %v378, %v575
        %v635 = vadd.f32 %v379, %v577
        %v636 = vadd.f32 %v380, %v579
        %v637 = vadd.f32 %v381, %v581
        %v638 = vadd.f32 %v382, %v583
        %v639 = vadd.f32 %v383, %v585
        %v640 = vadd.f32 %v384, %v587
        %v641 = vadd.f32 %v385, %v589
        %v642 = vadd.f32 %v386, %v591
        %v643 = vadd.f32 %v387, %v593
        %v644 = vadd.f32 %v388, %v595
        %v645 = vadd.f32 %v389, %v597
        %v646 = vadd.f32 %v390, %v599
        %v647 = vadd.f32 %v391, %v601
        %v648 = vadd.f32 %v392, %v603
        %v649 = vadd.f32 %v393, %v605
        %v650 = vadd.f32 %v394, %v607
        %v651 = vadd.f32 %v395, %v609
        %v652 = vadd.f32 %v396, %v611
        %v653 = vadd.f32 %v397, %v613
        %v654 = vadd.f32 %v398, %v615
        %v655 = vadd.f32 %v399, %v617
        %v656 = vadd.f32 %v400, %v619
        %v657 = vadd.f32 %v401, %v621
        %v658 = vadd.f32 %v402, %v623
        %v659 = vadd.f32 %v403, %v625
        %v660 = vadd.f32 %v404, %v627
        %v661 = vadd.f32 %v405, %v629
        %v662 = vld [vmem:[%s2] sm:$0x1]
        %v664 = vlaneseq
        %v665 = vshrl.u32 %v664, 7
        %v666 = vsub.s32 0, %v665
        %v667 = vrot.slane %v662, %v666
        %v669 = vmul.f32 %v667, %v340
        %v670 = vmul.f32 %v667, %v341
        %v671 = vmul.f32 %v667, %v342
        %v672 = vmul.f32 %v667, %v343
        %v673 = vmul.f32 %v667, %v344
        %v674 = vmul.f32 %v667, %v345
        %v675 = vmul.f32 %v667, %v346
        %v676 = vmul.f32 %v667, %v347
        %v677 = vmul.f32 %v667, %v348
        %v678 = vmul.f32 %v667, %v349
        %v679 = vmul.f32 %v667, %v350
        %v680 = vmul.f32 %v667, %v351
        %v681 = vmul.f32 %v667, %v352
        %v682 = vmul.f32 %v667, %v353
        %v683 = vmul.f32 %v667, %v354
        %v684 = vmul.f32 %v667, %v355
        %v685 = vmul.f32 %v667, %v356
        %v686 = vmul.f32 %v667, %v357
        %v687 = vmul.f32 %v667, %v358
        %v688 = vmul.f32 %v667, %v359
        %v689 = vmul.f32 %v667, %v360
        %v690 = vmul.f32 %v667, %v361
        %v691 = vmul.f32 %v667, %v362
        %v692 = vmul.f32 %v667, %v363
        %v693 = vmul.f32 %v667, %v364
        %v694 = vmul.f32 %v667, %v365
        %v695 = vmul.f32 %v667, %v366
        %v696 = vmul.f32 %v667, %v367
        %v697 = vmul.f32 %v667, %v368
        %v698 = vmul.f32 %v667, %v369
        %v699 = vmul.f32 %v667, %v370
        %v700 = vmul.f32 %v667, %v371
        %v701 = vld [vmem:[%s3] sm:$0x1]
        %v703 = vlaneseq
        %v704 = vshrl.u32 %v703, 7
        %v705 = vsub.s32 0, %v704
        %v706 = vrot.slane %v701, %v705
        %v708 = vsub.f32 %v669, %v706
        %v709 = vsub.f32 %v670, %v706
        %v710 = vsub.f32 %v671, %v706
        %v711 = vsub.f32 %v672, %v706
        %v712 = vsub.f32 %v673, %v706
        %v713 = vsub.f32 %v674, %v706
        %v714 = vsub.f32 %v675, %v706
        %v715 = vsub.f32 %v676, %v706
        %v716 = vsub.f32 %v677, %v706
        %v717 = vsub.f32 %v678, %v706
        %v718 = vsub.f32 %v679, %v706
        %v719 = vsub.f32 %v680, %v706
        %v720 = vsub.f32 %v681, %v706
        %v721 = vsub.f32 %v682, %v706
        %v722 = vsub.f32 %v683, %v706
        %v723 = vsub.f32 %v684, %v706
        %v724 = vsub.f32 %v685, %v706
        %v725 = vsub.f32 %v686, %v706
        %v726 = vsub.f32 %v687, %v706
        %v727 = vsub.f32 %v688, %v706
        %v728 = vsub.f32 %v689, %v706
        %v729 = vsub.f32 %v690, %v706
        %v730 = vsub.f32 %v691, %v706
        %v731 = vsub.f32 %v692, %v706
        %v732 = vsub.f32 %v693, %v706
        %v733 = vsub.f32 %v694, %v706
        %v734 = vsub.f32 %v695, %v706
        %v735 = vsub.f32 %v696, %v706
        %v736 = vsub.f32 %v697, %v706
        %v737 = vsub.f32 %v698, %v706
        %v738 = vsub.f32 %v699, %v706
        %v739 = vsub.f32 %v700, %v706
        %v740 = vld [vmem:[%s1] sm:$0x1]
        %v742 = vlaneseq
        %v743 = vshrl.u32 %v742, 7
        %v744 = vsub.s32 0, %v743
        %v745 = vrot.slane %v740, %v744
        %v747 = vmul.f32 %v745, %v340
        %v748 = vmul.f32 %v745, %v341
        %v749 = vmul.f32 %v745, %v342
        %v750 = vmul.f32 %v745, %v343
        %v751 = vmul.f32 %v745, %v344
        %v752 = vmul.f32 %v745, %v345
        %v753 = vmul.f32 %v745, %v346
        %v754 = vmul.f32 %v745, %v347
        %v755 = vmul.f32 %v745, %v348
        %v756 = vmul.f32 %v745, %v349
        %v757 = vmul.f32 %v745, %v350
        %v758 = vmul.f32 %v745, %v351
        %v759 = vmul.f32 %v745, %v352
        %v760 = vmul.f32 %v745, %v353
        %v761 = vmul.f32 %v745, %v354
        %v762 = vmul.f32 %v745, %v355
        %v763 = vmul.f32 %v745, %v356
        %v764 = vmul.f32 %v745, %v357
        %v765 = vmul.f32 %v745, %v358
        %v766 = vmul.f32 %v745, %v359
        %v767 = vmul.f32 %v745, %v360
        %v768 = vmul.f32 %v745, %v361
        %v769 = vmul.f32 %v745, %v362
        %v770 = vmul.f32 %v745, %v363
        %v771 = vmul.f32 %v745, %v364
        %v772 = vmul.f32 %v745, %v365
        %v773 = vmul.f32 %v745, %v366
        %v774 = vmul.f32 %v745, %v367
        %v775 = vmul.f32 %v745, %v368
        %v776 = vmul.f32 %v745, %v369
        %v777 = vmul.f32 %v745, %v370
        %v778 = vmul.f32 %v745, %v371
        %v779 = vsub.f32 %v747, %v630
        %v780 = vsub.f32 %v748, %v631
        %v781 = vsub.f32 %v749, %v632
        %v782 = vsub.f32 %v750, %v633
        %v783 = vsub.f32 %v751, %v634
        %v784 = vsub.f32 %v752, %v635
        %v785 = vsub.f32 %v753, %v636
        %v786 = vsub.f32 %v754, %v637
        %v787 = vsub.f32 %v755, %v638
        %v788 = vsub.f32 %v756, %v639
        %v789 = vsub.f32 %v757, %v640
        %v790 = vsub.f32 %v758, %v641
        %v791 = vsub.f32 %v759, %v642
        %v792 = vsub.f32 %v760, %v643
        %v793 = vsub.f32 %v761, %v644
        %v794 = vsub.f32 %v762, %v645
        %v795 = vsub.f32 %v763, %v646
        %v796 = vsub.f32 %v764, %v647
        %v797 = vsub.f32 %v765, %v648
        %v798 = vsub.f32 %v766, %v649
        %v799 = vsub.f32 %v767, %v650
        %v800 = vsub.f32 %v768, %v651
        %v801 = vsub.f32 %v769, %v652
        %v802 = vsub.f32 %v770, %v653
        %v803 = vsub.f32 %v771, %v654
        %v804 = vsub.f32 %v772, %v655
        %v805 = vsub.f32 %v773, %v656
        %v806 = vsub.f32 %v774, %v657
        %v807 = vsub.f32 %v775, %v658
        %v808 = vsub.f32 %v776, %v659
        %v809 = vsub.f32 %v777, %v660
        %v810 = vsub.f32 %v778, %v661
        %v811 = vmul.f32 %v708, %v708
        %v812 = vmul.f32 %v709, %v709
        %v813 = vmul.f32 %v710, %v710
        %v814 = vmul.f32 %v711, %v711
        %v815 = vmul.f32 %v712, %v712
        %v816 = vmul.f32 %v713, %v713
        %v817 = vmul.f32 %v714, %v714
        %v818 = vmul.f32 %v715, %v715
        %v819 = vmul.f32 %v716, %v716
        %v820 = vmul.f32 %v717, %v717
        %v821 = vmul.f32 %v718, %v718
        %v822 = vmul.f32 %v719, %v719
        %v823 = vmul.f32 %v720, %v720
        %v824 = vmul.f32 %v721, %v721
        %v825 = vmul.f32 %v722, %v722
        %v826 = vmul.f32 %v723, %v723
        %v827 = vmul.f32 %v724, %v724
        %v828 = vmul.f32 %v725, %v725
        %v829 = vmul.f32 %v726, %v726
        %v830 = vmul.f32 %v727, %v727
        %v831 = vmul.f32 %v728, %v728
        %v832 = vmul.f32 %v729, %v729
        %v833 = vmul.f32 %v730, %v730
        %v834 = vmul.f32 %v731, %v731
        %v835 = vmul.f32 %v732, %v732
        %v836 = vmul.f32 %v733, %v733
        %v837 = vmul.f32 %v734, %v734
        %v838 = vmul.f32 %v735, %v735
        %v839 = vmul.f32 %v736, %v736
        %v840 = vmul.f32 %v737, %v737
        %v841 = vmul.f32 %v738, %v738
        %v842 = vmul.f32 %v739, %v739
        %v843 = vstv %s372
        %v844 = vmul.f32 %v843, %v811
        %v845 = vmul.f32 %v843, %v812
        %v846 = vmul.f32 %v843, %v813
        %v847 = vmul.f32 %v843, %v814
        %v848 = vmul.f32 %v843, %v815
        %v849 = vmul.f32 %v843, %v816
        %v850 = vmul.f32 %v843, %v817
        %v851 = vmul.f32 %v843, %v818
        %v852 = vmul.f32 %v843, %v819
        %v853 = vmul.f32 %v843, %v820
        %v854 = vmul.f32 %v843, %v821
        %v855 = vmul.f32 %v843, %v822
        %v856 = vmul.f32 %v843, %v823
        %v857 = vmul.f32 %v843, %v824
        %v858 = vmul.f32 %v843, %v825
        %v859 = vmul.f32 %v843, %v826
        %v860 = vmul.f32 %v843, %v827
        %v861 = vmul.f32 %v843, %v828
        %v862 = vmul.f32 %v843, %v829
        %v863 = vmul.f32 %v843, %v830
        %v864 = vmul.f32 %v843, %v831
        %v865 = vmul.f32 %v843, %v832
        %v866 = vmul.f32 %v843, %v833
        %v867 = vmul.f32 %v843, %v834
        %v868 = vmul.f32 %v843, %v835
        %v869 = vmul.f32 %v843, %v836
        %v870 = vmul.f32 %v843, %v837
        %v871 = vmul.f32 %v843, %v838
        %v872 = vmul.f32 %v843, %v839
        %v873 = vmul.f32 %v843, %v840
        %v874 = vmul.f32 %v843, %v841
        %v875 = vmul.f32 %v843, %v842
        %v876 = vsub.f32 %v779, %v844
        %v877 = vsub.f32 %v780, %v845
        %v878 = vsub.f32 %v781, %v846
        %v879 = vsub.f32 %v782, %v847
        %v880 = vsub.f32 %v783, %v848
        %v881 = vsub.f32 %v784, %v849
        %v882 = vsub.f32 %v785, %v850
        %v883 = vsub.f32 %v786, %v851
        %v884 = vsub.f32 %v787, %v852
        %v885 = vsub.f32 %v788, %v853
        %v886 = vsub.f32 %v789, %v854
        %v887 = vsub.f32 %v790, %v855
        %v888 = vsub.f32 %v791, %v856
        %v889 = vsub.f32 %v792, %v857
        %v890 = vsub.f32 %v793, %v858
        %v891 = vsub.f32 %v794, %v859
        %v892 = vsub.f32 %v795, %v860
        %v893 = vsub.f32 %v796, %v861
        %v894 = vsub.f32 %v797, %v862
        %v895 = vsub.f32 %v798, %v863
        %v896 = vsub.f32 %v799, %v864
        %v897 = vsub.f32 %v800, %v865
        %v898 = vsub.f32 %v801, %v866
        %v899 = vsub.f32 %v802, %v867
        %v900 = vsub.f32 %v803, %v868
        %v901 = vsub.f32 %v804, %v869
        %v902 = vsub.f32 %v805, %v870
        %v903 = vsub.f32 %v806, %v871
        %v904 = vsub.f32 %v807, %v872
        %v905 = vsub.f32 %v808, %v873
        %v906 = vsub.f32 %v809, %v874
        %v907 = vsub.f32 %v810, %v875
        %v908 = vld [vmem:[%s4] sm:$0x1]
        %v910 = vlaneseq
        %v911 = vshrl.u32 %v910, 7
        %v912 = vsub.s32 0, %v911
        %v913 = vrot.slane %v908, %v912
        %947 = vrot.lane.b32.xlu0 %v340, 127
        %v948 = vpop.permute.xlu0 %947
        %949 = vrot.lane.b32.xlu0 %v341, 127
        %v950 = vpop.permute.xlu0 %949
        %951 = vrot.lane.b32.xlu0 %v342, 127
        %v952 = vpop.permute.xlu0 %951
        %953 = vrot.lane.b32.xlu0 %v343, 127
        %v954 = vpop.permute.xlu0 %953
        %955 = vrot.lane.b32.xlu0 %v344, 127
        %v956 = vpop.permute.xlu0 %955
        %957 = vrot.lane.b32.xlu0 %v345, 127
        %v958 = vpop.permute.xlu0 %957
        %959 = vrot.lane.b32.xlu0 %v346, 127
        %v960 = vpop.permute.xlu0 %959
        %961 = vrot.lane.b32.xlu0 %v347, 127
        %v962 = vpop.permute.xlu0 %961
        %963 = vrot.lane.b32.xlu0 %v348, 127
        %v964 = vpop.permute.xlu0 %963
        %965 = vrot.lane.b32.xlu0 %v349, 127
        %v966 = vpop.permute.xlu0 %965
        %967 = vrot.lane.b32.xlu0 %v350, 127
        %v968 = vpop.permute.xlu0 %967
        %969 = vrot.lane.b32.xlu0 %v351, 127
        %v970 = vpop.permute.xlu0 %969
        %971 = vrot.lane.b32.xlu0 %v352, 127
        %v972 = vpop.permute.xlu0 %971
        %973 = vrot.lane.b32.xlu0 %v353, 127
        %v974 = vpop.permute.xlu0 %973
        %975 = vrot.lane.b32.xlu0 %v354, 127
        %v976 = vpop.permute.xlu0 %975
        %977 = vrot.lane.b32.xlu0 %v355, 127
        %v978 = vpop.permute.xlu0 %977
        %979 = vrot.lane.b32.xlu0 %v356, 127
        %v980 = vpop.permute.xlu0 %979
        %981 = vrot.lane.b32.xlu0 %v357, 127
        %v982 = vpop.permute.xlu0 %981
        %983 = vrot.lane.b32.xlu0 %v358, 127
        %v984 = vpop.permute.xlu0 %983
        %985 = vrot.lane.b32.xlu0 %v359, 127
        %v986 = vpop.permute.xlu0 %985
        %987 = vrot.lane.b32.xlu0 %v360, 127
        %v988 = vpop.permute.xlu0 %987
        %989 = vrot.lane.b32.xlu0 %v361, 127
        %v990 = vpop.permute.xlu0 %989
        %991 = vrot.lane.b32.xlu0 %v362, 127
        %v992 = vpop.permute.xlu0 %991
        %993 = vrot.lane.b32.xlu0 %v363, 127
        %v994 = vpop.permute.xlu0 %993
        %995 = vrot.lane.b32.xlu0 %v364, 127
        %v996 = vpop.permute.xlu0 %995
        %997 = vrot.lane.b32.xlu0 %v365, 127
        %v998 = vpop.permute.xlu0 %997
        %999 = vrot.lane.b32.xlu0 %v366, 127
        %v1000 = vpop.permute.xlu0 %999
        %1001 = vrot.lane.b32.xlu0 %v367, 127
        %v1002 = vpop.permute.xlu0 %1001
        %1003 = vrot.lane.b32.xlu0 %v368, 127
        %v1004 = vpop.permute.xlu0 %1003
        %1005 = vrot.lane.b32.xlu0 %v369, 127
        %v1006 = vpop.permute.xlu0 %1005
        %1007 = vrot.lane.b32.xlu0 %v370, 127
        %v1008 = vpop.permute.xlu0 %1007
        %1009 = vrot.lane.b32.xlu0 %v371, 127
        %v1010 = vpop.permute.xlu0 %1009
        %v1043 = vmul.f32 %v913, %v948
        %v1044 = vmul.f32 %v913, %v950
        %v1045 = vmul.f32 %v913, %v952
        %v1046 = vmul.f32 %v913, %v954
        %v1047 = vmul.f32 %v913, %v956
        %v1048 = vmul.f32 %v913, %v958
        %v1049 = vmul.f32 %v913, %v960
        %v1050 = vmul.f32 %v913, %v962
        %v1051 = vmul.f32 %v913, %v964
        %v1052 = vmul.f32 %v913, %v966
        %v1053 = vmul.f32 %v913, %v968
        %v1054 = vmul.f32 %v913, %v970
        %v1055 = vmul.f32 %v913, %v972
        %v1056 = vmul.f32 %v913, %v974
        %v1057 = vmul.f32 %v913, %v976
        %v1058 = vmul.f32 %v913, %v978
        %v1059 = vmul.f32 %v913, %v980
        %v1060 = vmul.f32 %v913, %v982
        %v1061 = vmul.f32 %v913, %v984
        %v1062 = vmul.f32 %v913, %v986
        %v1063 = vmul.f32 %v913, %v988
        %v1064 = vmul.f32 %v913, %v990
        %v1065 = vmul.f32 %v913, %v992
        %v1066 = vmul.f32 %v913, %v994
        %v1067 = vmul.f32 %v913, %v996
        %v1068 = vmul.f32 %v913, %v998
        %v1069 = vmul.f32 %v913, %v1000
        %v1070 = vmul.f32 %v913, %v1002
        %v1071 = vmul.f32 %v913, %v1004
        %v1072 = vmul.f32 %v913, %v1006
        %v1073 = vmul.f32 %v913, %v1008
        %v1074 = vmul.f32 %v913, %v1010
        %v1075 = vld [vmem:[%s5] sm:$0x1]
        %v1077 = vlaneseq
        %v1078 = vshrl.u32 %v1077, 7
        %v1079 = vsub.s32 0, %v1078
        %v1080 = vrot.slane %v1075, %v1079
        %v1082 = vmul.f32 %v1080, %v340
        %v1083 = vmul.f32 %v1080, %v341
        %v1084 = vmul.f32 %v1080, %v342
        %v1085 = vmul.f32 %v1080, %v343
        %v1086 = vmul.f32 %v1080, %v344
        %v1087 = vmul.f32 %v1080, %v345
        %v1088 = vmul.f32 %v1080, %v346
        %v1089 = vmul.f32 %v1080, %v347
        %v1090 = vmul.f32 %v1080, %v348
        %v1091 = vmul.f32 %v1080, %v349
        %v1092 = vmul.f32 %v1080, %v350
        %v1093 = vmul.f32 %v1080, %v351
        %v1094 = vmul.f32 %v1080, %v352
        %v1095 = vmul.f32 %v1080, %v353
        %v1096 = vmul.f32 %v1080, %v354
        %v1097 = vmul.f32 %v1080, %v355
        %v1098 = vmul.f32 %v1080, %v356
        %v1099 = vmul.f32 %v1080, %v357
        %v1100 = vmul.f32 %v1080, %v358
        %v1101 = vmul.f32 %v1080, %v359
        %v1102 = vmul.f32 %v1080, %v360
        %v1103 = vmul.f32 %v1080, %v361
        %v1104 = vmul.f32 %v1080, %v362
        %v1105 = vmul.f32 %v1080, %v363
        %v1106 = vmul.f32 %v1080, %v364
        %v1107 = vmul.f32 %v1080, %v365
        %v1108 = vmul.f32 %v1080, %v366
        %v1109 = vmul.f32 %v1080, %v367
        %v1110 = vmul.f32 %v1080, %v368
        %v1111 = vmul.f32 %v1080, %v369
        %v1112 = vmul.f32 %v1080, %v370
        %v1113 = vmul.f32 %v1080, %v371
        %v1114 = vadd.f32 %v1043, %v1082
        %v1115 = vadd.f32 %v1044, %v1083
        %v1116 = vadd.f32 %v1045, %v1084
        %v1117 = vadd.f32 %v1046, %v1085
        %v1118 = vadd.f32 %v1047, %v1086
        %v1119 = vadd.f32 %v1048, %v1087
        %v1120 = vadd.f32 %v1049, %v1088
        %v1121 = vadd.f32 %v1050, %v1089
        %v1122 = vadd.f32 %v1051, %v1090
        %v1123 = vadd.f32 %v1052, %v1091
        %v1124 = vadd.f32 %v1053, %v1092
        %v1125 = vadd.f32 %v1054, %v1093
        %v1126 = vadd.f32 %v1055, %v1094
        %v1127 = vadd.f32 %v1056, %v1095
        %v1128 = vadd.f32 %v1057, %v1096
        %v1129 = vadd.f32 %v1058, %v1097
        %v1130 = vadd.f32 %v1059, %v1098
        %v1131 = vadd.f32 %v1060, %v1099
        %v1132 = vadd.f32 %v1061, %v1100
        %v1133 = vadd.f32 %v1062, %v1101
        %v1134 = vadd.f32 %v1063, %v1102
        %v1135 = vadd.f32 %v1064, %v1103
        %v1136 = vadd.f32 %v1065, %v1104
        %v1137 = vadd.f32 %v1066, %v1105
        %v1138 = vadd.f32 %v1067, %v1106
        %v1139 = vadd.f32 %v1068, %v1107
        %v1140 = vadd.f32 %v1069, %v1108
        %v1141 = vadd.f32 %v1070, %v1109
        %v1142 = vadd.f32 %v1071, %v1110
        %v1143 = vadd.f32 %v1072, %v1111
        %v1144 = vadd.f32 %v1073, %v1112
        %v1145 = vadd.f32 %v1074, %v1113
        %v1146 = vld [vmem:[%s6] sm:$0x1]
        %v1148 = vlaneseq
        %v1149 = vshrl.u32 %v1148, 7
        %v1150 = vsub.s32 0, %v1149
        %v1151 = vrot.slane %v1146, %v1150
        %v1153 = vsub.f32 %v1114, %v1151
        %v1154 = vsub.f32 %v1115, %v1151
        %v1155 = vsub.f32 %v1116, %v1151
        %v1156 = vsub.f32 %v1117, %v1151
        %v1157 = vsub.f32 %v1118, %v1151
        %v1158 = vsub.f32 %v1119, %v1151
        %v1159 = vsub.f32 %v1120, %v1151
        %v1160 = vsub.f32 %v1121, %v1151
        %v1161 = vsub.f32 %v1122, %v1151
        %v1162 = vsub.f32 %v1123, %v1151
        %v1163 = vsub.f32 %v1124, %v1151
        %v1164 = vsub.f32 %v1125, %v1151
        %v1165 = vsub.f32 %v1126, %v1151
        %v1166 = vsub.f32 %v1127, %v1151
        %v1167 = vsub.f32 %v1128, %v1151
        %v1168 = vsub.f32 %v1129, %v1151
        %v1169 = vsub.f32 %v1130, %v1151
        %v1170 = vsub.f32 %v1131, %v1151
        %v1171 = vsub.f32 %v1132, %v1151
        %v1172 = vsub.f32 %v1133, %v1151
        %v1173 = vsub.f32 %v1134, %v1151
        %v1174 = vsub.f32 %v1135, %v1151
        %v1175 = vsub.f32 %v1136, %v1151
        %v1176 = vsub.f32 %v1137, %v1151
        %v1177 = vsub.f32 %v1138, %v1151
        %v1178 = vsub.f32 %v1139, %v1151
        %v1179 = vsub.f32 %v1140, %v1151
        %v1180 = vsub.f32 %v1141, %v1151
        %v1181 = vsub.f32 %v1142, %v1151
        %v1182 = vsub.f32 %v1143, %v1151
        %v1183 = vsub.f32 %v1144, %v1151
        %v1184 = vsub.f32 %v1145, %v1151
        %1185 = vadd.xlane.f32.xlu0 %v876
        %v1186 = vpop.xlane.xlu0 %1185
        %1187 = vadd.xlane.f32.xlu0 %v877
        %v1188 = vpop.xlane.xlu0 %1187
        %1189 = vadd.xlane.f32.xlu0 %v878
        %v1190 = vpop.xlane.xlu0 %1189
        %1191 = vadd.xlane.f32.xlu0 %v879
        %v1192 = vpop.xlane.xlu0 %1191
        %1193 = vadd.xlane.f32.xlu0 %v880
        %v1194 = vpop.xlane.xlu0 %1193
        %1195 = vadd.xlane.f32.xlu0 %v881
        %v1196 = vpop.xlane.xlu0 %1195
        %1197 = vadd.xlane.f32.xlu0 %v882
        %v1198 = vpop.xlane.xlu0 %1197
        %1199 = vadd.xlane.f32.xlu0 %v883
        %v1200 = vpop.xlane.xlu0 %1199
        %1201 = vadd.xlane.f32.xlu0 %v884
        %v1202 = vpop.xlane.xlu0 %1201
        %1203 = vadd.xlane.f32.xlu0 %v885
        %v1204 = vpop.xlane.xlu0 %1203
        %1205 = vadd.xlane.f32.xlu0 %v886
        %v1206 = vpop.xlane.xlu0 %1205
        %1207 = vadd.xlane.f32.xlu0 %v887
        %v1208 = vpop.xlane.xlu0 %1207
        %1209 = vadd.xlane.f32.xlu0 %v888
        %v1210 = vpop.xlane.xlu0 %1209
        %1211 = vadd.xlane.f32.xlu0 %v889
        %v1212 = vpop.xlane.xlu0 %1211
        %1213 = vadd.xlane.f32.xlu0 %v890
        %v1214 = vpop.xlane.xlu0 %1213
        %1215 = vadd.xlane.f32.xlu0 %v891
        %v1216 = vpop.xlane.xlu0 %1215
        %1217 = vadd.xlane.f32.xlu0 %v892
        %v1218 = vpop.xlane.xlu0 %1217
        %1219 = vadd.xlane.f32.xlu0 %v893
        %v1220 = vpop.xlane.xlu0 %1219
        %1221 = vadd.xlane.f32.xlu0 %v894
        %v1222 = vpop.xlane.xlu0 %1221
        %1223 = vadd.xlane.f32.xlu0 %v895
        %v1224 = vpop.xlane.xlu0 %1223
        %1225 = vadd.xlane.f32.xlu0 %v896
        %v1226 = vpop.xlane.xlu0 %1225
        %1227 = vadd.xlane.f32.xlu0 %v897
        %v1228 = vpop.xlane.xlu0 %1227
        %1229 = vadd.xlane.f32.xlu0 %v898
        %v1230 = vpop.xlane.xlu0 %1229
        %1231 = vadd.xlane.f32.xlu0 %v899
        %v1232 = vpop.xlane.xlu0 %1231
        %1233 = vadd.xlane.f32.xlu0 %v900
        %v1234 = vpop.xlane.xlu0 %1233
        %1235 = vadd.xlane.f32.xlu0 %v901
        %v1236 = vpop.xlane.xlu0 %1235
        %1237 = vadd.xlane.f32.xlu0 %v902
        %v1238 = vpop.xlane.xlu0 %1237
        %1239 = vadd.xlane.f32.xlu0 %v903
        %v1240 = vpop.xlane.xlu0 %1239
        %1241 = vadd.xlane.f32.xlu0 %v904
        %v1242 = vpop.xlane.xlu0 %1241
        %1243 = vadd.xlane.f32.xlu0 %v905
        %v1244 = vpop.xlane.xlu0 %1243
        %1245 = vadd.xlane.f32.xlu0 %v906
        %v1246 = vpop.xlane.xlu0 %1245
        %1247 = vadd.xlane.f32.xlu0 %v907
        %v1248 = vpop.xlane.xlu0 %1247
        %v1249 = vmul.f32 %v1153, %v1153
        %v1250 = vmul.f32 %v1154, %v1154
        %v1251 = vmul.f32 %v1155, %v1155
        %v1252 = vmul.f32 %v1156, %v1156
        %v1253 = vmul.f32 %v1157, %v1157
        %v1254 = vmul.f32 %v1158, %v1158
        %v1255 = vmul.f32 %v1159, %v1159
        %v1256 = vmul.f32 %v1160, %v1160
        %v1257 = vmul.f32 %v1161, %v1161
        %v1258 = vmul.f32 %v1162, %v1162
        %v1259 = vmul.f32 %v1163, %v1163
        %v1260 = vmul.f32 %v1164, %v1164
        %v1261 = vmul.f32 %v1165, %v1165
        %v1262 = vmul.f32 %v1166, %v1166
        %v1263 = vmul.f32 %v1167, %v1167
        %v1264 = vmul.f32 %v1168, %v1168
        %v1265 = vmul.f32 %v1169, %v1169
        %v1266 = vmul.f32 %v1170, %v1170
        %v1267 = vmul.f32 %v1171, %v1171
        %v1268 = vmul.f32 %v1172, %v1172
        %v1269 = vmul.f32 %v1173, %v1173
        %v1270 = vmul.f32 %v1174, %v1174
        %v1271 = vmul.f32 %v1175, %v1175
        %v1272 = vmul.f32 %v1176, %v1176
        %v1273 = vmul.f32 %v1177, %v1177
        %v1274 = vmul.f32 %v1178, %v1178
        %v1275 = vmul.f32 %v1179, %v1179
        %v1276 = vmul.f32 %v1180, %v1180
        %v1277 = vmul.f32 %v1181, %v1181
        %v1278 = vmul.f32 %v1182, %v1182
        %v1279 = vmul.f32 %v1183, %v1183
        %v1280 = vmul.f32 %v1184, %v1184
        %vm1281 = vcmask 1039360
        %v1282 = vsel %vm1281, %v1249, 0.0
        %1283 = vadd.xlane.f32.xlu0 %v1282
        %v1284 = vpop.xlane.xlu0 %1283
        %v1285 = vsel %vm1281, %v1250, 0.0
        %1286 = vadd.xlane.f32.xlu0 %v1285
        %v1287 = vpop.xlane.xlu0 %1286
        %v1288 = vsel %vm1281, %v1251, 0.0
        %1289 = vadd.xlane.f32.xlu0 %v1288
        %v1290 = vpop.xlane.xlu0 %1289
        %v1291 = vsel %vm1281, %v1252, 0.0
        %1292 = vadd.xlane.f32.xlu0 %v1291
        %v1293 = vpop.xlane.xlu0 %1292
        %v1294 = vsel %vm1281, %v1253, 0.0
        %1295 = vadd.xlane.f32.xlu0 %v1294
        %v1296 = vpop.xlane.xlu0 %1295
        %v1297 = vsel %vm1281, %v1254, 0.0
        %1298 = vadd.xlane.f32.xlu0 %v1297
        %v1299 = vpop.xlane.xlu0 %1298
        %v1300 = vsel %vm1281, %v1255, 0.0
        %1301 = vadd.xlane.f32.xlu0 %v1300
        %v1302 = vpop.xlane.xlu0 %1301
        %v1303 = vsel %vm1281, %v1256, 0.0
        %1304 = vadd.xlane.f32.xlu0 %v1303
        %v1305 = vpop.xlane.xlu0 %1304
        %v1306 = vsel %vm1281, %v1257, 0.0
        %1307 = vadd.xlane.f32.xlu0 %v1306
        %v1308 = vpop.xlane.xlu0 %1307
        %v1309 = vsel %vm1281, %v1258, 0.0
        %1310 = vadd.xlane.f32.xlu0 %v1309
        %v1311 = vpop.xlane.xlu0 %1310
        %v1312 = vsel %vm1281, %v1259, 0.0
        %1313 = vadd.xlane.f32.xlu0 %v1312
        %v1314 = vpop.xlane.xlu0 %1313
        %v1315 = vsel %vm1281, %v1260, 0.0
        %1316 = vadd.xlane.f32.xlu0 %v1315
        %v1317 = vpop.xlane.xlu0 %1316
        %v1318 = vsel %vm1281, %v1261, 0.0
        %1319 = vadd.xlane.f32.xlu0 %v1318
        %v1320 = vpop.xlane.xlu0 %1319
        %v1321 = vsel %vm1281, %v1262, 0.0
        %1322 = vadd.xlane.f32.xlu0 %v1321
        %v1323 = vpop.xlane.xlu0 %1322
        %v1324 = vsel %vm1281, %v1263, 0.0
        %1325 = vadd.xlane.f32.xlu0 %v1324
        %v1326 = vpop.xlane.xlu0 %1325
        %v1327 = vsel %vm1281, %v1264, 0.0
        %1328 = vadd.xlane.f32.xlu0 %v1327
        %v1329 = vpop.xlane.xlu0 %1328
        %v1330 = vsel %vm1281, %v1265, 0.0
        %1331 = vadd.xlane.f32.xlu0 %v1330
        %v1332 = vpop.xlane.xlu0 %1331
        %v1333 = vsel %vm1281, %v1266, 0.0
        %1334 = vadd.xlane.f32.xlu0 %v1333
        %v1335 = vpop.xlane.xlu0 %1334
        %v1336 = vsel %vm1281, %v1267, 0.0
        %1337 = vadd.xlane.f32.xlu0 %v1336
        %v1338 = vpop.xlane.xlu0 %1337
        %v1339 = vsel %vm1281, %v1268, 0.0
        %1340 = vadd.xlane.f32.xlu0 %v1339
        %v1341 = vpop.xlane.xlu0 %1340
        %v1342 = vsel %vm1281, %v1269, 0.0
        %1343 = vadd.xlane.f32.xlu0 %v1342
        %v1344 = vpop.xlane.xlu0 %1343
        %v1345 = vsel %vm1281, %v1270, 0.0
        %1346 = vadd.xlane.f32.xlu0 %v1345
        %v1347 = vpop.xlane.xlu0 %1346
        %v1348 = vsel %vm1281, %v1271, 0.0
        %1349 = vadd.xlane.f32.xlu0 %v1348
        %v1350 = vpop.xlane.xlu0 %1349
        %v1351 = vsel %vm1281, %v1272, 0.0
        %1352 = vadd.xlane.f32.xlu0 %v1351
        %v1353 = vpop.xlane.xlu0 %1352
        %v1354 = vsel %vm1281, %v1273, 0.0
        %1355 = vadd.xlane.f32.xlu0 %v1354
        %v1356 = vpop.xlane.xlu0 %1355
        %v1357 = vsel %vm1281, %v1274, 0.0
        %1358 = vadd.xlane.f32.xlu0 %v1357
        %v1359 = vpop.xlane.xlu0 %1358
        %v1360 = vsel %vm1281, %v1275, 0.0
        %1361 = vadd.xlane.f32.xlu0 %v1360
        %v1362 = vpop.xlane.xlu0 %1361
        %v1363 = vsel %vm1281, %v1276, 0.0
        %1364 = vadd.xlane.f32.xlu0 %v1363
        %v1365 = vpop.xlane.xlu0 %1364
        %v1366 = vsel %vm1281, %v1277, 0.0
        %1367 = vadd.xlane.f32.xlu0 %v1366
        %v1368 = vpop.xlane.xlu0 %1367
        %v1369 = vsel %vm1281, %v1278, 0.0
        %1370 = vadd.xlane.f32.xlu0 %v1369
        %v1371 = vpop.xlane.xlu0 %1370
        %v1372 = vsel %vm1281, %v1279, 0.0
        %1373 = vadd.xlane.f32.xlu0 %v1372
        %v1374 = vpop.xlane.xlu0 %1373
        %v1375 = vsel %vm1281, %v1280, 0.0
        %1376 = vadd.xlane.f32.xlu0 %v1375
        %v1377 = vpop.xlane.xlu0 %1376
        %v1378 = vmul.f32 %v843, %v1284
        %v1379 = vmul.f32 %v843, %v1287
        %v1380 = vmul.f32 %v843, %v1290
        %v1381 = vmul.f32 %v843, %v1293
        %v1382 = vmul.f32 %v843, %v1296
        %v1383 = vmul.f32 %v843, %v1299
        %v1384 = vmul.f32 %v843, %v1302
        %v1385 = vmul.f32 %v843, %v1305
        %v1386 = vmul.f32 %v843, %v1308
        %v1387 = vmul.f32 %v843, %v1311
        %v1388 = vmul.f32 %v843, %v1314
        %v1389 = vmul.f32 %v843, %v1317
        %v1390 = vmul.f32 %v843, %v1320
        %v1391 = vmul.f32 %v843, %v1323
        %v1392 = vmul.f32 %v843, %v1326
        %v1393 = vmul.f32 %v843, %v1329
        %v1394 = vmul.f32 %v843, %v1332
        %v1395 = vmul.f32 %v843, %v1335
        %v1396 = vmul.f32 %v843, %v1338
        %v1397 = vmul.f32 %v843, %v1341
        %v1398 = vmul.f32 %v843, %v1344
        %v1399 = vmul.f32 %v843, %v1347
        %v1400 = vmul.f32 %v843, %v1350
        %v1401 = vmul.f32 %v843, %v1353
        %v1402 = vmul.f32 %v843, %v1356
        %v1403 = vmul.f32 %v843, %v1359
        %v1404 = vmul.f32 %v843, %v1362
        %v1405 = vmul.f32 %v843, %v1365
        %v1406 = vmul.f32 %v843, %v1368
        %v1407 = vmul.f32 %v843, %v1371
        %v1408 = vmul.f32 %v843, %v1374
        %v1409 = vmul.f32 %v843, %v1377
        %v1410 = vsub.f32 %v1186, %v1378
        %v1411 = vsub.f32 %v1188, %v1379
        %v1412 = vsub.f32 %v1190, %v1380
        %v1413 = vsub.f32 %v1192, %v1381
        %v1414 = vsub.f32 %v1194, %v1382
        %v1415 = vsub.f32 %v1196, %v1383
        %v1416 = vsub.f32 %v1198, %v1384
        %v1417 = vsub.f32 %v1200, %v1385
        %v1418 = vsub.f32 %v1202, %v1386
        %v1419 = vsub.f32 %v1204, %v1387
        %v1420 = vsub.f32 %v1206, %v1388
        %v1421 = vsub.f32 %v1208, %v1389
        %v1422 = vsub.f32 %v1210, %v1390
        %v1423 = vsub.f32 %v1212, %v1391
        %v1424 = vsub.f32 %v1214, %v1392
        %v1425 = vsub.f32 %v1216, %v1393
        %v1426 = vsub.f32 %v1218, %v1394
        %v1427 = vsub.f32 %v1220, %v1395
        %v1428 = vsub.f32 %v1222, %v1396
        %v1429 = vsub.f32 %v1224, %v1397
        %v1430 = vsub.f32 %v1226, %v1398
        %v1431 = vsub.f32 %v1228, %v1399
        %v1432 = vsub.f32 %v1230, %v1400
        %v1433 = vsub.f32 %v1232, %v1401
        %v1434 = vsub.f32 %v1234, %v1402
        %v1435 = vsub.f32 %v1236, %v1403
        %v1436 = vsub.f32 %v1238, %v1404
        %v1437 = vsub.f32 %v1240, %v1405
        %v1438 = vsub.f32 %v1242, %v1406
        %v1439 = vsub.f32 %v1244, %v1407
        %v1440 = vsub.f32 %v1246, %v1408
        %v1441 = vsub.f32 %v1248, %v1409
        %v1442 = vstv %s373
        %v1443 = vadd.f32 %v1410, %v1442
        %v1444 = vadd.f32 %v1411, %v1442
        %v1445 = vadd.f32 %v1412, %v1442
        %v1446 = vadd.f32 %v1413, %v1442
        %v1447 = vadd.f32 %v1414, %v1442
        %v1448 = vadd.f32 %v1415, %v1442
        %v1449 = vadd.f32 %v1416, %v1442
        %v1450 = vadd.f32 %v1417, %v1442
        %v1451 = vadd.f32 %v1418, %v1442
        %v1452 = vadd.f32 %v1419, %v1442
        %v1453 = vadd.f32 %v1420, %v1442
        %v1454 = vadd.f32 %v1421, %v1442
        %v1455 = vadd.f32 %v1422, %v1442
        %v1456 = vadd.f32 %v1423, %v1442
        %v1457 = vadd.f32 %v1424, %v1442
        %v1458 = vadd.f32 %v1425, %v1442
        %v1459 = vadd.f32 %v1426, %v1442
        %v1460 = vadd.f32 %v1427, %v1442
        %v1461 = vadd.f32 %v1428, %v1442
        %v1462 = vadd.f32 %v1429, %v1442
        %v1463 = vadd.f32 %v1430, %v1442
        %v1464 = vadd.f32 %v1431, %v1442
        %v1465 = vadd.f32 %v1432, %v1442
        %v1466 = vadd.f32 %v1433, %v1442
        %v1467 = vadd.f32 %v1434, %v1442
        %v1468 = vadd.f32 %v1435, %v1442
        %v1469 = vadd.f32 %v1436, %v1442
        %v1470 = vadd.f32 %v1437, %v1442
        %v1471 = vadd.f32 %v1438, %v1442
        %v1472 = vadd.f32 %v1439, %v1442
        %v1473 = vadd.f32 %v1440, %v1442
        %v1474 = vadd.f32 %v1441, %v1442
        %v1507 = vlaneseq
        %v1508 = vshrl.u32 %v1507, 7
        %v1509 = vsub.s32 0, %v1508
        %v1510 = vrot.slane %v1443, %v1509
        %v1511 = vlaneseq
        %v1512 = vshrl.u32 %v1511, 7
        %v1513 = vsub.s32 1, %v1512
        %v1514 = vrot.slane %v1443, %v1513
        %v1515 = vlaneseq
        %v1516 = vshrl.u32 %v1515, 7
        %v1517 = vsub.s32 2, %v1516
        %v1518 = vrot.slane %v1443, %v1517
        %v1519 = vlaneseq
        %v1520 = vshrl.u32 %v1519, 7
        %v1521 = vsub.s32 3, %v1520
        %v1522 = vrot.slane %v1443, %v1521
        %v1523 = vlaneseq
        %v1524 = vshrl.u32 %v1523, 7
        %v1525 = vsub.s32 4, %v1524
        %v1526 = vrot.slane %v1443, %v1525
        %v1527 = vlaneseq
        %v1528 = vshrl.u32 %v1527, 7
        %v1529 = vsub.s32 5, %v1528
        %v1530 = vrot.slane %v1443, %v1529
        %v1531 = vlaneseq
        %v1532 = vshrl.u32 %v1531, 7
        %v1533 = vsub.s32 6, %v1532
        %v1534 = vrot.slane %v1443, %v1533
        %v1535 = vlaneseq
        %v1536 = vshrl.u32 %v1535, 7
        %v1537 = vsub.s32 7, %v1536
        %v1538 = vrot.slane %v1443, %v1537
        %v1539 = vlaneseq
        %v1540 = vshrl.u32 %v1539, 7
        %v1541 = vsub.s32 0, %v1540
        %v1542 = vrot.slane %v1444, %v1541
        %v1543 = vlaneseq
        %v1544 = vshrl.u32 %v1543, 7
        %v1545 = vsub.s32 1, %v1544
        %v1546 = vrot.slane %v1444, %v1545
        %v1547 = vlaneseq
        %v1548 = vshrl.u32 %v1547, 7
        %v1549 = vsub.s32 2, %v1548
        %v1550 = vrot.slane %v1444, %v1549
        %v1551 = vlaneseq
        %v1552 = vshrl.u32 %v1551, 7
        %v1553 = vsub.s32 3, %v1552
        %v1554 = vrot.slane %v1444, %v1553
        %v1555 = vlaneseq
        %v1556 = vshrl.u32 %v1555, 7
        %v1557 = vsub.s32 4, %v1556
        %v1558 = vrot.slane %v1444, %v1557
        %v1559 = vlaneseq
        %v1560 = vshrl.u32 %v1559, 7
        %v1561 = vsub.s32 5, %v1560
        %v1562 = vrot.slane %v1444, %v1561
        %v1563 = vlaneseq
        %v1564 = vshrl.u32 %v1563, 7
        %v1565 = vsub.s32 6, %v1564
        %v1566 = vrot.slane %v1444, %v1565
        %v1567 = vlaneseq
        %v1568 = vshrl.u32 %v1567, 7
        %v1569 = vsub.s32 7, %v1568
        %v1570 = vrot.slane %v1444, %v1569
        %v1571 = vlaneseq
        %v1572 = vshrl.u32 %v1571, 7
        %v1573 = vsub.s32 0, %v1572
        %v1574 = vrot.slane %v1445, %v1573
        %v1575 = vlaneseq
        %v1576 = vshrl.u32 %v1575, 7
        %v1577 = vsub.s32 1, %v1576
        %v1578 = vrot.slane %v1445, %v1577
        %v1579 = vlaneseq
        %v1580 = vshrl.u32 %v1579, 7
        %v1581 = vsub.s32 2, %v1580
        %v1582 = vrot.slane %v1445, %v1581
        %v1583 = vlaneseq
        %v1584 = vshrl.u32 %v1583, 7
        %v1585 = vsub.s32 3, %v1584
        %v1586 = vrot.slane %v1445, %v1585
        %v1587 = vlaneseq
        %v1588 = vshrl.u32 %v1587, 7
        %v1589 = vsub.s32 4, %v1588
        %v1590 = vrot.slane %v1445, %v1589
        %v1591 = vlaneseq
        %v1592 = vshrl.u32 %v1591, 7
        %v1593 = vsub.s32 5, %v1592
        %v1594 = vrot.slane %v1445, %v1593
        %v1595 = vlaneseq
        %v1596 = vshrl.u32 %v1595, 7
        %v1597 = vsub.s32 6, %v1596
        %v1598 = vrot.slane %v1445, %v1597
        %v1599 = vlaneseq
        %v1600 = vshrl.u32 %v1599, 7
        %v1601 = vsub.s32 7, %v1600
        %v1602 = vrot.slane %v1445, %v1601
        %v1603 = vlaneseq
        %v1604 = vshrl.u32 %v1603, 7
        %v1605 = vsub.s32 0, %v1604
        %v1606 = vrot.slane %v1446, %v1605
        %v1607 = vlaneseq
        %v1608 = vshrl.u32 %v1607, 7
        %v1609 = vsub.s32 1, %v1608
        %v1610 = vrot.slane %v1446, %v1609
        %v1611 = vlaneseq
        %v1612 = vshrl.u32 %v1611, 7
        %v1613 = vsub.s32 2, %v1612
        %v1614 = vrot.slane %v1446, %v1613
        %v1615 = vlaneseq
        %v1616 = vshrl.u32 %v1615, 7
        %v1617 = vsub.s32 3, %v1616
        %v1618 = vrot.slane %v1446, %v1617
        %v1619 = vlaneseq
        %v1620 = vshrl.u32 %v1619, 7
        %v1621 = vsub.s32 4, %v1620
        %v1622 = vrot.slane %v1446, %v1621
        %v1623 = vlaneseq
        %v1624 = vshrl.u32 %v1623, 7
        %v1625 = vsub.s32 5, %v1624
        %v1626 = vrot.slane %v1446, %v1625
        %v1627 = vlaneseq
        %v1628 = vshrl.u32 %v1627, 7
        %v1629 = vsub.s32 6, %v1628
        %v1630 = vrot.slane %v1446, %v1629
        %v1631 = vlaneseq
        %v1632 = vshrl.u32 %v1631, 7
        %v1633 = vsub.s32 7, %v1632
        %v1634 = vrot.slane %v1446, %v1633
        %v1635 = vlaneseq
        %v1636 = vshrl.u32 %v1635, 7
        %v1637 = vsub.s32 0, %v1636
        %v1638 = vrot.slane %v1447, %v1637
        %v1639 = vlaneseq
        %v1640 = vshrl.u32 %v1639, 7
        %v1641 = vsub.s32 1, %v1640
        %v1642 = vrot.slane %v1447, %v1641
        %v1643 = vlaneseq
        %v1644 = vshrl.u32 %v1643, 7
        %v1645 = vsub.s32 2, %v1644
        %v1646 = vrot.slane %v1447, %v1645
        %v1647 = vlaneseq
        %v1648 = vshrl.u32 %v1647, 7
        %v1649 = vsub.s32 3, %v1648
        %v1650 = vrot.slane %v1447, %v1649
        %v1651 = vlaneseq
        %v1652 = vshrl.u32 %v1651, 7
        %v1653 = vsub.s32 4, %v1652
        %v1654 = vrot.slane %v1447, %v1653
        %v1655 = vlaneseq
        %v1656 = vshrl.u32 %v1655, 7
        %v1657 = vsub.s32 5, %v1656
        %v1658 = vrot.slane %v1447, %v1657
        %v1659 = vlaneseq
        %v1660 = vshrl.u32 %v1659, 7
        %v1661 = vsub.s32 6, %v1660
        %v1662 = vrot.slane %v1447, %v1661
        %v1663 = vlaneseq
        %v1664 = vshrl.u32 %v1663, 7
        %v1665 = vsub.s32 7, %v1664
        %v1666 = vrot.slane %v1447, %v1665
        %v1667 = vlaneseq
        %v1668 = vshrl.u32 %v1667, 7
        %v1669 = vsub.s32 0, %v1668
        %v1670 = vrot.slane %v1448, %v1669
        %v1671 = vlaneseq
        %v1672 = vshrl.u32 %v1671, 7
        %v1673 = vsub.s32 1, %v1672
        %v1674 = vrot.slane %v1448, %v1673
        %v1675 = vlaneseq
        %v1676 = vshrl.u32 %v1675, 7
        %v1677 = vsub.s32 2, %v1676
        %v1678 = vrot.slane %v1448, %v1677
        %v1679 = vlaneseq
        %v1680 = vshrl.u32 %v1679, 7
        %v1681 = vsub.s32 3, %v1680
        %v1682 = vrot.slane %v1448, %v1681
        %v1683 = vlaneseq
        %v1684 = vshrl.u32 %v1683, 7
        %v1685 = vsub.s32 4, %v1684
        %v1686 = vrot.slane %v1448, %v1685
        %v1687 = vlaneseq
        %v1688 = vshrl.u32 %v1687, 7
        %v1689 = vsub.s32 5, %v1688
        %v1690 = vrot.slane %v1448, %v1689
        %v1691 = vlaneseq
        %v1692 = vshrl.u32 %v1691, 7
        %v1693 = vsub.s32 6, %v1692
        %v1694 = vrot.slane %v1448, %v1693
        %v1695 = vlaneseq
        %v1696 = vshrl.u32 %v1695, 7
        %v1697 = vsub.s32 7, %v1696
        %v1698 = vrot.slane %v1448, %v1697
        %v1699 = vlaneseq
        %v1700 = vshrl.u32 %v1699, 7
        %v1701 = vsub.s32 0, %v1700
        %v1702 = vrot.slane %v1449, %v1701
        %v1703 = vlaneseq
        %v1704 = vshrl.u32 %v1703, 7
        %v1705 = vsub.s32 1, %v1704
        %v1706 = vrot.slane %v1449, %v1705
        %v1707 = vlaneseq
        %v1708 = vshrl.u32 %v1707, 7
        %v1709 = vsub.s32 2, %v1708
        %v1710 = vrot.slane %v1449, %v1709
        %v1711 = vlaneseq
        %v1712 = vshrl.u32 %v1711, 7
        %v1713 = vsub.s32 3, %v1712
        %v1714 = vrot.slane %v1449, %v1713
        %v1715 = vlaneseq
        %v1716 = vshrl.u32 %v1715, 7
        %v1717 = vsub.s32 4, %v1716
        %v1718 = vrot.slane %v1449, %v1717
        %v1719 = vlaneseq
        %v1720 = vshrl.u32 %v1719, 7
        %v1721 = vsub.s32 5, %v1720
        %v1722 = vrot.slane %v1449, %v1721
        %v1723 = vlaneseq
        %v1724 = vshrl.u32 %v1723, 7
        %v1725 = vsub.s32 6, %v1724
        %v1726 = vrot.slane %v1449, %v1725
        %v1727 = vlaneseq
        %v1728 = vshrl.u32 %v1727, 7
        %v1729 = vsub.s32 7, %v1728
        %v1730 = vrot.slane %v1449, %v1729
        %v1731 = vlaneseq
        %v1732 = vshrl.u32 %v1731, 7
        %v1733 = vsub.s32 0, %v1732
        %v1734 = vrot.slane %v1450, %v1733
        %v1735 = vlaneseq
        %v1736 = vshrl.u32 %v1735, 7
        %v1737 = vsub.s32 1, %v1736
        %v1738 = vrot.slane %v1450, %v1737
        %v1739 = vlaneseq
        %v1740 = vshrl.u32 %v1739, 7
        %v1741 = vsub.s32 2, %v1740
        %v1742 = vrot.slane %v1450, %v1741
        %v1743 = vlaneseq
        %v1744 = vshrl.u32 %v1743, 7
        %v1745 = vsub.s32 3, %v1744
        %v1746 = vrot.slane %v1450, %v1745
        %v1747 = vlaneseq
        %v1748 = vshrl.u32 %v1747, 7
        %v1749 = vsub.s32 4, %v1748
        %v1750 = vrot.slane %v1450, %v1749
        %v1751 = vlaneseq
        %v1752 = vshrl.u32 %v1751, 7
        %v1753 = vsub.s32 5, %v1752
        %v1754 = vrot.slane %v1450, %v1753
        %v1755 = vlaneseq
        %v1756 = vshrl.u32 %v1755, 7
        %v1757 = vsub.s32 6, %v1756
        %v1758 = vrot.slane %v1450, %v1757
        %v1759 = vlaneseq
        %v1760 = vshrl.u32 %v1759, 7
        %v1761 = vsub.s32 7, %v1760
        %v1762 = vrot.slane %v1450, %v1761
        %v1763 = vlaneseq
        %v1764 = vshrl.u32 %v1763, 7
        %v1765 = vsub.s32 0, %v1764
        %v1766 = vrot.slane %v1451, %v1765
        %v1767 = vlaneseq
        %v1768 = vshrl.u32 %v1767, 7
        %v1769 = vsub.s32 1, %v1768
        %v1770 = vrot.slane %v1451, %v1769
        %v1771 = vlaneseq
        %v1772 = vshrl.u32 %v1771, 7
        %v1773 = vsub.s32 2, %v1772
        %v1774 = vrot.slane %v1451, %v1773
        %v1775 = vlaneseq
        %v1776 = vshrl.u32 %v1775, 7
        %v1777 = vsub.s32 3, %v1776
        %v1778 = vrot.slane %v1451, %v1777
        %v1779 = vlaneseq
        %v1780 = vshrl.u32 %v1779, 7
        %v1781 = vsub.s32 4, %v1780
        %v1782 = vrot.slane %v1451, %v1781
        %v1783 = vlaneseq
        %v1784 = vshrl.u32 %v1783, 7
        %v1785 = vsub.s32 5, %v1784
        %v1786 = vrot.slane %v1451, %v1785
        %v1787 = vlaneseq
        %v1788 = vshrl.u32 %v1787, 7
        %v1789 = vsub.s32 6, %v1788
        %v1790 = vrot.slane %v1451, %v1789
        %v1791 = vlaneseq
        %v1792 = vshrl.u32 %v1791, 7
        %v1793 = vsub.s32 7, %v1792
        %v1794 = vrot.slane %v1451, %v1793
        %v1795 = vlaneseq
        %v1796 = vshrl.u32 %v1795, 7
        %v1797 = vsub.s32 0, %v1796
        %v1798 = vrot.slane %v1452, %v1797
        %v1799 = vlaneseq
        %v1800 = vshrl.u32 %v1799, 7
        %v1801 = vsub.s32 1, %v1800
        %v1802 = vrot.slane %v1452, %v1801
        %v1803 = vlaneseq
        %v1804 = vshrl.u32 %v1803, 7
        %v1805 = vsub.s32 2, %v1804
        %v1806 = vrot.slane %v1452, %v1805
        %v1807 = vlaneseq
        %v1808 = vshrl.u32 %v1807, 7
        %v1809 = vsub.s32 3, %v1808
        %v1810 = vrot.slane %v1452, %v1809
        %v1811 = vlaneseq
        %v1812 = vshrl.u32 %v1811, 7
        %v1813 = vsub.s32 4, %v1812
        %v1814 = vrot.slane %v1452, %v1813
        %v1815 = vlaneseq
        %v1816 = vshrl.u32 %v1815, 7
        %v1817 = vsub.s32 5, %v1816
        %v1818 = vrot.slane %v1452, %v1817
        %v1819 = vlaneseq
        %v1820 = vshrl.u32 %v1819, 7
        %v1821 = vsub.s32 6, %v1820
        %v1822 = vrot.slane %v1452, %v1821
        %v1823 = vlaneseq
        %v1824 = vshrl.u32 %v1823, 7
        %v1825 = vsub.s32 7, %v1824
        %v1826 = vrot.slane %v1452, %v1825
        %v1827 = vlaneseq
        %v1828 = vshrl.u32 %v1827, 7
        %v1829 = vsub.s32 0, %v1828
        %v1830 = vrot.slane %v1453, %v1829
        %v1831 = vlaneseq
        %v1832 = vshrl.u32 %v1831, 7
        %v1833 = vsub.s32 1, %v1832
        %v1834 = vrot.slane %v1453, %v1833
        %v1835 = vlaneseq
        %v1836 = vshrl.u32 %v1835, 7
        %v1837 = vsub.s32 2, %v1836
        %v1838 = vrot.slane %v1453, %v1837
        %v1839 = vlaneseq
        %v1840 = vshrl.u32 %v1839, 7
        %v1841 = vsub.s32 3, %v1840
        %v1842 = vrot.slane %v1453, %v1841
        %v1843 = vlaneseq
        %v1844 = vshrl.u32 %v1843, 7
        %v1845 = vsub.s32 4, %v1844
        %v1846 = vrot.slane %v1453, %v1845
        %v1847 = vlaneseq
        %v1848 = vshrl.u32 %v1847, 7
        %v1849 = vsub.s32 5, %v1848
        %v1850 = vrot.slane %v1453, %v1849
        %v1851 = vlaneseq
        %v1852 = vshrl.u32 %v1851, 7
        %v1853 = vsub.s32 6, %v1852
        %v1854 = vrot.slane %v1453, %v1853
        %v1855 = vlaneseq
        %v1856 = vshrl.u32 %v1855, 7
        %v1857 = vsub.s32 7, %v1856
        %v1858 = vrot.slane %v1453, %v1857
        %v1859 = vlaneseq
        %v1860 = vshrl.u32 %v1859, 7
        %v1861 = vsub.s32 0, %v1860
        %v1862 = vrot.slane %v1454, %v1861
        %v1863 = vlaneseq
        %v1864 = vshrl.u32 %v1863, 7
        %v1865 = vsub.s32 1, %v1864
        %v1866 = vrot.slane %v1454, %v1865
        %v1867 = vlaneseq
        %v1868 = vshrl.u32 %v1867, 7
        %v1869 = vsub.s32 2, %v1868
        %v1870 = vrot.slane %v1454, %v1869
        %v1871 = vlaneseq
        %v1872 = vshrl.u32 %v1871, 7
        %v1873 = vsub.s32 3, %v1872
        %v1874 = vrot.slane %v1454, %v1873
        %v1875 = vlaneseq
        %v1876 = vshrl.u32 %v1875, 7
        %v1877 = vsub.s32 4, %v1876
        %v1878 = vrot.slane %v1454, %v1877
        %v1879 = vlaneseq
        %v1880 = vshrl.u32 %v1879, 7
        %v1881 = vsub.s32 5, %v1880
        %v1882 = vrot.slane %v1454, %v1881
        %v1883 = vlaneseq
        %v1884 = vshrl.u32 %v1883, 7
        %v1885 = vsub.s32 6, %v1884
        %v1886 = vrot.slane %v1454, %v1885
        %v1887 = vlaneseq
        %v1888 = vshrl.u32 %v1887, 7
        %v1889 = vsub.s32 7, %v1888
        %v1890 = vrot.slane %v1454, %v1889
        %v1891 = vlaneseq
        %v1892 = vshrl.u32 %v1891, 7
        %v1893 = vsub.s32 0, %v1892
        %v1894 = vrot.slane %v1455, %v1893
        %v1895 = vlaneseq
        %v1896 = vshrl.u32 %v1895, 7
        %v1897 = vsub.s32 1, %v1896
        %v1898 = vrot.slane %v1455, %v1897
        %v1899 = vlaneseq
        %v1900 = vshrl.u32 %v1899, 7
        %v1901 = vsub.s32 2, %v1900
        %v1902 = vrot.slane %v1455, %v1901
        %v1903 = vlaneseq
        %v1904 = vshrl.u32 %v1903, 7
        %v1905 = vsub.s32 3, %v1904
        %v1906 = vrot.slane %v1455, %v1905
        %v1907 = vlaneseq
        %v1908 = vshrl.u32 %v1907, 7
        %v1909 = vsub.s32 4, %v1908
        %v1910 = vrot.slane %v1455, %v1909
        %v1911 = vlaneseq
        %v1912 = vshrl.u32 %v1911, 7
        %v1913 = vsub.s32 5, %v1912
        %v1914 = vrot.slane %v1455, %v1913
        %v1915 = vlaneseq
        %v1916 = vshrl.u32 %v1915, 7
        %v1917 = vsub.s32 6, %v1916
        %v1918 = vrot.slane %v1455, %v1917
        %v1919 = vlaneseq
        %v1920 = vshrl.u32 %v1919, 7
        %v1921 = vsub.s32 7, %v1920
        %v1922 = vrot.slane %v1455, %v1921
        %v1923 = vlaneseq
        %v1924 = vshrl.u32 %v1923, 7
        %v1925 = vsub.s32 0, %v1924
        %v1926 = vrot.slane %v1456, %v1925
        %v1927 = vlaneseq
        %v1928 = vshrl.u32 %v1927, 7
        %v1929 = vsub.s32 1, %v1928
        %v1930 = vrot.slane %v1456, %v1929
        %v1931 = vlaneseq
        %v1932 = vshrl.u32 %v1931, 7
        %v1933 = vsub.s32 2, %v1932
        %v1934 = vrot.slane %v1456, %v1933
        %v1935 = vlaneseq
        %v1936 = vshrl.u32 %v1935, 7
        %v1937 = vsub.s32 3, %v1936
        %v1938 = vrot.slane %v1456, %v1937
        %v1939 = vlaneseq
        %v1940 = vshrl.u32 %v1939, 7
        %v1941 = vsub.s32 4, %v1940
        %v1942 = vrot.slane %v1456, %v1941
        %v1943 = vlaneseq
        %v1944 = vshrl.u32 %v1943, 7
        %v1945 = vsub.s32 5, %v1944
        %v1946 = vrot.slane %v1456, %v1945
        %v1947 = vlaneseq
        %v1948 = vshrl.u32 %v1947, 7
        %v1949 = vsub.s32 6, %v1948
        %v1950 = vrot.slane %v1456, %v1949
        %v1951 = vlaneseq
        %v1952 = vshrl.u32 %v1951, 7
        %v1953 = vsub.s32 7, %v1952
        %v1954 = vrot.slane %v1456, %v1953
        %v1955 = vlaneseq
        %v1956 = vshrl.u32 %v1955, 7
        %v1957 = vsub.s32 0, %v1956
        %v1958 = vrot.slane %v1457, %v1957
        %v1959 = vlaneseq
        %v1960 = vshrl.u32 %v1959, 7
        %v1961 = vsub.s32 1, %v1960
        %v1962 = vrot.slane %v1457, %v1961
        %v1963 = vlaneseq
        %v1964 = vshrl.u32 %v1963, 7
        %v1965 = vsub.s32 2, %v1964
        %v1966 = vrot.slane %v1457, %v1965
        %v1967 = vlaneseq
        %v1968 = vshrl.u32 %v1967, 7
        %v1969 = vsub.s32 3, %v1968
        %v1970 = vrot.slane %v1457, %v1969
        %v1971 = vlaneseq
        %v1972 = vshrl.u32 %v1971, 7
        %v1973 = vsub.s32 4, %v1972
        %v1974 = vrot.slane %v1457, %v1973
        %v1975 = vlaneseq
        %v1976 = vshrl.u32 %v1975, 7
        %v1977 = vsub.s32 5, %v1976
        %v1978 = vrot.slane %v1457, %v1977
        %v1979 = vlaneseq
        %v1980 = vshrl.u32 %v1979, 7
        %v1981 = vsub.s32 6, %v1980
        %v1982 = vrot.slane %v1457, %v1981
        %v1983 = vlaneseq
        %v1984 = vshrl.u32 %v1983, 7
        %v1985 = vsub.s32 7, %v1984
        %v1986 = vrot.slane %v1457, %v1985
        %v1987 = vlaneseq
        %v1988 = vshrl.u32 %v1987, 7
        %v1989 = vsub.s32 0, %v1988
        %v1990 = vrot.slane %v1458, %v1989
        %v1991 = vlaneseq
        %v1992 = vshrl.u32 %v1991, 7
        %v1993 = vsub.s32 1, %v1992
        %v1994 = vrot.slane %v1458, %v1993
        %v1995 = vlaneseq
        %v1996 = vshrl.u32 %v1995, 7
        %v1997 = vsub.s32 2, %v1996
        %v1998 = vrot.slane %v1458, %v1997
        %v1999 = vlaneseq
        %v2000 = vshrl.u32 %v1999, 7
        %v2001 = vsub.s32 3, %v2000
        %v2002 = vrot.slane %v1458, %v2001
        %v2003 = vlaneseq
        %v2004 = vshrl.u32 %v2003, 7
        %v2005 = vsub.s32 4, %v2004
        %v2006 = vrot.slane %v1458, %v2005
        %v2007 = vlaneseq
        %v2008 = vshrl.u32 %v2007, 7
        %v2009 = vsub.s32 5, %v2008
        %v2010 = vrot.slane %v1458, %v2009
        %v2011 = vlaneseq
        %v2012 = vshrl.u32 %v2011, 7
        %v2013 = vsub.s32 6, %v2012
        %v2014 = vrot.slane %v1458, %v2013
        %v2015 = vlaneseq
        %v2016 = vshrl.u32 %v2015, 7
        %v2017 = vsub.s32 7, %v2016
        %v2018 = vrot.slane %v1458, %v2017
        %v2019 = vlaneseq
        %v2020 = vshrl.u32 %v2019, 7
        %v2021 = vsub.s32 0, %v2020
        %v2022 = vrot.slane %v1459, %v2021
        %v2023 = vlaneseq
        %v2024 = vshrl.u32 %v2023, 7
        %v2025 = vsub.s32 1, %v2024
        %v2026 = vrot.slane %v1459, %v2025
        %v2027 = vlaneseq
        %v2028 = vshrl.u32 %v2027, 7
        %v2029 = vsub.s32 2, %v2028
        %v2030 = vrot.slane %v1459, %v2029
        %v2031 = vlaneseq
        %v2032 = vshrl.u32 %v2031, 7
        %v2033 = vsub.s32 3, %v2032
        %v2034 = vrot.slane %v1459, %v2033
        %v2035 = vlaneseq
        %v2036 = vshrl.u32 %v2035, 7
        %v2037 = vsub.s32 4, %v2036
        %v2038 = vrot.slane %v1459, %v2037
        %v2039 = vlaneseq
        %v2040 = vshrl.u32 %v2039, 7
        %v2041 = vsub.s32 5, %v2040
        %v2042 = vrot.slane %v1459, %v2041
        %v2043 = vlaneseq
        %v2044 = vshrl.u32 %v2043, 7
        %v2045 = vsub.s32 6, %v2044
        %v2046 = vrot.slane %v1459, %v2045
        %v2047 = vlaneseq
        %v2048 = vshrl.u32 %v2047, 7
        %v2049 = vsub.s32 7, %v2048
        %v2050 = vrot.slane %v1459, %v2049
        %v2051 = vlaneseq
        %v2052 = vshrl.u32 %v2051, 7
        %v2053 = vsub.s32 0, %v2052
        %v2054 = vrot.slane %v1460, %v2053
        %v2055 = vlaneseq
        %v2056 = vshrl.u32 %v2055, 7
        %v2057 = vsub.s32 1, %v2056
        %v2058 = vrot.slane %v1460, %v2057
        %v2059 = vlaneseq
        %v2060 = vshrl.u32 %v2059, 7
        %v2061 = vsub.s32 2, %v2060
        %v2062 = vrot.slane %v1460, %v2061
        %v2063 = vlaneseq
        %v2064 = vshrl.u32 %v2063, 7
        %v2065 = vsub.s32 3, %v2064
        %v2066 = vrot.slane %v1460, %v2065
        %v2067 = vlaneseq
        %v2068 = vshrl.u32 %v2067, 7
        %v2069 = vsub.s32 4, %v2068
        %v2070 = vrot.slane %v1460, %v2069
        %v2071 = vlaneseq
        %v2072 = vshrl.u32 %v2071, 7
        %v2073 = vsub.s32 5, %v2072
        %v2074 = vrot.slane %v1460, %v2073
        %v2075 = vlaneseq
        %v2076 = vshrl.u32 %v2075, 7
        %v2077 = vsub.s32 6, %v2076
        %v2078 = vrot.slane %v1460, %v2077
        %v2079 = vlaneseq
        %v2080 = vshrl.u32 %v2079, 7
        %v2081 = vsub.s32 7, %v2080
        %v2082 = vrot.slane %v1460, %v2081
        %v2083 = vlaneseq
        %v2084 = vshrl.u32 %v2083, 7
        %v2085 = vsub.s32 0, %v2084
        %v2086 = vrot.slane %v1461, %v2085
        %v2087 = vlaneseq
        %v2088 = vshrl.u32 %v2087, 7
        %v2089 = vsub.s32 1, %v2088
        %v2090 = vrot.slane %v1461, %v2089
        %v2091 = vlaneseq
        %v2092 = vshrl.u32 %v2091, 7
        %v2093 = vsub.s32 2, %v2092
        %v2094 = vrot.slane %v1461, %v2093
        %v2095 = vlaneseq
        %v2096 = vshrl.u32 %v2095, 7
        %v2097 = vsub.s32 3, %v2096
        %v2098 = vrot.slane %v1461, %v2097
        %v2099 = vlaneseq
        %v2100 = vshrl.u32 %v2099, 7
        %v2101 = vsub.s32 4, %v2100
        %v2102 = vrot.slane %v1461, %v2101
        %v2103 = vlaneseq
        %v2104 = vshrl.u32 %v2103, 7
        %v2105 = vsub.s32 5, %v2104
        %v2106 = vrot.slane %v1461, %v2105
        %v2107 = vlaneseq
        %v2108 = vshrl.u32 %v2107, 7
        %v2109 = vsub.s32 6, %v2108
        %v2110 = vrot.slane %v1461, %v2109
        %v2111 = vlaneseq
        %v2112 = vshrl.u32 %v2111, 7
        %v2113 = vsub.s32 7, %v2112
        %v2114 = vrot.slane %v1461, %v2113
        %v2115 = vlaneseq
        %v2116 = vshrl.u32 %v2115, 7
        %v2117 = vsub.s32 0, %v2116
        %v2118 = vrot.slane %v1462, %v2117
        %v2119 = vlaneseq
        %v2120 = vshrl.u32 %v2119, 7
        %v2121 = vsub.s32 1, %v2120
        %v2122 = vrot.slane %v1462, %v2121
        %v2123 = vlaneseq
        %v2124 = vshrl.u32 %v2123, 7
        %v2125 = vsub.s32 2, %v2124
        %v2126 = vrot.slane %v1462, %v2125
        %v2127 = vlaneseq
        %v2128 = vshrl.u32 %v2127, 7
        %v2129 = vsub.s32 3, %v2128
        %v2130 = vrot.slane %v1462, %v2129
        %v2131 = vlaneseq
        %v2132 = vshrl.u32 %v2131, 7
        %v2133 = vsub.s32 4, %v2132
        %v2134 = vrot.slane %v1462, %v2133
        %v2135 = vlaneseq
        %v2136 = vshrl.u32 %v2135, 7
        %v2137 = vsub.s32 5, %v2136
        %v2138 = vrot.slane %v1462, %v2137
        %v2139 = vlaneseq
        %v2140 = vshrl.u32 %v2139, 7
        %v2141 = vsub.s32 6, %v2140
        %v2142 = vrot.slane %v1462, %v2141
        %v2143 = vlaneseq
        %v2144 = vshrl.u32 %v2143, 7
        %v2145 = vsub.s32 7, %v2144
        %v2146 = vrot.slane %v1462, %v2145
        %v2147 = vlaneseq
        %v2148 = vshrl.u32 %v2147, 7
        %v2149 = vsub.s32 0, %v2148
        %v2150 = vrot.slane %v1463, %v2149
        %v2151 = vlaneseq
        %v2152 = vshrl.u32 %v2151, 7
        %v2153 = vsub.s32 1, %v2152
        %v2154 = vrot.slane %v1463, %v2153
        %v2155 = vlaneseq
        %v2156 = vshrl.u32 %v2155, 7
        %v2157 = vsub.s32 2, %v2156
        %v2158 = vrot.slane %v1463, %v2157
        %v2159 = vlaneseq
        %v2160 = vshrl.u32 %v2159, 7
        %v2161 = vsub.s32 3, %v2160
        %v2162 = vrot.slane %v1463, %v2161
        %v2163 = vlaneseq
        %v2164 = vshrl.u32 %v2163, 7
        %v2165 = vsub.s32 4, %v2164
        %v2166 = vrot.slane %v1463, %v2165
        %v2167 = vlaneseq
        %v2168 = vshrl.u32 %v2167, 7
        %v2169 = vsub.s32 5, %v2168
        %v2170 = vrot.slane %v1463, %v2169
        %v2171 = vlaneseq
        %v2172 = vshrl.u32 %v2171, 7
        %v2173 = vsub.s32 6, %v2172
        %v2174 = vrot.slane %v1463, %v2173
        %v2175 = vlaneseq
        %v2176 = vshrl.u32 %v2175, 7
        %v2177 = vsub.s32 7, %v2176
        %v2178 = vrot.slane %v1463, %v2177
        %v2179 = vlaneseq
        %v2180 = vshrl.u32 %v2179, 7
        %v2181 = vsub.s32 0, %v2180
        %v2182 = vrot.slane %v1464, %v2181
        %v2183 = vlaneseq
        %v2184 = vshrl.u32 %v2183, 7
        %v2185 = vsub.s32 1, %v2184
        %v2186 = vrot.slane %v1464, %v2185
        %v2187 = vlaneseq
        %v2188 = vshrl.u32 %v2187, 7
        %v2189 = vsub.s32 2, %v2188
        %v2190 = vrot.slane %v1464, %v2189
        %v2191 = vlaneseq
        %v2192 = vshrl.u32 %v2191, 7
        %v2193 = vsub.s32 3, %v2192
        %v2194 = vrot.slane %v1464, %v2193
        %v2195 = vlaneseq
        %v2196 = vshrl.u32 %v2195, 7
        %v2197 = vsub.s32 4, %v2196
        %v2198 = vrot.slane %v1464, %v2197
        %v2199 = vlaneseq
        %v2200 = vshrl.u32 %v2199, 7
        %v2201 = vsub.s32 5, %v2200
        %v2202 = vrot.slane %v1464, %v2201
        %v2203 = vlaneseq
        %v2204 = vshrl.u32 %v2203, 7
        %v2205 = vsub.s32 6, %v2204
        %v2206 = vrot.slane %v1464, %v2205
        %v2207 = vlaneseq
        %v2208 = vshrl.u32 %v2207, 7
        %v2209 = vsub.s32 7, %v2208
        %v2210 = vrot.slane %v1464, %v2209
        %v2211 = vlaneseq
        %v2212 = vshrl.u32 %v2211, 7
        %v2213 = vsub.s32 0, %v2212
        %v2214 = vrot.slane %v1465, %v2213
        %v2215 = vlaneseq
        %v2216 = vshrl.u32 %v2215, 7
        %v2217 = vsub.s32 1, %v2216
        %v2218 = vrot.slane %v1465, %v2217
        %v2219 = vlaneseq
        %v2220 = vshrl.u32 %v2219, 7
        %v2221 = vsub.s32 2, %v2220
        %v2222 = vrot.slane %v1465, %v2221
        %v2223 = vlaneseq
        %v2224 = vshrl.u32 %v2223, 7
        %v2225 = vsub.s32 3, %v2224
        %v2226 = vrot.slane %v1465, %v2225
        %v2227 = vlaneseq
        %v2228 = vshrl.u32 %v2227, 7
        %v2229 = vsub.s32 4, %v2228
        %v2230 = vrot.slane %v1465, %v2229
        %v2231 = vlaneseq
        %v2232 = vshrl.u32 %v2231, 7
        %v2233 = vsub.s32 5, %v2232
        %v2234 = vrot.slane %v1465, %v2233
        %v2235 = vlaneseq
        %v2236 = vshrl.u32 %v2235, 7
        %v2237 = vsub.s32 6, %v2236
        %v2238 = vrot.slane %v1465, %v2237
        %v2239 = vlaneseq
        %v2240 = vshrl.u32 %v2239, 7
        %v2241 = vsub.s32 7, %v2240
        %v2242 = vrot.slane %v1465, %v2241
        %v2243 = vlaneseq
        %v2244 = vshrl.u32 %v2243, 7
        %v2245 = vsub.s32 0, %v2244
        %v2246 = vrot.slane %v1466, %v2245
        %v2247 = vlaneseq
        %v2248 = vshrl.u32 %v2247, 7
        %v2249 = vsub.s32 1, %v2248
        %v2250 = vrot.slane %v1466, %v2249
        %v2251 = vlaneseq
        %v2252 = vshrl.u32 %v2251, 7
        %v2253 = vsub.s32 2, %v2252
        %v2254 = vrot.slane %v1466, %v2253
        %v2255 = vlaneseq
        %v2256 = vshrl.u32 %v2255, 7
        %v2257 = vsub.s32 3, %v2256
        %v2258 = vrot.slane %v1466, %v2257
        %v2259 = vlaneseq
        %v2260 = vshrl.u32 %v2259, 7
        %v2261 = vsub.s32 4, %v2260
        %v2262 = vrot.slane %v1466, %v2261
        %v2263 = vlaneseq
        %v2264 = vshrl.u32 %v2263, 7
        %v2265 = vsub.s32 5, %v2264
        %v2266 = vrot.slane %v1466, %v2265
        %v2267 = vlaneseq
        %v2268 = vshrl.u32 %v2267, 7
        %v2269 = vsub.s32 6, %v2268
        %v2270 = vrot.slane %v1466, %v2269
        %v2271 = vlaneseq
        %v2272 = vshrl.u32 %v2271, 7
        %v2273 = vsub.s32 7, %v2272
        %v2274 = vrot.slane %v1466, %v2273
        %v2275 = vlaneseq
        %v2276 = vshrl.u32 %v2275, 7
        %v2277 = vsub.s32 0, %v2276
        %v2278 = vrot.slane %v1467, %v2277
        %v2279 = vlaneseq
        %v2280 = vshrl.u32 %v2279, 7
        %v2281 = vsub.s32 1, %v2280
        %v2282 = vrot.slane %v1467, %v2281
        %v2283 = vlaneseq
        %v2284 = vshrl.u32 %v2283, 7
        %v2285 = vsub.s32 2, %v2284
        %v2286 = vrot.slane %v1467, %v2285
        %v2287 = vlaneseq
        %v2288 = vshrl.u32 %v2287, 7
        %v2289 = vsub.s32 3, %v2288
        %v2290 = vrot.slane %v1467, %v2289
        %v2291 = vlaneseq
        %v2292 = vshrl.u32 %v2291, 7
        %v2293 = vsub.s32 4, %v2292
        %v2294 = vrot.slane %v1467, %v2293
        %v2295 = vlaneseq
        %v2296 = vshrl.u32 %v2295, 7
        %v2297 = vsub.s32 5, %v2296
        %v2298 = vrot.slane %v1467, %v2297
        %v2299 = vlaneseq
        %v2300 = vshrl.u32 %v2299, 7
        %v2301 = vsub.s32 6, %v2300
        %v2302 = vrot.slane %v1467, %v2301
        %v2303 = vlaneseq
        %v2304 = vshrl.u32 %v2303, 7
        %v2305 = vsub.s32 7, %v2304
        %v2306 = vrot.slane %v1467, %v2305
        %v2307 = vlaneseq
        %v2308 = vshrl.u32 %v2307, 7
        %v2309 = vsub.s32 0, %v2308
        %v2310 = vrot.slane %v1468, %v2309
        %v2311 = vlaneseq
        %v2312 = vshrl.u32 %v2311, 7
        %v2313 = vsub.s32 1, %v2312
        %v2314 = vrot.slane %v1468, %v2313
        %v2315 = vlaneseq
        %v2316 = vshrl.u32 %v2315, 7
        %v2317 = vsub.s32 2, %v2316
        %v2318 = vrot.slane %v1468, %v2317
        %v2319 = vlaneseq
        %v2320 = vshrl.u32 %v2319, 7
        %v2321 = vsub.s32 3, %v2320
        %v2322 = vrot.slane %v1468, %v2321
        %v2323 = vlaneseq
        %v2324 = vshrl.u32 %v2323, 7
        %v2325 = vsub.s32 4, %v2324
        %v2326 = vrot.slane %v1468, %v2325
        %v2327 = vlaneseq
        %v2328 = vshrl.u32 %v2327, 7
        %v2329 = vsub.s32 5, %v2328
        %v2330 = vrot.slane %v1468, %v2329
        %v2331 = vlaneseq
        %v2332 = vshrl.u32 %v2331, 7
        %v2333 = vsub.s32 6, %v2332
        %v2334 = vrot.slane %v1468, %v2333
        %v2335 = vlaneseq
        %v2336 = vshrl.u32 %v2335, 7
        %v2337 = vsub.s32 7, %v2336
        %v2338 = vrot.slane %v1468, %v2337
        %v2339 = vlaneseq
        %v2340 = vshrl.u32 %v2339, 7
        %v2341 = vsub.s32 0, %v2340
        %v2342 = vrot.slane %v1469, %v2341
        %v2343 = vlaneseq
        %v2344 = vshrl.u32 %v2343, 7
        %v2345 = vsub.s32 1, %v2344
        %v2346 = vrot.slane %v1469, %v2345
        %v2347 = vlaneseq
        %v2348 = vshrl.u32 %v2347, 7
        %v2349 = vsub.s32 2, %v2348
        %v2350 = vrot.slane %v1469, %v2349
        %v2351 = vlaneseq
        %v2352 = vshrl.u32 %v2351, 7
        %v2353 = vsub.s32 3, %v2352
        %v2354 = vrot.slane %v1469, %v2353
        %v2355 = vlaneseq
        %v2356 = vshrl.u32 %v2355, 7
        %v2357 = vsub.s32 4, %v2356
        %v2358 = vrot.slane %v1469, %v2357
        %v2359 = vlaneseq
        %v2360 = vshrl.u32 %v2359, 7
        %v2361 = vsub.s32 5, %v2360
        %v2362 = vrot.slane %v1469, %v2361
        %v2363 = vlaneseq
        %v2364 = vshrl.u32 %v2363, 7
        %v2365 = vsub.s32 6, %v2364
        %v2366 = vrot.slane %v1469, %v2365
        %v2367 = vlaneseq
        %v2368 = vshrl.u32 %v2367, 7
        %v2369 = vsub.s32 7, %v2368
        %v2370 = vrot.slane %v1469, %v2369
        %v2371 = vlaneseq
        %v2372 = vshrl.u32 %v2371, 7
        %v2373 = vsub.s32 0, %v2372
        %v2374 = vrot.slane %v1470, %v2373
        %v2375 = vlaneseq
        %v2376 = vshrl.u32 %v2375, 7
        %v2377 = vsub.s32 1, %v2376
        %v2378 = vrot.slane %v1470, %v2377
        %v2379 = vlaneseq
        %v2380 = vshrl.u32 %v2379, 7
        %v2381 = vsub.s32 2, %v2380
        %v2382 = vrot.slane %v1470, %v2381
        %v2383 = vlaneseq
        %v2384 = vshrl.u32 %v2383, 7
        %v2385 = vsub.s32 3, %v2384
        %v2386 = vrot.slane %v1470, %v2385
        %v2387 = vlaneseq
        %v2388 = vshrl.u32 %v2387, 7
        %v2389 = vsub.s32 4, %v2388
        %v2390 = vrot.slane %v1470, %v2389
        %v2391 = vlaneseq
        %v2392 = vshrl.u32 %v2391, 7
        %v2393 = vsub.s32 5, %v2392
        %v2394 = vrot.slane %v1470, %v2393
        %v2395 = vlaneseq
        %v2396 = vshrl.u32 %v2395, 7
        %v2397 = vsub.s32 6, %v2396
        %v2398 = vrot.slane %v1470, %v2397
        %v2399 = vlaneseq
        %v2400 = vshrl.u32 %v2399, 7
        %v2401 = vsub.s32 7, %v2400
        %v2402 = vrot.slane %v1470, %v2401
        %v2403 = vlaneseq
        %v2404 = vshrl.u32 %v2403, 7
        %v2405 = vsub.s32 0, %v2404
        %v2406 = vrot.slane %v1471, %v2405
        %v2407 = vlaneseq
        %v2408 = vshrl.u32 %v2407, 7
        %v2409 = vsub.s32 1, %v2408
        %v2410 = vrot.slane %v1471, %v2409
        %v2411 = vlaneseq
        %v2412 = vshrl.u32 %v2411, 7
        %v2413 = vsub.s32 2, %v2412
        %v2414 = vrot.slane %v1471, %v2413
        %v2415 = vlaneseq
        %v2416 = vshrl.u32 %v2415, 7
        %v2417 = vsub.s32 3, %v2416
        %v2418 = vrot.slane %v1471, %v2417
        %v2419 = vlaneseq
        %v2420 = vshrl.u32 %v2419, 7
        %v2421 = vsub.s32 4, %v2420
        %v2422 = vrot.slane %v1471, %v2421
        %v2423 = vlaneseq
        %v2424 = vshrl.u32 %v2423, 7
        %v2425 = vsub.s32 5, %v2424
        %v2426 = vrot.slane %v1471, %v2425
        %v2427 = vlaneseq
        %v2428 = vshrl.u32 %v2427, 7
        %v2429 = vsub.s32 6, %v2428
        %v2430 = vrot.slane %v1471, %v2429
        %v2431 = vlaneseq
        %v2432 = vshrl.u32 %v2431, 7
        %v2433 = vsub.s32 7, %v2432
        %v2434 = vrot.slane %v1471, %v2433
        %v2435 = vlaneseq
        %v2436 = vshrl.u32 %v2435, 7
        %v2437 = vsub.s32 0, %v2436
        %v2438 = vrot.slane %v1472, %v2437
        %v2439 = vlaneseq
        %v2440 = vshrl.u32 %v2439, 7
        %v2441 = vsub.s32 1, %v2440
        %v2442 = vrot.slane %v1472, %v2441
        %v2443 = vlaneseq
        %v2444 = vshrl.u32 %v2443, 7
        %v2445 = vsub.s32 2, %v2444
        %v2446 = vrot.slane %v1472, %v2445
        %v2447 = vlaneseq
        %v2448 = vshrl.u32 %v2447, 7
        %v2449 = vsub.s32 3, %v2448
        %v2450 = vrot.slane %v1472, %v2449
        %v2451 = vlaneseq
        %v2452 = vshrl.u32 %v2451, 7
        %v2453 = vsub.s32 4, %v2452
        %v2454 = vrot.slane %v1472, %v2453
        %v2455 = vlaneseq
        %v2456 = vshrl.u32 %v2455, 7
        %v2457 = vsub.s32 5, %v2456
        %v2458 = vrot.slane %v1472, %v2457
        %v2459 = vlaneseq
        %v2460 = vshrl.u32 %v2459, 7
        %v2461 = vsub.s32 6, %v2460
        %v2462 = vrot.slane %v1472, %v2461
        %v2463 = vlaneseq
        %v2464 = vshrl.u32 %v2463, 7
        %v2465 = vsub.s32 7, %v2464
        %v2466 = vrot.slane %v1472, %v2465
        %v2467 = vlaneseq
        %v2468 = vshrl.u32 %v2467, 7
        %v2469 = vsub.s32 0, %v2468
        %v2470 = vrot.slane %v1473, %v2469
        %v2471 = vlaneseq
        %v2472 = vshrl.u32 %v2471, 7
        %v2473 = vsub.s32 1, %v2472
        %v2474 = vrot.slane %v1473, %v2473
        %v2475 = vlaneseq
        %v2476 = vshrl.u32 %v2475, 7
        %v2477 = vsub.s32 2, %v2476
        %v2478 = vrot.slane %v1473, %v2477
        %v2479 = vlaneseq
        %v2480 = vshrl.u32 %v2479, 7
        %v2481 = vsub.s32 3, %v2480
        %v2482 = vrot.slane %v1473, %v2481
        %v2483 = vlaneseq
        %v2484 = vshrl.u32 %v2483, 7
        %v2485 = vsub.s32 4, %v2484
        %v2486 = vrot.slane %v1473, %v2485
        %v2487 = vlaneseq
        %v2488 = vshrl.u32 %v2487, 7
        %v2489 = vsub.s32 5, %v2488
        %v2490 = vrot.slane %v1473, %v2489
        %v2491 = vlaneseq
        %v2492 = vshrl.u32 %v2491, 7
        %v2493 = vsub.s32 6, %v2492
        %v2494 = vrot.slane %v1473, %v2493
        %v2495 = vlaneseq
        %v2496 = vshrl.u32 %v2495, 7
        %v2497 = vsub.s32 7, %v2496
        %v2498 = vrot.slane %v1473, %v2497
        %v2499 = vlaneseq
        %v2500 = vshrl.u32 %v2499, 7
        %v2501 = vsub.s32 0, %v2500
        %v2502 = vrot.slane %v1474, %v2501
        %v2503 = vlaneseq
        %v2504 = vshrl.u32 %v2503, 7
        %v2505 = vsub.s32 1, %v2504
        %v2506 = vrot.slane %v1474, %v2505
        %v2507 = vlaneseq
        %v2508 = vshrl.u32 %v2507, 7
        %v2509 = vsub.s32 2, %v2508
        %v2510 = vrot.slane %v1474, %v2509
        %v2511 = vlaneseq
        %v2512 = vshrl.u32 %v2511, 7
        %v2513 = vsub.s32 3, %v2512
        %v2514 = vrot.slane %v1474, %v2513
        %v2515 = vlaneseq
        %v2516 = vshrl.u32 %v2515, 7
        %v2517 = vsub.s32 4, %v2516
        %v2518 = vrot.slane %v1474, %v2517
        %v2519 = vlaneseq
        %v2520 = vshrl.u32 %v2519, 7
        %v2521 = vsub.s32 5, %v2520
        %v2522 = vrot.slane %v1474, %v2521
        %v2523 = vlaneseq
        %v2524 = vshrl.u32 %v2523, 7
        %v2525 = vsub.s32 6, %v2524
        %v2526 = vrot.slane %v1474, %v2525
        %v2527 = vlaneseq
        %v2528 = vshrl.u32 %v2527, 7
        %v2529 = vsub.s32 7, %v2528
        %v2530 = vrot.slane %v1474, %v2529
        %v2531 = vcombine.low %v1510, %v1514
        %v2532 = vcombine.low %v1518, %v1522
        %v2533 = vcombine.low %v1526, %v1530
        %v2534 = vcombine.low %v1534, %v1538
        %v2536 = vunpack.c.l.s4 1966171168
        %v2537 = vunpack.c.0.s8 %v2536
        %v2538 = vlaneseq
        %v2539 = vshrl.u32 %v2538, 7
        %v2540 = vsub.s32 %v2537, %v2539
        %v2541 = vrot.slane %v2531, %v2540
        %v2543 = vunpack.c.l.s4 1966171168
        %v2544 = vunpack.c.0.s8 %v2543
        %v2545 = vlaneseq
        %v2546 = vshrl.u32 %v2545, 7
        %v2547 = vsub.s32 %v2544, %v2546
        %v2548 = vrot.slane %v2532, %v2547
        %v2550 = vunpack.c.l.s4 1966171168
        %v2551 = vunpack.c.0.s8 %v2550
        %v2552 = vlaneseq
        %v2553 = vshrl.u32 %v2552, 7
        %v2554 = vsub.s32 %v2551, %v2553
        %v2555 = vrot.slane %v2533, %v2554
        %v2557 = vunpack.c.l.s4 1966171168
        %v2558 = vunpack.c.0.s8 %v2557
        %v2559 = vlaneseq
        %v2560 = vshrl.u32 %v2559, 7
        %v2561 = vsub.s32 %v2558, %v2560
        %v2562 = vrot.slane %v2534, %v2561
        %v2563 = vcombine.low %v2541, %v2548
        %v2564 = vcombine.low %v2555, %v2562
        %v2566 = vunpack.c.l.s4 1966171168
        %v2567 = vunpack.c.0.s8 %v2566
        %v2568 = vlaneseq
        %v2569 = vshrl.u32 %v2568, 7
        %v2570 = vsub.s32 %v2567, %v2569
        %v2571 = vrot.slane %v2563, %v2570
        %v2573 = vunpack.c.l.s4 1966171168
        %v2574 = vunpack.c.0.s8 %v2573
        %v2575 = vlaneseq
        %v2576 = vshrl.u32 %v2575, 7
        %v2577 = vsub.s32 %v2574, %v2576
        %v2578 = vrot.slane %v2564, %v2577
        %v2579 = vcombine.low %v2571, %v2578
        %v2580 = vcombine.low %v1542, %v1546
        %v2581 = vcombine.low %v1550, %v1554
        %v2582 = vcombine.low %v1558, %v1562
        %v2583 = vcombine.low %v1566, %v1570
        %v2585 = vunpack.c.l.s4 1966171168
        %v2586 = vunpack.c.0.s8 %v2585
        %v2587 = vlaneseq
        %v2588 = vshrl.u32 %v2587, 7
        %v2589 = vsub.s32 %v2586, %v2588
        %v2590 = vrot.slane %v2580, %v2589
        %v2592 = vunpack.c.l.s4 1966171168
        %v2593 = vunpack.c.0.s8 %v2592
        %v2594 = vlaneseq
        %v2595 = vshrl.u32 %v2594, 7
        %v2596 = vsub.s32 %v2593, %v2595
        %v2597 = vrot.slane %v2581, %v2596
        %v2599 = vunpack.c.l.s4 1966171168
        %v2600 = vunpack.c.0.s8 %v2599
        %v2601 = vlaneseq
        %v2602 = vshrl.u32 %v2601, 7
        %v2603 = vsub.s32 %v2600, %v2602
        %v2604 = vrot.slane %v2582, %v2603
        %v2606 = vunpack.c.l.s4 1966171168
        %v2607 = vunpack.c.0.s8 %v2606
        %v2608 = vlaneseq
        %v2609 = vshrl.u32 %v2608, 7
        %v2610 = vsub.s32 %v2607, %v2609
        %v2611 = vrot.slane %v2583, %v2610
        %v2612 = vcombine.low %v2590, %v2597
        %v2613 = vcombine.low %v2604, %v2611
        %v2615 = vunpack.c.l.s4 1966171168
        %v2616 = vunpack.c.0.s8 %v2615
        %v2617 = vlaneseq
        %v2618 = vshrl.u32 %v2617, 7
        %v2619 = vsub.s32 %v2616, %v2618
        %v2620 = vrot.slane %v2612, %v2619
        %v2622 = vunpack.c.l.s4 1966171168
        %v2623 = vunpack.c.0.s8 %v2622
        %v2624 = vlaneseq
        %v2625 = vshrl.u32 %v2624, 7
        %v2626 = vsub.s32 %v2623, %v2625
        %v2627 = vrot.slane %v2613, %v2626
        %v2628 = vcombine.low %v2620, %v2627
        %v2629 = vcombine.low %v1574, %v1578
        %v2630 = vcombine.low %v1582, %v1586
        %v2631 = vcombine.low %v1590, %v1594
        %v2632 = vcombine.low %v1598, %v1602
        %v2634 = vunpack.c.l.s4 1966171168
        %v2635 = vunpack.c.0.s8 %v2634
        %v2636 = vlaneseq
        %v2637 = vshrl.u32 %v2636, 7
        %v2638 = vsub.s32 %v2635, %v2637
        %v2639 = vrot.slane %v2629, %v2638
        %v2641 = vunpack.c.l.s4 1966171168
        %v2642 = vunpack.c.0.s8 %v2641
        %v2643 = vlaneseq
        %v2644 = vshrl.u32 %v2643, 7
        %v2645 = vsub.s32 %v2642, %v2644
        %v2646 = vrot.slane %v2630, %v2645
        %v2648 = vunpack.c.l.s4 1966171168
        %v2649 = vunpack.c.0.s8 %v2648
        %v2650 = vlaneseq
        %v2651 = vshrl.u32 %v2650, 7
        %v2652 = vsub.s32 %v2649, %v2651
        %v2653 = vrot.slane %v2631, %v2652
        %v2655 = vunpack.c.l.s4 1966171168
        %v2656 = vunpack.c.0.s8 %v2655
        %v2657 = vlaneseq
        %v2658 = vshrl.u32 %v2657, 7
        %v2659 = vsub.s32 %v2656, %v2658
        %v2660 = vrot.slane %v2632, %v2659
        %v2661 = vcombine.low %v2639, %v2646
        %v2662 = vcombine.low %v2653, %v2660
        %v2664 = vunpack.c.l.s4 1966171168
        %v2665 = vunpack.c.0.s8 %v2664
        %v2666 = vlaneseq
        %v2667 = vshrl.u32 %v2666, 7
        %v2668 = vsub.s32 %v2665, %v2667
        %v2669 = vrot.slane %v2661, %v2668
        %v2671 = vunpack.c.l.s4 1966171168
        %v2672 = vunpack.c.0.s8 %v2671
        %v2673 = vlaneseq
        %v2674 = vshrl.u32 %v2673, 7
        %v2675 = vsub.s32 %v2672, %v2674
        %v2676 = vrot.slane %v2662, %v2675
        %v2677 = vcombine.low %v2669, %v2676
        %v2678 = vcombine.low %v1606, %v1610
        %v2679 = vcombine.low %v1614, %v1618
        %v2680 = vcombine.low %v1622, %v1626
        %v2681 = vcombine.low %v1630, %v1634
        %v2683 = vunpack.c.l.s4 1966171168
        %v2684 = vunpack.c.0.s8 %v2683
        %v2685 = vlaneseq
        %v2686 = vshrl.u32 %v2685, 7
        %v2687 = vsub.s32 %v2684, %v2686
        %v2688 = vrot.slane %v2678, %v2687
        %v2690 = vunpack.c.l.s4 1966171168
        %v2691 = vunpack.c.0.s8 %v2690
        %v2692 = vlaneseq
        %v2693 = vshrl.u32 %v2692, 7
        %v2694 = vsub.s32 %v2691, %v2693
        %v2695 = vrot.slane %v2679, %v2694
        %v2697 = vunpack.c.l.s4 1966171168
        %v2698 = vunpack.c.0.s8 %v2697
        %v2699 = vlaneseq
        %v2700 = vshrl.u32 %v2699, 7
        %v2701 = vsub.s32 %v2698, %v2700
        %v2702 = vrot.slane %v2680, %v2701
        %v2704 = vunpack.c.l.s4 1966171168
        %v2705 = vunpack.c.0.s8 %v2704
        %v2706 = vlaneseq
        %v2707 = vshrl.u32 %v2706, 7
        %v2708 = vsub.s32 %v2705, %v2707
        %v2709 = vrot.slane %v2681, %v2708
        %v2710 = vcombine.low %v2688, %v2695
        %v2711 = vcombine.low %v2702, %v2709
        %v2713 = vunpack.c.l.s4 1966171168
        %v2714 = vunpack.c.0.s8 %v2713
        %v2715 = vlaneseq
        %v2716 = vshrl.u32 %v2715, 7
        %v2717 = vsub.s32 %v2714, %v2716
        %v2718 = vrot.slane %v2710, %v2717
        %v2720 = vunpack.c.l.s4 1966171168
        %v2721 = vunpack.c.0.s8 %v2720
        %v2722 = vlaneseq
        %v2723 = vshrl.u32 %v2722, 7
        %v2724 = vsub.s32 %v2721, %v2723
        %v2725 = vrot.slane %v2711, %v2724
        %v2726 = vcombine.low %v2718, %v2725
        %v2727 = vcombine.low %v1638, %v1642
        %v2728 = vcombine.low %v1646, %v1650
        %v2729 = vcombine.low %v1654, %v1658
        %v2730 = vcombine.low %v1662, %v1666
        %v2732 = vunpack.c.l.s4 1966171168
        %v2733 = vunpack.c.0.s8 %v2732
        %v2734 = vlaneseq
        %v2735 = vshrl.u32 %v2734, 7
        %v2736 = vsub.s32 %v2733, %v2735
        %v2737 = vrot.slane %v2727, %v2736
        %v2739 = vunpack.c.l.s4 1966171168
        %v2740 = vunpack.c.0.s8 %v2739
        %v2741 = vlaneseq
        %v2742 = vshrl.u32 %v2741, 7
        %v2743 = vsub.s32 %v2740, %v2742
        %v2744 = vrot.slane %v2728, %v2743
        %v2746 = vunpack.c.l.s4 1966171168
        %v2747 = vunpack.c.0.s8 %v2746
        %v2748 = vlaneseq
        %v2749 = vshrl.u32 %v2748, 7
        %v2750 = vsub.s32 %v2747, %v2749
        %v2751 = vrot.slane %v2729, %v2750
        %v2753 = vunpack.c.l.s4 1966171168
        %v2754 = vunpack.c.0.s8 %v2753
        %v2755 = vlaneseq
        %v2756 = vshrl.u32 %v2755, 7
        %v2757 = vsub.s32 %v2754, %v2756
        %v2758 = vrot.slane %v2730, %v2757
        %v2759 = vcombine.low %v2737, %v2744
        %v2760 = vcombine.low %v2751, %v2758
        %v2762 = vunpack.c.l.s4 1966171168
        %v2763 = vunpack.c.0.s8 %v2762
        %v2764 = vlaneseq
        %v2765 = vshrl.u32 %v2764, 7
        %v2766 = vsub.s32 %v2763, %v2765
        %v2767 = vrot.slane %v2759, %v2766
        %v2769 = vunpack.c.l.s4 1966171168
        %v2770 = vunpack.c.0.s8 %v2769
        %v2771 = vlaneseq
        %v2772 = vshrl.u32 %v2771, 7
        %v2773 = vsub.s32 %v2770, %v2772
        %v2774 = vrot.slane %v2760, %v2773
        %v2775 = vcombine.low %v2767, %v2774
        %v2776 = vcombine.low %v1670, %v1674
        %v2777 = vcombine.low %v1678, %v1682
        %v2778 = vcombine.low %v1686, %v1690
        %v2779 = vcombine.low %v1694, %v1698
        %v2781 = vunpack.c.l.s4 1966171168
        %v2782 = vunpack.c.0.s8 %v2781
        %v2783 = vlaneseq
        %v2784 = vshrl.u32 %v2783, 7
        %v2785 = vsub.s32 %v2782, %v2784
        %v2786 = vrot.slane %v2776, %v2785
        %v2788 = vunpack.c.l.s4 1966171168
        %v2789 = vunpack.c.0.s8 %v2788
        %v2790 = vlaneseq
        %v2791 = vshrl.u32 %v2790, 7
        %v2792 = vsub.s32 %v2789, %v2791
        %v2793 = vrot.slane %v2777, %v2792
        %v2795 = vunpack.c.l.s4 1966171168
        %v2796 = vunpack.c.0.s8 %v2795
        %v2797 = vlaneseq
        %v2798 = vshrl.u32 %v2797, 7
        %v2799 = vsub.s32 %v2796, %v2798
        %v2800 = vrot.slane %v2778, %v2799
        %v2802 = vunpack.c.l.s4 1966171168
        %v2803 = vunpack.c.0.s8 %v2802
        %v2804 = vlaneseq
        %v2805 = vshrl.u32 %v2804, 7
        %v2806 = vsub.s32 %v2803, %v2805
        %v2807 = vrot.slane %v2779, %v2806
        %v2808 = vcombine.low %v2786, %v2793
        %v2809 = vcombine.low %v2800, %v2807
        %v2811 = vunpack.c.l.s4 1966171168
        %v2812 = vunpack.c.0.s8 %v2811
        %v2813 = vlaneseq
        %v2814 = vshrl.u32 %v2813, 7
        %v2815 = vsub.s32 %v2812, %v2814
        %v2816 = vrot.slane %v2808, %v2815
        %v2818 = vunpack.c.l.s4 1966171168
        %v2819 = vunpack.c.0.s8 %v2818
        %v2820 = vlaneseq
        %v2821 = vshrl.u32 %v2820, 7
        %v2822 = vsub.s32 %v2819, %v2821
        %v2823 = vrot.slane %v2809, %v2822
        %v2824 = vcombine.low %v2816, %v2823
        %v2825 = vcombine.low %v1702, %v1706
        %v2826 = vcombine.low %v1710, %v1714
        %v2827 = vcombine.low %v1718, %v1722
        %v2828 = vcombine.low %v1726, %v1730
        %v2830 = vunpack.c.l.s4 1966171168
        %v2831 = vunpack.c.0.s8 %v2830
        %v2832 = vlaneseq
        %v2833 = vshrl.u32 %v2832, 7
        %v2834 = vsub.s32 %v2831, %v2833
        %v2835 = vrot.slane %v2825, %v2834
        %v2837 = vunpack.c.l.s4 1966171168
        %v2838 = vunpack.c.0.s8 %v2837
        %v2839 = vlaneseq
        %v2840 = vshrl.u32 %v2839, 7
        %v2841 = vsub.s32 %v2838, %v2840
        %v2842 = vrot.slane %v2826, %v2841
        %v2844 = vunpack.c.l.s4 1966171168
        %v2845 = vunpack.c.0.s8 %v2844
        %v2846 = vlaneseq
        %v2847 = vshrl.u32 %v2846, 7
        %v2848 = vsub.s32 %v2845, %v2847
        %v2849 = vrot.slane %v2827, %v2848
        %v2851 = vunpack.c.l.s4 1966171168
        %v2852 = vunpack.c.0.s8 %v2851
        %v2853 = vlaneseq
        %v2854 = vshrl.u32 %v2853, 7
        %v2855 = vsub.s32 %v2852, %v2854
        %v2856 = vrot.slane %v2828, %v2855
        %v2857 = vcombine.low %v2835, %v2842
        %v2858 = vcombine.low %v2849, %v2856
        %v2860 = vunpack.c.l.s4 1966171168
        %v2861 = vunpack.c.0.s8 %v2860
        %v2862 = vlaneseq
        %v2863 = vshrl.u32 %v2862, 7
        %v2864 = vsub.s32 %v2861, %v2863
        %v2865 = vrot.slane %v2857, %v2864
        %v2867 = vunpack.c.l.s4 1966171168
        %v2868 = vunpack.c.0.s8 %v2867
        %v2869 = vlaneseq
        %v2870 = vshrl.u32 %v2869, 7
        %v2871 = vsub.s32 %v2868, %v2870
        %v2872 = vrot.slane %v2858, %v2871
        %v2873 = vcombine.low %v2865, %v2872
        %v2874 = vcombine.low %v1734, %v1738
        %v2875 = vcombine.low %v1742, %v1746
        %v2876 = vcombine.low %v1750, %v1754
        %v2877 = vcombine.low %v1758, %v1762
        %v2879 = vunpack.c.l.s4 1966171168
        %v2880 = vunpack.c.0.s8 %v2879
        %v2881 = vlaneseq
        %v2882 = vshrl.u32 %v2881, 7
        %v2883 = vsub.s32 %v2880, %v2882
        %v2884 = vrot.slane %v2874, %v2883
        %v2886 = vunpack.c.l.s4 1966171168
        %v2887 = vunpack.c.0.s8 %v2886
        %v2888 = vlaneseq
        %v2889 = vshrl.u32 %v2888, 7
        %v2890 = vsub.s32 %v2887, %v2889
        %v2891 = vrot.slane %v2875, %v2890
        %v2893 = vunpack.c.l.s4 1966171168
        %v2894 = vunpack.c.0.s8 %v2893
        %v2895 = vlaneseq
        %v2896 = vshrl.u32 %v2895, 7
        %v2897 = vsub.s32 %v2894, %v2896
        %v2898 = vrot.slane %v2876, %v2897
        %v2900 = vunpack.c.l.s4 1966171168
        %v2901 = vunpack.c.0.s8 %v2900
        %v2902 = vlaneseq
        %v2903 = vshrl.u32 %v2902, 7
        %v2904 = vsub.s32 %v2901, %v2903
        %v2905 = vrot.slane %v2877, %v2904
        %v2906 = vcombine.low %v2884, %v2891
        %v2907 = vcombine.low %v2898, %v2905
        %v2909 = vunpack.c.l.s4 1966171168
        %v2910 = vunpack.c.0.s8 %v2909
        %v2911 = vlaneseq
        %v2912 = vshrl.u32 %v2911, 7
        %v2913 = vsub.s32 %v2910, %v2912
        %v2914 = vrot.slane %v2906, %v2913
        %v2916 = vunpack.c.l.s4 1966171168
        %v2917 = vunpack.c.0.s8 %v2916
        %v2918 = vlaneseq
        %v2919 = vshrl.u32 %v2918, 7
        %v2920 = vsub.s32 %v2917, %v2919
        %v2921 = vrot.slane %v2907, %v2920
        %v2922 = vcombine.low %v2914, %v2921
        %v2923 = vcombine.low %v1766, %v1770
        %v2924 = vcombine.low %v1774, %v1778
        %v2925 = vcombine.low %v1782, %v1786
        %v2926 = vcombine.low %v1790, %v1794
        %v2928 = vunpack.c.l.s4 1966171168
        %v2929 = vunpack.c.0.s8 %v2928
        %v2930 = vlaneseq
        %v2931 = vshrl.u32 %v2930, 7
        %v2932 = vsub.s32 %v2929, %v2931
        %v2933 = vrot.slane %v2923, %v2932
        %v2935 = vunpack.c.l.s4 1966171168
        %v2936 = vunpack.c.0.s8 %v2935
        %v2937 = vlaneseq
        %v2938 = vshrl.u32 %v2937, 7
        %v2939 = vsub.s32 %v2936, %v2938
        %v2940 = vrot.slane %v2924, %v2939
        %v2942 = vunpack.c.l.s4 1966171168
        %v2943 = vunpack.c.0.s8 %v2942
        %v2944 = vlaneseq
        %v2945 = vshrl.u32 %v2944, 7
        %v2946 = vsub.s32 %v2943, %v2945
        %v2947 = vrot.slane %v2925, %v2946
        %v2949 = vunpack.c.l.s4 1966171168
        %v2950 = vunpack.c.0.s8 %v2949
        %v2951 = vlaneseq
        %v2952 = vshrl.u32 %v2951, 7
        %v2953 = vsub.s32 %v2950, %v2952
        %v2954 = vrot.slane %v2926, %v2953
        %v2955 = vcombine.low %v2933, %v2940
        %v2956 = vcombine.low %v2947, %v2954
        %v2958 = vunpack.c.l.s4 1966171168
        %v2959 = vunpack.c.0.s8 %v2958
        %v2960 = vlaneseq
        %v2961 = vshrl.u32 %v2960, 7
        %v2962 = vsub.s32 %v2959, %v2961
        %v2963 = vrot.slane %v2955, %v2962
        %v2965 = vunpack.c.l.s4 1966171168
        %v2966 = vunpack.c.0.s8 %v2965
        %v2967 = vlaneseq
        %v2968 = vshrl.u32 %v2967, 7
        %v2969 = vsub.s32 %v2966, %v2968
        %v2970 = vrot.slane %v2956, %v2969
        %v2971 = vcombine.low %v2963, %v2970
        %v2972 = vcombine.low %v1798, %v1802
        %v2973 = vcombine.low %v1806, %v1810
        %v2974 = vcombine.low %v1814, %v1818
        %v2975 = vcombine.low %v1822, %v1826
        %v2977 = vunpack.c.l.s4 1966171168
        %v2978 = vunpack.c.0.s8 %v2977
        %v2979 = vlaneseq
        %v2980 = vshrl.u32 %v2979, 7
        %v2981 = vsub.s32 %v2978, %v2980
        %v2982 = vrot.slane %v2972, %v2981
        %v2984 = vunpack.c.l.s4 1966171168
        %v2985 = vunpack.c.0.s8 %v2984
        %v2986 = vlaneseq
        %v2987 = vshrl.u32 %v2986, 7
        %v2988 = vsub.s32 %v2985, %v2987
        %v2989 = vrot.slane %v2973, %v2988
        %v2991 = vunpack.c.l.s4 1966171168
        %v2992 = vunpack.c.0.s8 %v2991
        %v2993 = vlaneseq
        %v2994 = vshrl.u32 %v2993, 7
        %v2995 = vsub.s32 %v2992, %v2994
        %v2996 = vrot.slane %v2974, %v2995
        %v2998 = vunpack.c.l.s4 1966171168
        %v2999 = vunpack.c.0.s8 %v2998
        %v3000 = vlaneseq
        %v3001 = vshrl.u32 %v3000, 7
        %v3002 = vsub.s32 %v2999, %v3001
        %v3003 = vrot.slane %v2975, %v3002
        %v3004 = vcombine.low %v2982, %v2989
        %v3005 = vcombine.low %v2996, %v3003
        %v3007 = vunpack.c.l.s4 1966171168
        %v3008 = vunpack.c.0.s8 %v3007
        %v3009 = vlaneseq
        %v3010 = vshrl.u32 %v3009, 7
        %v3011 = vsub.s32 %v3008, %v3010
        %v3012 = vrot.slane %v3004, %v3011
        %v3014 = vunpack.c.l.s4 1966171168
        %v3015 = vunpack.c.0.s8 %v3014
        %v3016 = vlaneseq
        %v3017 = vshrl.u32 %v3016, 7
        %v3018 = vsub.s32 %v3015, %v3017
        %v3019 = vrot.slane %v3005, %v3018
        %v3020 = vcombine.low %v3012, %v3019
        %v3021 = vcombine.low %v1830, %v1834
        %v3022 = vcombine.low %v1838, %v1842
        %v3023 = vcombine.low %v1846, %v1850
        %v3024 = vcombine.low %v1854, %v1858
        %v3026 = vunpack.c.l.s4 1966171168
        %v3027 = vunpack.c.0.s8 %v3026
        %v3028 = vlaneseq
        %v3029 = vshrl.u32 %v3028, 7
        %v3030 = vsub.s32 %v3027, %v3029
        %v3031 = vrot.slane %v3021, %v3030
        %v3033 = vunpack.c.l.s4 1966171168
        %v3034 = vunpack.c.0.s8 %v3033
        %v3035 = vlaneseq
        %v3036 = vshrl.u32 %v3035, 7
        %v3037 = vsub.s32 %v3034, %v3036
        %v3038 = vrot.slane %v3022, %v3037
        %v3040 = vunpack.c.l.s4 1966171168
        %v3041 = vunpack.c.0.s8 %v3040
        %v3042 = vlaneseq
        %v3043 = vshrl.u32 %v3042, 7
        %v3044 = vsub.s32 %v3041, %v3043
        %v3045 = vrot.slane %v3023, %v3044
        %v3047 = vunpack.c.l.s4 1966171168
        %v3048 = vunpack.c.0.s8 %v3047
        %v3049 = vlaneseq
        %v3050 = vshrl.u32 %v3049, 7
        %v3051 = vsub.s32 %v3048, %v3050
        %v3052 = vrot.slane %v3024, %v3051
        %v3053 = vcombine.low %v3031, %v3038
        %v3054 = vcombine.low %v3045, %v3052
        %v3056 = vunpack.c.l.s4 1966171168
        %v3057 = vunpack.c.0.s8 %v3056
        %v3058 = vlaneseq
        %v3059 = vshrl.u32 %v3058, 7
        %v3060 = vsub.s32 %v3057, %v3059
        %v3061 = vrot.slane %v3053, %v3060
        %v3063 = vunpack.c.l.s4 1966171168
        %v3064 = vunpack.c.0.s8 %v3063
        %v3065 = vlaneseq
        %v3066 = vshrl.u32 %v3065, 7
        %v3067 = vsub.s32 %v3064, %v3066
        %v3068 = vrot.slane %v3054, %v3067
        %v3069 = vcombine.low %v3061, %v3068
        %v3070 = vcombine.low %v1862, %v1866
        %v3071 = vcombine.low %v1870, %v1874
        %v3072 = vcombine.low %v1878, %v1882
        %v3073 = vcombine.low %v1886, %v1890
        %v3075 = vunpack.c.l.s4 1966171168
        %v3076 = vunpack.c.0.s8 %v3075
        %v3077 = vlaneseq
        %v3078 = vshrl.u32 %v3077, 7
        %v3079 = vsub.s32 %v3076, %v3078
        %v3080 = vrot.slane %v3070, %v3079
        %v3082 = vunpack.c.l.s4 1966171168
        %v3083 = vunpack.c.0.s8 %v3082
        %v3084 = vlaneseq
        %v3085 = vshrl.u32 %v3084, 7
        %v3086 = vsub.s32 %v3083, %v3085
        %v3087 = vrot.slane %v3071, %v3086
        %v3089 = vunpack.c.l.s4 1966171168
        %v3090 = vunpack.c.0.s8 %v3089
        %v3091 = vlaneseq
        %v3092 = vshrl.u32 %v3091, 7
        %v3093 = vsub.s32 %v3090, %v3092
        %v3094 = vrot.slane %v3072, %v3093
        %v3096 = vunpack.c.l.s4 1966171168
        %v3097 = vunpack.c.0.s8 %v3096
        %v3098 = vlaneseq
        %v3099 = vshrl.u32 %v3098, 7
        %v3100 = vsub.s32 %v3097, %v3099
        %v3101 = vrot.slane %v3073, %v3100
        %v3102 = vcombine.low %v3080, %v3087
        %v3103 = vcombine.low %v3094, %v3101
        %v3105 = vunpack.c.l.s4 1966171168
        %v3106 = vunpack.c.0.s8 %v3105
        %v3107 = vlaneseq
        %v3108 = vshrl.u32 %v3107, 7
        %v3109 = vsub.s32 %v3106, %v3108
        %v3110 = vrot.slane %v3102, %v3109
        %v3112 = vunpack.c.l.s4 1966171168
        %v3113 = vunpack.c.0.s8 %v3112
        %v3114 = vlaneseq
        %v3115 = vshrl.u32 %v3114, 7
        %v3116 = vsub.s32 %v3113, %v3115
        %v3117 = vrot.slane %v3103, %v3116
        %v3118 = vcombine.low %v3110, %v3117
        %v3119 = vcombine.low %v1894, %v1898
        %v3120 = vcombine.low %v1902, %v1906
        %v3121 = vcombine.low %v1910, %v1914
        %v3122 = vcombine.low %v1918, %v1922
        %v3124 = vunpack.c.l.s4 1966171168
        %v3125 = vunpack.c.0.s8 %v3124
        %v3126 = vlaneseq
        %v3127 = vshrl.u32 %v3126, 7
        %v3128 = vsub.s32 %v3125, %v3127
        %v3129 = vrot.slane %v3119, %v3128
        %v3131 = vunpack.c.l.s4 1966171168
        %v3132 = vunpack.c.0.s8 %v3131
        %v3133 = vlaneseq
        %v3134 = vshrl.u32 %v3133, 7
        %v3135 = vsub.s32 %v3132, %v3134
        %v3136 = vrot.slane %v3120, %v3135
        %v3138 = vunpack.c.l.s4 1966171168
        %v3139 = vunpack.c.0.s8 %v3138
        %v3140 = vlaneseq
        %v3141 = vshrl.u32 %v3140, 7
        %v3142 = vsub.s32 %v3139, %v3141
        %v3143 = vrot.slane %v3121, %v3142
        %v3145 = vunpack.c.l.s4 1966171168
        %v3146 = vunpack.c.0.s8 %v3145
        %v3147 = vlaneseq
        %v3148 = vshrl.u32 %v3147, 7
        %v3149 = vsub.s32 %v3146, %v3148
        %v3150 = vrot.slane %v3122, %v3149
        %v3151 = vcombine.low %v3129, %v3136
        %v3152 = vcombine.low %v3143, %v3150
        %v3154 = vunpack.c.l.s4 1966171168
        %v3155 = vunpack.c.0.s8 %v3154
        %v3156 = vlaneseq
        %v3157 = vshrl.u32 %v3156, 7
        %v3158 = vsub.s32 %v3155, %v3157
        %v3159 = vrot.slane %v3151, %v3158
        %v3161 = vunpack.c.l.s4 1966171168
        %v3162 = vunpack.c.0.s8 %v3161
        %v3163 = vlaneseq
        %v3164 = vshrl.u32 %v3163, 7
        %v3165 = vsub.s32 %v3162, %v3164
        %v3166 = vrot.slane %v3152, %v3165
        %v3167 = vcombine.low %v3159, %v3166
        %v3168 = vcombine.low %v1926, %v1930
        %v3169 = vcombine.low %v1934, %v1938
        %v3170 = vcombine.low %v1942, %v1946
        %v3171 = vcombine.low %v1950, %v1954
        %v3173 = vunpack.c.l.s4 1966171168
        %v3174 = vunpack.c.0.s8 %v3173
        %v3175 = vlaneseq
        %v3176 = vshrl.u32 %v3175, 7
        %v3177 = vsub.s32 %v3174, %v3176
        %v3178 = vrot.slane %v3168, %v3177
        %v3180 = vunpack.c.l.s4 1966171168
        %v3181 = vunpack.c.0.s8 %v3180
        %v3182 = vlaneseq
        %v3183 = vshrl.u32 %v3182, 7
        %v3184 = vsub.s32 %v3181, %v3183
        %v3185 = vrot.slane %v3169, %v3184
        %v3187 = vunpack.c.l.s4 1966171168
        %v3188 = vunpack.c.0.s8 %v3187
        %v3189 = vlaneseq
        %v3190 = vshrl.u32 %v3189, 7
        %v3191 = vsub.s32 %v3188, %v3190
        %v3192 = vrot.slane %v3170, %v3191
        %v3194 = vunpack.c.l.s4 1966171168
        %v3195 = vunpack.c.0.s8 %v3194
        %v3196 = vlaneseq
        %v3197 = vshrl.u32 %v3196, 7
        %v3198 = vsub.s32 %v3195, %v3197
        %v3199 = vrot.slane %v3171, %v3198
        %v3200 = vcombine.low %v3178, %v3185
        %v3201 = vcombine.low %v3192, %v3199
        %v3203 = vunpack.c.l.s4 1966171168
        %v3204 = vunpack.c.0.s8 %v3203
        %v3205 = vlaneseq
        %v3206 = vshrl.u32 %v3205, 7
        %v3207 = vsub.s32 %v3204, %v3206
        %v3208 = vrot.slane %v3200, %v3207
        %v3210 = vunpack.c.l.s4 1966171168
        %v3211 = vunpack.c.0.s8 %v3210
        %v3212 = vlaneseq
        %v3213 = vshrl.u32 %v3212, 7
        %v3214 = vsub.s32 %v3211, %v3213
        %v3215 = vrot.slane %v3201, %v3214
        %v3216 = vcombine.low %v3208, %v3215
        %v3217 = vcombine.low %v1958, %v1962
        %v3218 = vcombine.low %v1966, %v1970
        %v3219 = vcombine.low %v1974, %v1978
        %v3220 = vcombine.low %v1982, %v1986
        %v3222 = vunpack.c.l.s4 1966171168
        %v3223 = vunpack.c.0.s8 %v3222
        %v3224 = vlaneseq
        %v3225 = vshrl.u32 %v3224, 7
        %v3226 = vsub.s32 %v3223, %v3225
        %v3227 = vrot.slane %v3217, %v3226
        %v3229 = vunpack.c.l.s4 1966171168
        %v3230 = vunpack.c.0.s8 %v3229
        %v3231 = vlaneseq
        %v3232 = vshrl.u32 %v3231, 7
        %v3233 = vsub.s32 %v3230, %v3232
        %v3234 = vrot.slane %v3218, %v3233
        %v3236 = vunpack.c.l.s4 1966171168
        %v3237 = vunpack.c.0.s8 %v3236
        %v3238 = vlaneseq
        %v3239 = vshrl.u32 %v3238, 7
        %v3240 = vsub.s32 %v3237, %v3239
        %v3241 = vrot.slane %v3219, %v3240
        %v3243 = vunpack.c.l.s4 1966171168
        %v3244 = vunpack.c.0.s8 %v3243
        %v3245 = vlaneseq
        %v3246 = vshrl.u32 %v3245, 7
        %v3247 = vsub.s32 %v3244, %v3246
        %v3248 = vrot.slane %v3220, %v3247
        %v3249 = vcombine.low %v3227, %v3234
        %v3250 = vcombine.low %v3241, %v3248
        %v3252 = vunpack.c.l.s4 1966171168
        %v3253 = vunpack.c.0.s8 %v3252
        %v3254 = vlaneseq
        %v3255 = vshrl.u32 %v3254, 7
        %v3256 = vsub.s32 %v3253, %v3255
        %v3257 = vrot.slane %v3249, %v3256
        %v3259 = vunpack.c.l.s4 1966171168
        %v3260 = vunpack.c.0.s8 %v3259
        %v3261 = vlaneseq
        %v3262 = vshrl.u32 %v3261, 7
        %v3263 = vsub.s32 %v3260, %v3262
        %v3264 = vrot.slane %v3250, %v3263
        %v3265 = vcombine.low %v3257, %v3264
        %v3266 = vcombine.low %v1990, %v1994
        %v3267 = vcombine.low %v1998, %v2002
        %v3268 = vcombine.low %v2006, %v2010
        %v3269 = vcombine.low %v2014, %v2018
        %v3271 = vunpack.c.l.s4 1966171168
        %v3272 = vunpack.c.0.s8 %v3271
        %v3273 = vlaneseq
        %v3274 = vshrl.u32 %v3273, 7
        %v3275 = vsub.s32 %v3272, %v3274
        %v3276 = vrot.slane %v3266, %v3275
        %v3278 = vunpack.c.l.s4 1966171168
        %v3279 = vunpack.c.0.s8 %v3278
        %v3280 = vlaneseq
        %v3281 = vshrl.u32 %v3280, 7
        %v3282 = vsub.s32 %v3279, %v3281
        %v3283 = vrot.slane %v3267, %v3282
        %v3285 = vunpack.c.l.s4 1966171168
        %v3286 = vunpack.c.0.s8 %v3285
        %v3287 = vlaneseq
        %v3288 = vshrl.u32 %v3287, 7
        %v3289 = vsub.s32 %v3286, %v3288
        %v3290 = vrot.slane %v3268, %v3289
        %v3292 = vunpack.c.l.s4 1966171168
        %v3293 = vunpack.c.0.s8 %v3292
        %v3294 = vlaneseq
        %v3295 = vshrl.u32 %v3294, 7
        %v3296 = vsub.s32 %v3293, %v3295
        %v3297 = vrot.slane %v3269, %v3296
        %v3298 = vcombine.low %v3276, %v3283
        %v3299 = vcombine.low %v3290, %v3297
        %v3301 = vunpack.c.l.s4 1966171168
        %v3302 = vunpack.c.0.s8 %v3301
        %v3303 = vlaneseq
        %v3304 = vshrl.u32 %v3303, 7
        %v3305 = vsub.s32 %v3302, %v3304
        %v3306 = vrot.slane %v3298, %v3305
        %v3308 = vunpack.c.l.s4 1966171168
        %v3309 = vunpack.c.0.s8 %v3308
        %v3310 = vlaneseq
        %v3311 = vshrl.u32 %v3310, 7
        %v3312 = vsub.s32 %v3309, %v3311
        %v3313 = vrot.slane %v3299, %v3312
        %v3314 = vcombine.low %v3306, %v3313
        %v3315 = vcombine.low %v2022, %v2026
        %v3316 = vcombine.low %v2030, %v2034
        %v3317 = vcombine.low %v2038, %v2042
        %v3318 = vcombine.low %v2046, %v2050
        %v3320 = vunpack.c.l.s4 1966171168
        %v3321 = vunpack.c.0.s8 %v3320
        %v3322 = vlaneseq
        %v3323 = vshrl.u32 %v3322, 7
        %v3324 = vsub.s32 %v3321, %v3323
        %v3325 = vrot.slane %v3315, %v3324
        %v3327 = vunpack.c.l.s4 1966171168
        %v3328 = vunpack.c.0.s8 %v3327
        %v3329 = vlaneseq
        %v3330 = vshrl.u32 %v3329, 7
        %v3331 = vsub.s32 %v3328, %v3330
        %v3332 = vrot.slane %v3316, %v3331
        %v3334 = vunpack.c.l.s4 1966171168
        %v3335 = vunpack.c.0.s8 %v3334
        %v3336 = vlaneseq
        %v3337 = vshrl.u32 %v3336, 7
        %v3338 = vsub.s32 %v3335, %v3337
        %v3339 = vrot.slane %v3317, %v3338
        %v3341 = vunpack.c.l.s4 1966171168
        %v3342 = vunpack.c.0.s8 %v3341
        %v3343 = vlaneseq
        %v3344 = vshrl.u32 %v3343, 7
        %v3345 = vsub.s32 %v3342, %v3344
        %v3346 = vrot.slane %v3318, %v3345
        %v3347 = vcombine.low %v3325, %v3332
        %v3348 = vcombine.low %v3339, %v3346
        %v3350 = vunpack.c.l.s4 1966171168
        %v3351 = vunpack.c.0.s8 %v3350
        %v3352 = vlaneseq
        %v3353 = vshrl.u32 %v3352, 7
        %v3354 = vsub.s32 %v3351, %v3353
        %v3355 = vrot.slane %v3347, %v3354
        %v3357 = vunpack.c.l.s4 1966171168
        %v3358 = vunpack.c.0.s8 %v3357
        %v3359 = vlaneseq
        %v3360 = vshrl.u32 %v3359, 7
        %v3361 = vsub.s32 %v3358, %v3360
        %v3362 = vrot.slane %v3348, %v3361
        %v3363 = vcombine.low %v3355, %v3362
        %v3364 = vcombine.low %v2054, %v2058
        %v3365 = vcombine.low %v2062, %v2066
        %v3366 = vcombine.low %v2070, %v2074
        %v3367 = vcombine.low %v2078, %v2082
        %v3369 = vunpack.c.l.s4 1966171168
        %v3370 = vunpack.c.0.s8 %v3369
        %v3371 = vlaneseq
        %v3372 = vshrl.u32 %v3371, 7
        %v3373 = vsub.s32 %v3370, %v3372
        %v3374 = vrot.slane %v3364, %v3373
        %v3376 = vunpack.c.l.s4 1966171168
        %v3377 = vunpack.c.0.s8 %v3376
        %v3378 = vlaneseq
        %v3379 = vshrl.u32 %v3378, 7
        %v3380 = vsub.s32 %v3377, %v3379
        %v3381 = vrot.slane %v3365, %v3380
        %v3383 = vunpack.c.l.s4 1966171168
        %v3384 = vunpack.c.0.s8 %v3383
        %v3385 = vlaneseq
        %v3386 = vshrl.u32 %v3385, 7
        %v3387 = vsub.s32 %v3384, %v3386
        %v3388 = vrot.slane %v3366, %v3387
        %v3390 = vunpack.c.l.s4 1966171168
        %v3391 = vunpack.c.0.s8 %v3390
        %v3392 = vlaneseq
        %v3393 = vshrl.u32 %v3392, 7
        %v3394 = vsub.s32 %v3391, %v3393
        %v3395 = vrot.slane %v3367, %v3394
        %v3396 = vcombine.low %v3374, %v3381
        %v3397 = vcombine.low %v3388, %v3395
        %v3399 = vunpack.c.l.s4 1966171168
        %v3400 = vunpack.c.0.s8 %v3399
        %v3401 = vlaneseq
        %v3402 = vshrl.u32 %v3401, 7
        %v3403 = vsub.s32 %v3400, %v3402
        %v3404 = vrot.slane %v3396, %v3403
        %v3406 = vunpack.c.l.s4 1966171168
        %v3407 = vunpack.c.0.s8 %v3406
        %v3408 = vlaneseq
        %v3409 = vshrl.u32 %v3408, 7
        %v3410 = vsub.s32 %v3407, %v3409
        %v3411 = vrot.slane %v3397, %v3410
        %v3412 = vcombine.low %v3404, %v3411
        %v3413 = vcombine.low %v2086, %v2090
        %v3414 = vcombine.low %v2094, %v2098
        %v3415 = vcombine.low %v2102, %v2106
        %v3416 = vcombine.low %v2110, %v2114
        %v3418 = vunpack.c.l.s4 1966171168
        %v3419 = vunpack.c.0.s8 %v3418
        %v3420 = vlaneseq
        %v3421 = vshrl.u32 %v3420, 7
        %v3422 = vsub.s32 %v3419, %v3421
        %v3423 = vrot.slane %v3413, %v3422
        %v3425 = vunpack.c.l.s4 1966171168
        %v3426 = vunpack.c.0.s8 %v3425
        %v3427 = vlaneseq
        %v3428 = vshrl.u32 %v3427, 7
        %v3429 = vsub.s32 %v3426, %v3428
        %v3430 = vrot.slane %v3414, %v3429
        %v3432 = vunpack.c.l.s4 1966171168
        %v3433 = vunpack.c.0.s8 %v3432
        %v3434 = vlaneseq
        %v3435 = vshrl.u32 %v3434, 7
        %v3436 = vsub.s32 %v3433, %v3435
        %v3437 = vrot.slane %v3415, %v3436
        %v3439 = vunpack.c.l.s4 1966171168
        %v3440 = vunpack.c.0.s8 %v3439
        %v3441 = vlaneseq
        %v3442 = vshrl.u32 %v3441, 7
        %v3443 = vsub.s32 %v3440, %v3442
        %v3444 = vrot.slane %v3416, %v3443
        %v3445 = vcombine.low %v3423, %v3430
        %v3446 = vcombine.low %v3437, %v3444
        %v3448 = vunpack.c.l.s4 1966171168
        %v3449 = vunpack.c.0.s8 %v3448
        %v3450 = vlaneseq
        %v3451 = vshrl.u32 %v3450, 7
        %v3452 = vsub.s32 %v3449, %v3451
        %v3453 = vrot.slane %v3445, %v3452
        %v3455 = vunpack.c.l.s4 1966171168
        %v3456 = vunpack.c.0.s8 %v3455
        %v3457 = vlaneseq
        %v3458 = vshrl.u32 %v3457, 7
        %v3459 = vsub.s32 %v3456, %v3458
        %v3460 = vrot.slane %v3446, %v3459
        %v3461 = vcombine.low %v3453, %v3460
        %v3462 = vcombine.low %v2118, %v2122
        %v3463 = vcombine.low %v2126, %v2130
        %v3464 = vcombine.low %v2134, %v2138
        %v3465 = vcombine.low %v2142, %v2146
        %v3467 = vunpack.c.l.s4 1966171168
        %v3468 = vunpack.c.0.s8 %v3467
        %v3469 = vlaneseq
        %v3470 = vshrl.u32 %v3469, 7
        %v3471 = vsub.s32 %v3468, %v3470
        %v3472 = vrot.slane %v3462, %v3471
        %v3474 = vunpack.c.l.s4 1966171168
        %v3475 = vunpack.c.0.s8 %v3474
        %v3476 = vlaneseq
        %v3477 = vshrl.u32 %v3476, 7
        %v3478 = vsub.s32 %v3475, %v3477
        %v3479 = vrot.slane %v3463, %v3478
        %v3481 = vunpack.c.l.s4 1966171168
        %v3482 = vunpack.c.0.s8 %v3481
        %v3483 = vlaneseq
        %v3484 = vshrl.u32 %v3483, 7
        %v3485 = vsub.s32 %v3482, %v3484
        %v3486 = vrot.slane %v3464, %v3485
        %v3488 = vunpack.c.l.s4 1966171168
        %v3489 = vunpack.c.0.s8 %v3488
        %v3490 = vlaneseq
        %v3491 = vshrl.u32 %v3490, 7
        %v3492 = vsub.s32 %v3489, %v3491
        %v3493 = vrot.slane %v3465, %v3492
        %v3494 = vcombine.low %v3472, %v3479
        %v3495 = vcombine.low %v3486, %v3493
        %v3497 = vunpack.c.l.s4 1966171168
        %v3498 = vunpack.c.0.s8 %v3497
        %v3499 = vlaneseq
        %v3500 = vshrl.u32 %v3499, 7
        %v3501 = vsub.s32 %v3498, %v3500
        %v3502 = vrot.slane %v3494, %v3501
        %v3504 = vunpack.c.l.s4 1966171168
        %v3505 = vunpack.c.0.s8 %v3504
        %v3506 = vlaneseq
        %v3507 = vshrl.u32 %v3506, 7
        %v3508 = vsub.s32 %v3505, %v3507
        %v3509 = vrot.slane %v3495, %v3508
        %v3510 = vcombine.low %v3502, %v3509
        %v3511 = vcombine.low %v2150, %v2154
        %v3512 = vcombine.low %v2158, %v2162
        %v3513 = vcombine.low %v2166, %v2170
        %v3514 = vcombine.low %v2174, %v2178
        %v3516 = vunpack.c.l.s4 1966171168
        %v3517 = vunpack.c.0.s8 %v3516
        %v3518 = vlaneseq
        %v3519 = vshrl.u32 %v3518, 7
        %v3520 = vsub.s32 %v3517, %v3519
        %v3521 = vrot.slane %v3511, %v3520
        %v3523 = vunpack.c.l.s4 1966171168
        %v3524 = vunpack.c.0.s8 %v3523
        %v3525 = vlaneseq
        %v3526 = vshrl.u32 %v3525, 7
        %v3527 = vsub.s32 %v3524, %v3526
        %v3528 = vrot.slane %v3512, %v3527
        %v3530 = vunpack.c.l.s4 1966171168
        %v3531 = vunpack.c.0.s8 %v3530
        %v3532 = vlaneseq
        %v3533 = vshrl.u32 %v3532, 7
        %v3534 = vsub.s32 %v3531, %v3533
        %v3535 = vrot.slane %v3513, %v3534
        %v3537 = vunpack.c.l.s4 1966171168
        %v3538 = vunpack.c.0.s8 %v3537
        %v3539 = vlaneseq
        %v3540 = vshrl.u32 %v3539, 7
        %v3541 = vsub.s32 %v3538, %v3540
        %v3542 = vrot.slane %v3514, %v3541
        %v3543 = vcombine.low %v3521, %v3528
        %v3544 = vcombine.low %v3535, %v3542
        %v3546 = vunpack.c.l.s4 1966171168
        %v3547 = vunpack.c.0.s8 %v3546
        %v3548 = vlaneseq
        %v3549 = vshrl.u32 %v3548, 7
        %v3550 = vsub.s32 %v3547, %v3549
        %v3551 = vrot.slane %v3543, %v3550
        %v3553 = vunpack.c.l.s4 1966171168
        %v3554 = vunpack.c.0.s8 %v3553
        %v3555 = vlaneseq
        %v3556 = vshrl.u32 %v3555, 7
        %v3557 = vsub.s32 %v3554, %v3556
        %v3558 = vrot.slane %v3544, %v3557
        %v3559 = vcombine.low %v3551, %v3558
        %v3560 = vcombine.low %v2182, %v2186
        %v3561 = vcombine.low %v2190, %v2194
        %v3562 = vcombine.low %v2198, %v2202
        %v3563 = vcombine.low %v2206, %v2210
        %v3565 = vunpack.c.l.s4 1966171168
        %v3566 = vunpack.c.0.s8 %v3565
        %v3567 = vlaneseq
        %v3568 = vshrl.u32 %v3567, 7
        %v3569 = vsub.s32 %v3566, %v3568
        %v3570 = vrot.slane %v3560, %v3569
        %v3572 = vunpack.c.l.s4 1966171168
        %v3573 = vunpack.c.0.s8 %v3572
        %v3574 = vlaneseq
        %v3575 = vshrl.u32 %v3574, 7
        %v3576 = vsub.s32 %v3573, %v3575
        %v3577 = vrot.slane %v3561, %v3576
        %v3579 = vunpack.c.l.s4 1966171168
        %v3580 = vunpack.c.0.s8 %v3579
        %v3581 = vlaneseq
        %v3582 = vshrl.u32 %v3581, 7
        %v3583 = vsub.s32 %v3580, %v3582
        %v3584 = vrot.slane %v3562, %v3583
        %v3586 = vunpack.c.l.s4 1966171168
        %v3587 = vunpack.c.0.s8 %v3586
        %v3588 = vlaneseq
        %v3589 = vshrl.u32 %v3588, 7
        %v3590 = vsub.s32 %v3587, %v3589
        %v3591 = vrot.slane %v3563, %v3590
        %v3592 = vcombine.low %v3570, %v3577
        %v3593 = vcombine.low %v3584, %v3591
        %v3595 = vunpack.c.l.s4 1966171168
        %v3596 = vunpack.c.0.s8 %v3595
        %v3597 = vlaneseq
        %v3598 = vshrl.u32 %v3597, 7
        %v3599 = vsub.s32 %v3596, %v3598
        %v3600 = vrot.slane %v3592, %v3599
        %v3602 = vunpack.c.l.s4 1966171168
        %v3603 = vunpack.c.0.s8 %v3602
        %v3604 = vlaneseq
        %v3605 = vshrl.u32 %v3604, 7
        %v3606 = vsub.s32 %v3603, %v3605
        %v3607 = vrot.slane %v3593, %v3606
        %v3608 = vcombine.low %v3600, %v3607
        %v3609 = vcombine.low %v2214, %v2218
        %v3610 = vcombine.low %v2222, %v2226
        %v3611 = vcombine.low %v2230, %v2234
        %v3612 = vcombine.low %v2238, %v2242
        %v3614 = vunpack.c.l.s4 1966171168
        %v3615 = vunpack.c.0.s8 %v3614
        %v3616 = vlaneseq
        %v3617 = vshrl.u32 %v3616, 7
        %v3618 = vsub.s32 %v3615, %v3617
        %v3619 = vrot.slane %v3609, %v3618
        %v3621 = vunpack.c.l.s4 1966171168
        %v3622 = vunpack.c.0.s8 %v3621
        %v3623 = vlaneseq
        %v3624 = vshrl.u32 %v3623, 7
        %v3625 = vsub.s32 %v3622, %v3624
        %v3626 = vrot.slane %v3610, %v3625
        %v3628 = vunpack.c.l.s4 1966171168
        %v3629 = vunpack.c.0.s8 %v3628
        %v3630 = vlaneseq
        %v3631 = vshrl.u32 %v3630, 7
        %v3632 = vsub.s32 %v3629, %v3631
        %v3633 = vrot.slane %v3611, %v3632
        %v3635 = vunpack.c.l.s4 1966171168
        %v3636 = vunpack.c.0.s8 %v3635
        %v3637 = vlaneseq
        %v3638 = vshrl.u32 %v3637, 7
        %v3639 = vsub.s32 %v3636, %v3638
        %v3640 = vrot.slane %v3612, %v3639
        %v3641 = vcombine.low %v3619, %v3626
        %v3642 = vcombine.low %v3633, %v3640
        %v3644 = vunpack.c.l.s4 1966171168
        %v3645 = vunpack.c.0.s8 %v3644
        %v3646 = vlaneseq
        %v3647 = vshrl.u32 %v3646, 7
        %v3648 = vsub.s32 %v3645, %v3647
        %v3649 = vrot.slane %v3641, %v3648
        %v3651 = vunpack.c.l.s4 1966171168
        %v3652 = vunpack.c.0.s8 %v3651
        %v3653 = vlaneseq
        %v3654 = vshrl.u32 %v3653, 7
        %v3655 = vsub.s32 %v3652, %v3654
        %v3656 = vrot.slane %v3642, %v3655
        %v3657 = vcombine.low %v3649, %v3656
        %v3658 = vcombine.low %v2246, %v2250
        %v3659 = vcombine.low %v2254, %v2258
        %v3660 = vcombine.low %v2262, %v2266
        %v3661 = vcombine.low %v2270, %v2274
        %v3663 = vunpack.c.l.s4 1966171168
        %v3664 = vunpack.c.0.s8 %v3663
        %v3665 = vlaneseq
        %v3666 = vshrl.u32 %v3665, 7
        %v3667 = vsub.s32 %v3664, %v3666
        %v3668 = vrot.slane %v3658, %v3667
        %v3670 = vunpack.c.l.s4 1966171168
        %v3671 = vunpack.c.0.s8 %v3670
        %v3672 = vlaneseq
        %v3673 = vshrl.u32 %v3672, 7
        %v3674 = vsub.s32 %v3671, %v3673
        %v3675 = vrot.slane %v3659, %v3674
        %v3677 = vunpack.c.l.s4 1966171168
        %v3678 = vunpack.c.0.s8 %v3677
        %v3679 = vlaneseq
        %v3680 = vshrl.u32 %v3679, 7
        %v3681 = vsub.s32 %v3678, %v3680
        %v3682 = vrot.slane %v3660, %v3681
        %v3684 = vunpack.c.l.s4 1966171168
        %v3685 = vunpack.c.0.s8 %v3684
        %v3686 = vlaneseq
        %v3687 = vshrl.u32 %v3686, 7
        %v3688 = vsub.s32 %v3685, %v3687
        %v3689 = vrot.slane %v3661, %v3688
        %v3690 = vcombine.low %v3668, %v3675
        %v3691 = vcombine.low %v3682, %v3689
        %v3693 = vunpack.c.l.s4 1966171168
        %v3694 = vunpack.c.0.s8 %v3693
        %v3695 = vlaneseq
        %v3696 = vshrl.u32 %v3695, 7
        %v3697 = vsub.s32 %v3694, %v3696
        %v3698 = vrot.slane %v3690, %v3697
        %v3700 = vunpack.c.l.s4 1966171168
        %v3701 = vunpack.c.0.s8 %v3700
        %v3702 = vlaneseq
        %v3703 = vshrl.u32 %v3702, 7
        %v3704 = vsub.s32 %v3701, %v3703
        %v3705 = vrot.slane %v3691, %v3704
        %v3706 = vcombine.low %v3698, %v3705
        %v3707 = vcombine.low %v2278, %v2282
        %v3708 = vcombine.low %v2286, %v2290
        %v3709 = vcombine.low %v2294, %v2298
        %v3710 = vcombine.low %v2302, %v2306
        %v3712 = vunpack.c.l.s4 1966171168
        %v3713 = vunpack.c.0.s8 %v3712
        %v3714 = vlaneseq
        %v3715 = vshrl.u32 %v3714, 7
        %v3716 = vsub.s32 %v3713, %v3715
        %v3717 = vrot.slane %v3707, %v3716
        %v3719 = vunpack.c.l.s4 1966171168
        %v3720 = vunpack.c.0.s8 %v3719
        %v3721 = vlaneseq
        %v3722 = vshrl.u32 %v3721, 7
        %v3723 = vsub.s32 %v3720, %v3722
        %v3724 = vrot.slane %v3708, %v3723
        %v3726 = vunpack.c.l.s4 1966171168
        %v3727 = vunpack.c.0.s8 %v3726
        %v3728 = vlaneseq
        %v3729 = vshrl.u32 %v3728, 7
        %v3730 = vsub.s32 %v3727, %v3729
        %v3731 = vrot.slane %v3709, %v3730
        %v3733 = vunpack.c.l.s4 1966171168
        %v3734 = vunpack.c.0.s8 %v3733
        %v3735 = vlaneseq
        %v3736 = vshrl.u32 %v3735, 7
        %v3737 = vsub.s32 %v3734, %v3736
        %v3738 = vrot.slane %v3710, %v3737
        %v3739 = vcombine.low %v3717, %v3724
        %v3740 = vcombine.low %v3731, %v3738
        %v3742 = vunpack.c.l.s4 1966171168
        %v3743 = vunpack.c.0.s8 %v3742
        %v3744 = vlaneseq
        %v3745 = vshrl.u32 %v3744, 7
        %v3746 = vsub.s32 %v3743, %v3745
        %v3747 = vrot.slane %v3739, %v3746
        %v3749 = vunpack.c.l.s4 1966171168
        %v3750 = vunpack.c.0.s8 %v3749
        %v3751 = vlaneseq
        %v3752 = vshrl.u32 %v3751, 7
        %v3753 = vsub.s32 %v3750, %v3752
        %v3754 = vrot.slane %v3740, %v3753
        %v3755 = vcombine.low %v3747, %v3754
        %v3756 = vcombine.low %v2310, %v2314
        %v3757 = vcombine.low %v2318, %v2322
        %v3758 = vcombine.low %v2326, %v2330
        %v3759 = vcombine.low %v2334, %v2338
        %v3761 = vunpack.c.l.s4 1966171168
        %v3762 = vunpack.c.0.s8 %v3761
        %v3763 = vlaneseq
        %v3764 = vshrl.u32 %v3763, 7
        %v3765 = vsub.s32 %v3762, %v3764
        %v3766 = vrot.slane %v3756, %v3765
        %v3768 = vunpack.c.l.s4 1966171168
        %v3769 = vunpack.c.0.s8 %v3768
        %v3770 = vlaneseq
        %v3771 = vshrl.u32 %v3770, 7
        %v3772 = vsub.s32 %v3769, %v3771
        %v3773 = vrot.slane %v3757, %v3772
        %v3775 = vunpack.c.l.s4 1966171168
        %v3776 = vunpack.c.0.s8 %v3775
        %v3777 = vlaneseq
        %v3778 = vshrl.u32 %v3777, 7
        %v3779 = vsub.s32 %v3776, %v3778
        %v3780 = vrot.slane %v3758, %v3779
        %v3782 = vunpack.c.l.s4 1966171168
        %v3783 = vunpack.c.0.s8 %v3782
        %v3784 = vlaneseq
        %v3785 = vshrl.u32 %v3784, 7
        %v3786 = vsub.s32 %v3783, %v3785
        %v3787 = vrot.slane %v3759, %v3786
        %v3788 = vcombine.low %v3766, %v3773
        %v3789 = vcombine.low %v3780, %v3787
        %v3791 = vunpack.c.l.s4 1966171168
        %v3792 = vunpack.c.0.s8 %v3791
        %v3793 = vlaneseq
        %v3794 = vshrl.u32 %v3793, 7
        %v3795 = vsub.s32 %v3792, %v3794
        %v3796 = vrot.slane %v3788, %v3795
        %v3798 = vunpack.c.l.s4 1966171168
        %v3799 = vunpack.c.0.s8 %v3798
        %v3800 = vlaneseq
        %v3801 = vshrl.u32 %v3800, 7
        %v3802 = vsub.s32 %v3799, %v3801
        %v3803 = vrot.slane %v3789, %v3802
        %v3804 = vcombine.low %v3796, %v3803
        %v3805 = vcombine.low %v2342, %v2346
        %v3806 = vcombine.low %v2350, %v2354
        %v3807 = vcombine.low %v2358, %v2362
        %v3808 = vcombine.low %v2366, %v2370
        %v3810 = vunpack.c.l.s4 1966171168
        %v3811 = vunpack.c.0.s8 %v3810
        %v3812 = vlaneseq
        %v3813 = vshrl.u32 %v3812, 7
        %v3814 = vsub.s32 %v3811, %v3813
        %v3815 = vrot.slane %v3805, %v3814
        %v3817 = vunpack.c.l.s4 1966171168
        %v3818 = vunpack.c.0.s8 %v3817
        %v3819 = vlaneseq
        %v3820 = vshrl.u32 %v3819, 7
        %v3821 = vsub.s32 %v3818, %v3820
        %v3822 = vrot.slane %v3806, %v3821
        %v3824 = vunpack.c.l.s4 1966171168
        %v3825 = vunpack.c.0.s8 %v3824
        %v3826 = vlaneseq
        %v3827 = vshrl.u32 %v3826, 7
        %v3828 = vsub.s32 %v3825, %v3827
        %v3829 = vrot.slane %v3807, %v3828
        %v3831 = vunpack.c.l.s4 1966171168
        %v3832 = vunpack.c.0.s8 %v3831
        %v3833 = vlaneseq
        %v3834 = vshrl.u32 %v3833, 7
        %v3835 = vsub.s32 %v3832, %v3834
        %v3836 = vrot.slane %v3808, %v3835
        %v3837 = vcombine.low %v3815, %v3822
        %v3838 = vcombine.low %v3829, %v3836
        %v3840 = vunpack.c.l.s4 1966171168
        %v3841 = vunpack.c.0.s8 %v3840
        %v3842 = vlaneseq
        %v3843 = vshrl.u32 %v3842, 7
        %v3844 = vsub.s32 %v3841, %v3843
        %v3845 = vrot.slane %v3837, %v3844
        %v3847 = vunpack.c.l.s4 1966171168
        %v3848 = vunpack.c.0.s8 %v3847
        %v3849 = vlaneseq
        %v3850 = vshrl.u32 %v3849, 7
        %v3851 = vsub.s32 %v3848, %v3850
        %v3852 = vrot.slane %v3838, %v3851
        %v3853 = vcombine.low %v3845, %v3852
        %v3854 = vcombine.low %v2374, %v2378
        %v3855 = vcombine.low %v2382, %v2386
        %v3856 = vcombine.low %v2390, %v2394
        %v3857 = vcombine.low %v2398, %v2402
        %v3859 = vunpack.c.l.s4 1966171168
        %v3860 = vunpack.c.0.s8 %v3859
        %v3861 = vlaneseq
        %v3862 = vshrl.u32 %v3861, 7
        %v3863 = vsub.s32 %v3860, %v3862
        %v3864 = vrot.slane %v3854, %v3863
        %v3866 = vunpack.c.l.s4 1966171168
        %v3867 = vunpack.c.0.s8 %v3866
        %v3868 = vlaneseq
        %v3869 = vshrl.u32 %v3868, 7
        %v3870 = vsub.s32 %v3867, %v3869
        %v3871 = vrot.slane %v3855, %v3870
        %v3873 = vunpack.c.l.s4 1966171168
        %v3874 = vunpack.c.0.s8 %v3873
        %v3875 = vlaneseq
        %v3876 = vshrl.u32 %v3875, 7
        %v3877 = vsub.s32 %v3874, %v3876
        %v3878 = vrot.slane %v3856, %v3877
        %v3880 = vunpack.c.l.s4 1966171168
        %v3881 = vunpack.c.0.s8 %v3880
        %v3882 = vlaneseq
        %v3883 = vshrl.u32 %v3882, 7
        %v3884 = vsub.s32 %v3881, %v3883
        %v3885 = vrot.slane %v3857, %v3884
        %v3886 = vcombine.low %v3864, %v3871
        %v3887 = vcombine.low %v3878, %v3885
        %v3889 = vunpack.c.l.s4 1966171168
        %v3890 = vunpack.c.0.s8 %v3889
        %v3891 = vlaneseq
        %v3892 = vshrl.u32 %v3891, 7
        %v3893 = vsub.s32 %v3890, %v3892
        %v3894 = vrot.slane %v3886, %v3893
        %v3896 = vunpack.c.l.s4 1966171168
        %v3897 = vunpack.c.0.s8 %v3896
        %v3898 = vlaneseq
        %v3899 = vshrl.u32 %v3898, 7
        %v3900 = vsub.s32 %v3897, %v3899
        %v3901 = vrot.slane %v3887, %v3900
        %v3902 = vcombine.low %v3894, %v3901
        %v3903 = vcombine.low %v2406, %v2410
        %v3904 = vcombine.low %v2414, %v2418
        %v3905 = vcombine.low %v2422, %v2426
        %v3906 = vcombine.low %v2430, %v2434
        %v3908 = vunpack.c.l.s4 1966171168
        %v3909 = vunpack.c.0.s8 %v3908
        %v3910 = vlaneseq
        %v3911 = vshrl.u32 %v3910, 7
        %v3912 = vsub.s32 %v3909, %v3911
        %v3913 = vrot.slane %v3903, %v3912
        %v3915 = vunpack.c.l.s4 1966171168
        %v3916 = vunpack.c.0.s8 %v3915
        %v3917 = vlaneseq
        %v3918 = vshrl.u32 %v3917, 7
        %v3919 = vsub.s32 %v3916, %v3918
        %v3920 = vrot.slane %v3904, %v3919
        %v3922 = vunpack.c.l.s4 1966171168
        %v3923 = vunpack.c.0.s8 %v3922
        %v3924 = vlaneseq
        %v3925 = vshrl.u32 %v3924, 7
        %v3926 = vsub.s32 %v3923, %v3925
        %v3927 = vrot.slane %v3905, %v3926
        %v3929 = vunpack.c.l.s4 1966171168
        %v3930 = vunpack.c.0.s8 %v3929
        %v3931 = vlaneseq
        %v3932 = vshrl.u32 %v3931, 7
        %v3933 = vsub.s32 %v3930, %v3932
        %v3934 = vrot.slane %v3906, %v3933
        %v3935 = vcombine.low %v3913, %v3920
        %v3936 = vcombine.low %v3927, %v3934
        %v3938 = vunpack.c.l.s4 1966171168
        %v3939 = vunpack.c.0.s8 %v3938
        %v3940 = vlaneseq
        %v3941 = vshrl.u32 %v3940, 7
        %v3942 = vsub.s32 %v3939, %v3941
        %v3943 = vrot.slane %v3935, %v3942
        %v3945 = vunpack.c.l.s4 1966171168
        %v3946 = vunpack.c.0.s8 %v3945
        %v3947 = vlaneseq
        %v3948 = vshrl.u32 %v3947, 7
        %v3949 = vsub.s32 %v3946, %v3948
        %v3950 = vrot.slane %v3936, %v3949
        %v3951 = vcombine.low %v3943, %v3950
        %v3952 = vcombine.low %v2438, %v2442
        %v3953 = vcombine.low %v2446, %v2450
        %v3954 = vcombine.low %v2454, %v2458
        %v3955 = vcombine.low %v2462, %v2466
        %v3957 = vunpack.c.l.s4 1966171168
        %v3958 = vunpack.c.0.s8 %v3957
        %v3959 = vlaneseq
        %v3960 = vshrl.u32 %v3959, 7
        %v3961 = vsub.s32 %v3958, %v3960
        %v3962 = vrot.slane %v3952, %v3961
        %v3964 = vunpack.c.l.s4 1966171168
        %v3965 = vunpack.c.0.s8 %v3964
        %v3966 = vlaneseq
        %v3967 = vshrl.u32 %v3966, 7
        %v3968 = vsub.s32 %v3965, %v3967
        %v3969 = vrot.slane %v3953, %v3968
        %v3971 = vunpack.c.l.s4 1966171168
        %v3972 = vunpack.c.0.s8 %v3971
        %v3973 = vlaneseq
        %v3974 = vshrl.u32 %v3973, 7
        %v3975 = vsub.s32 %v3972, %v3974
        %v3976 = vrot.slane %v3954, %v3975
        %v3978 = vunpack.c.l.s4 1966171168
        %v3979 = vunpack.c.0.s8 %v3978
        %v3980 = vlaneseq
        %v3981 = vshrl.u32 %v3980, 7
        %v3982 = vsub.s32 %v3979, %v3981
        %v3983 = vrot.slane %v3955, %v3982
        %v3984 = vcombine.low %v3962, %v3969
        %v3985 = vcombine.low %v3976, %v3983
        %v3987 = vunpack.c.l.s4 1966171168
        %v3988 = vunpack.c.0.s8 %v3987
        %v3989 = vlaneseq
        %v3990 = vshrl.u32 %v3989, 7
        %v3991 = vsub.s32 %v3988, %v3990
        %v3992 = vrot.slane %v3984, %v3991
        %v3994 = vunpack.c.l.s4 1966171168
        %v3995 = vunpack.c.0.s8 %v3994
        %v3996 = vlaneseq
        %v3997 = vshrl.u32 %v3996, 7
        %v3998 = vsub.s32 %v3995, %v3997
        %v3999 = vrot.slane %v3985, %v3998
        %v4000 = vcombine.low %v3992, %v3999
        %v4001 = vcombine.low %v2470, %v2474
        %v4002 = vcombine.low %v2478, %v2482
        %v4003 = vcombine.low %v2486, %v2490
        %v4004 = vcombine.low %v2494, %v2498
        %v4006 = vunpack.c.l.s4 1966171168
        %v4007 = vunpack.c.0.s8 %v4006
        %v4008 = vlaneseq
        %v4009 = vshrl.u32 %v4008, 7
        %v4010 = vsub.s32 %v4007, %v4009
        %v4011 = vrot.slane %v4001, %v4010
        %v4013 = vunpack.c.l.s4 1966171168
        %v4014 = vunpack.c.0.s8 %v4013
        %v4015 = vlaneseq
        %v4016 = vshrl.u32 %v4015, 7
        %v4017 = vsub.s32 %v4014, %v4016
        %v4018 = vrot.slane %v4002, %v4017
        %v4020 = vunpack.c.l.s4 1966171168
        %v4021 = vunpack.c.0.s8 %v4020
        %v4022 = vlaneseq
        %v4023 = vshrl.u32 %v4022, 7
        %v4024 = vsub.s32 %v4021, %v4023
        %v4025 = vrot.slane %v4003, %v4024
        %v4027 = vunpack.c.l.s4 1966171168
        %v4028 = vunpack.c.0.s8 %v4027
        %v4029 = vlaneseq
        %v4030 = vshrl.u32 %v4029, 7
        %v4031 = vsub.s32 %v4028, %v4030
        %v4032 = vrot.slane %v4004, %v4031
        %v4033 = vcombine.low %v4011, %v4018
        %v4034 = vcombine.low %v4025, %v4032
        %v4036 = vunpack.c.l.s4 1966171168
        %v4037 = vunpack.c.0.s8 %v4036
        %v4038 = vlaneseq
        %v4039 = vshrl.u32 %v4038, 7
        %v4040 = vsub.s32 %v4037, %v4039
        %v4041 = vrot.slane %v4033, %v4040
        %v4043 = vunpack.c.l.s4 1966171168
        %v4044 = vunpack.c.0.s8 %v4043
        %v4045 = vlaneseq
        %v4046 = vshrl.u32 %v4045, 7
        %v4047 = vsub.s32 %v4044, %v4046
        %v4048 = vrot.slane %v4034, %v4047
        %v4049 = vcombine.low %v4041, %v4048
        %v4050 = vcombine.low %v2502, %v2506
        %v4051 = vcombine.low %v2510, %v2514
        %v4052 = vcombine.low %v2518, %v2522
        %v4053 = vcombine.low %v2526, %v2530
        %v4055 = vunpack.c.l.s4 1966171168
        %v4056 = vunpack.c.0.s8 %v4055
        %v4057 = vlaneseq
        %v4058 = vshrl.u32 %v4057, 7
        %v4059 = vsub.s32 %v4056, %v4058
        %v4060 = vrot.slane %v4050, %v4059
        %v4062 = vunpack.c.l.s4 1966171168
        %v4063 = vunpack.c.0.s8 %v4062
        %v4064 = vlaneseq
        %v4065 = vshrl.u32 %v4064, 7
        %v4066 = vsub.s32 %v4063, %v4065
        %v4067 = vrot.slane %v4051, %v4066
        %v4069 = vunpack.c.l.s4 1966171168
        %v4070 = vunpack.c.0.s8 %v4069
        %v4071 = vlaneseq
        %v4072 = vshrl.u32 %v4071, 7
        %v4073 = vsub.s32 %v4070, %v4072
        %v4074 = vrot.slane %v4052, %v4073
        %v4076 = vunpack.c.l.s4 1966171168
        %v4077 = vunpack.c.0.s8 %v4076
        %v4078 = vlaneseq
        %v4079 = vshrl.u32 %v4078, 7
        %v4080 = vsub.s32 %v4077, %v4079
        %v4081 = vrot.slane %v4053, %v4080
        %v4082 = vcombine.low %v4060, %v4067
        %v4083 = vcombine.low %v4074, %v4081
        %v4085 = vunpack.c.l.s4 1966171168
        %v4086 = vunpack.c.0.s8 %v4085
        %v4087 = vlaneseq
        %v4088 = vshrl.u32 %v4087, 7
        %v4089 = vsub.s32 %v4086, %v4088
        %v4090 = vrot.slane %v4082, %v4089
        %v4092 = vunpack.c.l.s4 1966171168
        %v4093 = vunpack.c.0.s8 %v4092
        %v4094 = vlaneseq
        %v4095 = vshrl.u32 %v4094, 7
        %v4096 = vsub.s32 %v4093, %v4095
        %v4097 = vrot.slane %v4083, %v4096
        %v4098 = vcombine.low %v4090, %v4097
        %4099 = vset.pattern.permute.xlu0 0
        %4100 = vperm.xlu0 %4099, %v2579
        %v4101 = vpop.permute.xlu0 %4100
        %4102 = vset.pattern.permute.xlu0 0
        %4103 = vperm.xlu0 %4102, %v2628
        %v4104 = vpop.permute.xlu0 %4103
        %4105 = vset.pattern.permute.xlu0 0
        %4106 = vperm.xlu0 %4105, %v2677
        %v4107 = vpop.permute.xlu0 %4106
        %4108 = vset.pattern.permute.xlu0 0
        %4109 = vperm.xlu0 %4108, %v2726
        %v4110 = vpop.permute.xlu0 %4109
        %4111 = vset.pattern.permute.xlu0 0
        %4112 = vperm.xlu0 %4111, %v2775
        %v4113 = vpop.permute.xlu0 %4112
        %4114 = vset.pattern.permute.xlu0 0
        %4115 = vperm.xlu0 %4114, %v2824
        %v4116 = vpop.permute.xlu0 %4115
        %4117 = vset.pattern.permute.xlu0 0
        %4118 = vperm.xlu0 %4117, %v2873
        %v4119 = vpop.permute.xlu0 %4118
        %4120 = vset.pattern.permute.xlu0 0
        %4121 = vperm.xlu0 %4120, %v2922
        %v4122 = vpop.permute.xlu0 %4121
        %4123 = vset.pattern.permute.xlu0 0
        %4124 = vperm.xlu0 %4123, %v2971
        %v4125 = vpop.permute.xlu0 %4124
        %4126 = vset.pattern.permute.xlu0 0
        %4127 = vperm.xlu0 %4126, %v3020
        %v4128 = vpop.permute.xlu0 %4127
        %4129 = vset.pattern.permute.xlu0 0
        %4130 = vperm.xlu0 %4129, %v3069
        %v4131 = vpop.permute.xlu0 %4130
        %4132 = vset.pattern.permute.xlu0 0
        %4133 = vperm.xlu0 %4132, %v3118
        %v4134 = vpop.permute.xlu0 %4133
        %4135 = vset.pattern.permute.xlu0 0
        %4136 = vperm.xlu0 %4135, %v3167
        %v4137 = vpop.permute.xlu0 %4136
        %4138 = vset.pattern.permute.xlu0 0
        %4139 = vperm.xlu0 %4138, %v3216
        %v4140 = vpop.permute.xlu0 %4139
        %4141 = vset.pattern.permute.xlu0 0
        %4142 = vperm.xlu0 %4141, %v3265
        %v4143 = vpop.permute.xlu0 %4142
        %4144 = vset.pattern.permute.xlu0 0
        %4145 = vperm.xlu0 %4144, %v3314
        %v4146 = vpop.permute.xlu0 %4145
        %4147 = vset.pattern.permute.xlu0 0
        %4148 = vperm.xlu0 %4147, %v3363
        %v4149 = vpop.permute.xlu0 %4148
        %4150 = vset.pattern.permute.xlu0 0
        %4151 = vperm.xlu0 %4150, %v3412
        %v4152 = vpop.permute.xlu0 %4151
        %4153 = vset.pattern.permute.xlu0 0
        %4154 = vperm.xlu0 %4153, %v3461
        %v4155 = vpop.permute.xlu0 %4154
        %4156 = vset.pattern.permute.xlu0 0
        %4157 = vperm.xlu0 %4156, %v3510
        %v4158 = vpop.permute.xlu0 %4157
        %4159 = vset.pattern.permute.xlu0 0
        %4160 = vperm.xlu0 %4159, %v3559
        %v4161 = vpop.permute.xlu0 %4160
        %4162 = vset.pattern.permute.xlu0 0
        %4163 = vperm.xlu0 %4162, %v3608
        %v4164 = vpop.permute.xlu0 %4163
        %4165 = vset.pattern.permute.xlu0 0
        %4166 = vperm.xlu0 %4165, %v3657
        %v4167 = vpop.permute.xlu0 %4166
        %4168 = vset.pattern.permute.xlu0 0
        %4169 = vperm.xlu0 %4168, %v3706
        %v4170 = vpop.permute.xlu0 %4169
        %4171 = vset.pattern.permute.xlu0 0
        %4172 = vperm.xlu0 %4171, %v3755
        %v4173 = vpop.permute.xlu0 %4172
        %4174 = vset.pattern.permute.xlu0 0
        %4175 = vperm.xlu0 %4174, %v3804
        %v4176 = vpop.permute.xlu0 %4175
        %4177 = vset.pattern.permute.xlu0 0
        %4178 = vperm.xlu0 %4177, %v3853
        %v4179 = vpop.permute.xlu0 %4178
        %4180 = vset.pattern.permute.xlu0 0
        %4181 = vperm.xlu0 %4180, %v3902
        %v4182 = vpop.permute.xlu0 %4181
        %4183 = vset.pattern.permute.xlu0 0
        %4184 = vperm.xlu0 %4183, %v3951
        %v4185 = vpop.permute.xlu0 %4184
        %4186 = vset.pattern.permute.xlu0 0
        %4187 = vperm.xlu0 %4186, %v4000
        %v4188 = vpop.permute.xlu0 %4187
        %4189 = vset.pattern.permute.xlu0 0
        %4190 = vperm.xlu0 %4189, %v4049
        %v4191 = vpop.permute.xlu0 %4190
        %4192 = vset.pattern.permute.xlu0 0
        %4193 = vperm.xlu0 %4192, %v4098
        %v4194 = vpop.permute.xlu0 %4193
        %v4195 = vlaneseq
        %v4196 = vand.u32 %v4195, 127
        %v4197 = vlaneseq
        %v4198 = vshrl.u32 %v4197, 7
        %v4199 = vsub.s32 %v4196, %v4198
        %v4200 = vrot.slane %v4101, %v4199
        %v4201 = vadd.s32 %v4196, 4294967288
        %v4202 = vlaneseq
        %v4203 = vshrl.u32 %v4202, 7
        %v4204 = vsub.s32 %v4201, %v4203
        %v4205 = vrot.slane %v4104, %v4204
        %vm4206 = vcmask 130112
        %v4207 = vsel %vm4206, %v4205, %v4200
        %v4208 = vadd.s32 %v4196, 4294967280
        %v4209 = vlaneseq
        %v4210 = vshrl.u32 %v4209, 7
        %v4211 = vsub.s32 %v4208, %v4210
        %v4212 = vrot.slane %v4107, %v4211
        %vm4213 = vcmask 195712
        %v4214 = vsel %vm4213, %v4212, %v4207
        %v4215 = vadd.s32 %v4196, 4294967272
        %v4216 = vlaneseq
        %v4217 = vshrl.u32 %v4216, 7
        %v4218 = vsub.s32 %v4215, %v4217
        %v4219 = vrot.slane %v4110, %v4218
        %vm4220 = vcmask 261312
        %v4221 = vsel %vm4220, %v4219, %v4214
        %v4222 = vadd.s32 %v4196, 4294967264
        %v4223 = vlaneseq
        %v4224 = vshrl.u32 %v4223, 7
        %v4225 = vsub.s32 %v4222, %v4224
        %v4226 = vrot.slane %v4113, %v4225
        %vm4227 = vcmask 326912
        %v4228 = vsel %vm4227, %v4226, %v4221
        %v4229 = vadd.s32 %v4196, 4294967256
        %v4230 = vlaneseq
        %v4231 = vshrl.u32 %v4230, 7
        %v4232 = vsub.s32 %v4229, %v4231
        %v4233 = vrot.slane %v4116, %v4232
        %vm4234 = vcmask 392512
        %v4235 = vsel %vm4234, %v4233, %v4228
        %v4236 = vadd.s32 %v4196, 4294967248
        %v4237 = vlaneseq
        %v4238 = vshrl.u32 %v4237, 7
        %v4239 = vsub.s32 %v4236, %v4238
        %v4240 = vrot.slane %v4119, %v4239
        %vm4241 = vcmask 458112
        %v4242 = vsel %vm4241, %v4240, %v4235
        %v4243 = vadd.s32 %v4196, 4294967240
        %v4244 = vlaneseq
        %v4245 = vshrl.u32 %v4244, 7
        %v4246 = vsub.s32 %v4243, %v4245
        %v4247 = vrot.slane %v4122, %v4246
        %vm4248 = vcmask 523712
        %v4249 = vsel %vm4248, %v4247, %v4242
        %v4250 = vadd.s32 %v4196, 4294967232
        %v4251 = vlaneseq
        %v4252 = vshrl.u32 %v4251, 7
        %v4253 = vsub.s32 %v4250, %v4252
        %v4254 = vrot.slane %v4125, %v4253
        %vm4255 = vcmask 589312
        %v4256 = vsel %vm4255, %v4254, %v4249
        %v4257 = vadd.s32 %v4196, 4294967224
        %v4258 = vlaneseq
        %v4259 = vshrl.u32 %v4258, 7
        %v4260 = vsub.s32 %v4257, %v4259
        %v4261 = vrot.slane %v4128, %v4260
        %vm4262 = vcmask 654912
        %v4263 = vsel %vm4262, %v4261, %v4256
        %v4264 = vadd.s32 %v4196, 4294967216
        %v4265 = vlaneseq
        %v4266 = vshrl.u32 %v4265, 7
        %v4267 = vsub.s32 %v4264, %v4266
        %v4268 = vrot.slane %v4131, %v4267
        %vm4269 = vcmask 720512
        %v4270 = vsel %vm4269, %v4268, %v4263
        %v4271 = vadd.s32 %v4196, 4294967208
        %v4272 = vlaneseq
        %v4273 = vshrl.u32 %v4272, 7
        %v4274 = vsub.s32 %v4271, %v4273
        %v4275 = vrot.slane %v4134, %v4274
        %vm4276 = vcmask 786112
        %v4277 = vsel %vm4276, %v4275, %v4270
        %v4278 = vadd.s32 %v4196, 4294967200
        %v4279 = vlaneseq
        %v4280 = vshrl.u32 %v4279, 7
        %v4281 = vsub.s32 %v4278, %v4280
        %v4282 = vrot.slane %v4137, %v4281
        %vm4283 = vcmask 851712
        %v4284 = vsel %vm4283, %v4282, %v4277
        %v4285 = vadd.s32 %v4196, 4294967192
        %v4286 = vlaneseq
        %v4287 = vshrl.u32 %v4286, 7
        %v4288 = vsub.s32 %v4285, %v4287
        %v4289 = vrot.slane %v4140, %v4288
        %vm4290 = vcmask 917312
        %v4291 = vsel %vm4290, %v4289, %v4284
        %v4292 = vadd.s32 %v4196, 4294967184
        %v4293 = vlaneseq
        %v4294 = vshrl.u32 %v4293, 7
        %v4295 = vsub.s32 %v4292, %v4294
        %v4296 = vrot.slane %v4143, %v4295
        %vm4297 = vcmask 982912
        %v4298 = vsel %vm4297, %v4296, %v4291
        %v4299 = vadd.s32 %v4196, 4294967176
        %v4300 = vlaneseq
        %v4301 = vshrl.u32 %v4300, 7
        %v4302 = vsub.s32 %v4299, %v4301
        %v4303 = vrot.slane %v4146, %v4302
        %vm4304 = vcmask 1048512
        %v4305 = vsel %vm4304, %v4303, %v4298
        %v4306 = vlaneseq
        %v4307 = vshrl.u32 %v4306, 7
        %v4308 = vsub.s32 %v4196, %v4307
        %v4309 = vrot.slane %v4149, %v4308
        %v4310 = vlaneseq
        %v4311 = vshrl.u32 %v4310, 7
        %v4312 = vsub.s32 %v4201, %v4311
        %v4313 = vrot.slane %v4152, %v4312
        %v4314 = vsel %vm4206, %v4313, %v4309
        %v4315 = vlaneseq
        %v4316 = vshrl.u32 %v4315, 7
        %v4317 = vsub.s32 %v4208, %v4316
        %v4318 = vrot.slane %v4155, %v4317
        %v4319 = vsel %vm4213, %v4318, %v4314
        %v4320 = vlaneseq
        %v4321 = vshrl.u32 %v4320, 7
        %v4322 = vsub.s32 %v4215, %v4321
        %v4323 = vrot.slane %v4158, %v4322
        %v4324 = vsel %vm4220, %v4323, %v4319
        %v4325 = vlaneseq
        %v4326 = vshrl.u32 %v4325, 7
        %v4327 = vsub.s32 %v4222, %v4326
        %v4328 = vrot.slane %v4161, %v4327
        %v4329 = vsel %vm4227, %v4328, %v4324
        %v4330 = vlaneseq
        %v4331 = vshrl.u32 %v4330, 7
        %v4332 = vsub.s32 %v4229, %v4331
        %v4333 = vrot.slane %v4164, %v4332
        %v4334 = vsel %vm4234, %v4333, %v4329
        %v4335 = vlaneseq
        %v4336 = vshrl.u32 %v4335, 7
        %v4337 = vsub.s32 %v4236, %v4336
        %v4338 = vrot.slane %v4167, %v4337
        %v4339 = vsel %vm4241, %v4338, %v4334
        %v4340 = vlaneseq
        %v4341 = vshrl.u32 %v4340, 7
        %v4342 = vsub.s32 %v4243, %v4341
        %v4343 = vrot.slane %v4170, %v4342
        %v4344 = vsel %vm4248, %v4343, %v4339
        %v4345 = vlaneseq
        %v4346 = vshrl.u32 %v4345, 7
        %v4347 = vsub.s32 %v4250, %v4346
        %v4348 = vrot.slane %v4173, %v4347
        %v4349 = vsel %vm4255, %v4348, %v4344
        %v4350 = vlaneseq
        %v4351 = vshrl.u32 %v4350, 7
        %v4352 = vsub.s32 %v4257, %v4351
        %v4353 = vrot.slane %v4176, %v4352
        %v4354 = vsel %vm4262, %v4353, %v4349
        %v4355 = vlaneseq
        %v4356 = vshrl.u32 %v4355, 7
        %v4357 = vsub.s32 %v4264, %v4356
        %v4358 = vrot.slane %v4179, %v4357
        %v4359 = vsel %vm4269, %v4358, %v4354
        %v4360 = vlaneseq
        %v4361 = vshrl.u32 %v4360, 7
        %v4362 = vsub.s32 %v4271, %v4361
        %v4363 = vrot.slane %v4182, %v4362
        %v4364 = vsel %vm4276, %v4363, %v4359
        %v4365 = vlaneseq
        %v4366 = vshrl.u32 %v4365, 7
        %v4367 = vsub.s32 %v4278, %v4366
        %v4368 = vrot.slane %v4185, %v4367
        %v4369 = vsel %vm4283, %v4368, %v4364
        %v4370 = vlaneseq
        %v4371 = vshrl.u32 %v4370, 7
        %v4372 = vsub.s32 %v4285, %v4371
        %v4373 = vrot.slane %v4188, %v4372
        %v4374 = vsel %vm4290, %v4373, %v4369
        %v4375 = vlaneseq
        %v4376 = vshrl.u32 %v4375, 7
        %v4377 = vsub.s32 %v4292, %v4376
        %v4378 = vrot.slane %v4191, %v4377
        %v4379 = vsel %vm4297, %v4378, %v4374
        %v4380 = vlaneseq
        %v4381 = vshrl.u32 %v4380, 7
        %v4382 = vsub.s32 %v4299, %v4381
        %v4383 = vrot.slane %v4194, %v4382
        %v4384 = vsel %vm4304, %v4383, %v4379
        %v4385 = vcombine.low %v4305, %v4384
        %v4387 = vunpack.c.l.s4 1966171168
        %v4388 = vunpack.c.0.s8 %v4387
        %v4389 = vlaneseq
        %v4390 = vshrl.u32 %v4389, 7
        %v4391 = vsub.s32 %v4388, %v4390
        %v4392 = vrot.slane %v4385, %v4391
        %v4394 = vunpack.c.l.s4 1966171168
        %v4395 = vunpack.c.0.s8 %v4394
        %v4396 = vlaneseq
        %v4397 = vshrl.u32 %v4396, 7
        %v4398 = vsub.s32 %v4395, %v4397
        %v4399 = vrot.slane %v4392, %v4398
        %v4401 = vlaneseq
        %vm4402 = vcmp.ge.s32.totalorder %v4401, 0
        %vm4403 = vcmp.lt.s32.totalorder %v4401, 256
        %vm4404 = vmand %vm4402, %vm4403
        %4405 = vst.msk [vmem:[%s337] sm:$0x3] %vm4404, %v4399
        %s4406 = sand.u32 %s207, 1
        %s4407 = scalar_lea.sflag [#allocation4], %s4406
        %s4408 = sand.u32 %s207, 1
        %s4409 = smul.addr %s4408, 2
        %s4410 = scalar_lea.vmem [#allocation7], %s4409
        // Predicated region
        $region61: #{tpu_custom_call.1} parent=51 // pred_check
          %p4411 = pneg %p217
        $region62: #{tpu_custom_call.1} parent=51 // pred_check_branch
          %4413 = sbr.rel (%p4411) target = $region64
        $region63: #{tpu_custom_call.1} parent=51 // pred_region
          %s4414 = smul.u32 2, %s26
          %s4416 = ssub.s32 32, 32
          %4417 = vsyncadd %s4407, %s4416
          %s4418 = smul.addr %s4414, 16
          %s4419 = scalar_lea.hbm %s8, %s4418
          %s4421 = sshll.u32 %s4410, 4
          %s4422 = int_to_ptr.vmem [resolvable:$true] %s4421
          %4424 = dma.vmem_to_hbm [thread:$0]  %s4422, 32, %s4419, %s4407
        $region64: #{tpu_custom_call.1} parent=51 // pred_fallthru
          _
      $region52: #{tpu_custom_call.1} parent=5 // pred_fallthru
        _
      %p4425 = scmp.le.s32.totalorder 2, %s21
      // Predicated region
      $region65: #{tpu_custom_call.1} parent=5 // pred_check
        %p4426 = pneg %p4425
      $region66: #{tpu_custom_call.1} parent=5 // pred_check_branch
        %4428 = sbr.rel (%p4426) target = $region68
      $region67: #{tpu_custom_call.1} parent=5 // pred_region
        %s4429 = ssub.s32 %s21, 2
        // Predicated region
        $region69: #{tpu_custom_call.1} parent=67 // pred_check
          %p4430 = pneg %p223
        $region70: #{tpu_custom_call.1} parent=67 // pred_check_branch
          %4432 = sbr.rel (%p4430) target = $region72
        $region71: #{tpu_custom_call.1} parent=67 // pred_region
          %s4433 = sand.u32 %s208, 1
          %s4434 = scalar_lea.sflag [#allocation4], %s4433
          %s4435 = sand.u32 %s208, 1
          %s4436 = smul.addr %s4435, 2
          %s4437 = scalar_lea.vmem [#allocation7], %s4436
          %4438 = dma.done %s4434, 32
        $region72: #{tpu_custom_call.1} parent=67 // pred_fallthru
          _
      $region68: #{tpu_custom_call.1} parent=5 // pred_fallthru
        _
    $region6: #{tpu_custom_call.1} parent=1 // loop_footer
      %s25 = sadd.s32 1, %s21
    $region7: #{tpu_custom_call.1} parent=1 // loop_footer_branch
      %20 = sbr.rel target = $region3
    $region8: #{tpu_custom_call.1} parent=1 // loop_exit
      _
    %4439 = vsyncpa [#allocation3], 1
    %s4440 = scalar_lea.sflag [#allocation3], 1
    %4441 = vsyncpa %s4440, 1
    %4442 = vsyncpa [#allocation4], 1
    %s4443 = scalar_lea.sflag [#allocation4], 1
    %4444 = vsyncpa %s4443, 1
    %4445 = vsyncpa [#allocation5], 1
    %s4446 = scalar_lea.sflag [#allocation5], 1
    %4447 = vsyncpa %s4446, 1

</llo_original>
